<compile_context>
chip_gen: v6e
topology: v6e:2x2x1
jax: 0.10.0
libtpu: 0.0.40
codegen_flags: <defaults>
</compile_context>

<pallas_src>
import functools

import jax
import jax.numpy as jnp
from jax.experimental import pallas as pl
from jax.experimental.pallas import tpu as pltpu


# --------------------------------------------------------------------------
# helpers
# --------------------------------------------------------------------------
def _round_up(x, m):
    return (x + m - 1) // m * m


def _pick_tn(cout):
    if cout % 256 == 0:
        return 256          # 256-wide MXU on v6e/v7x (2 pushes on v5e, harmless)
    if cout % 128 == 0:
        return 128
    return cout             # e.g. 64 for stem / stage-1 layers: no Cout tiling


# --------------------------------------------------------------------------
# Pallas kernels
# --------------------------------------------------------------------------
def _conv3x3_s1_kernel(x_ref, w_ref, scale_ref, bias_ref, *rest,
                       wp, mout, apply_relu):
    """Direct 3x3 stride-1 conv + folded BN (+ residual) (+ ReLU).

    x_ref:    (Lp, Cin)  bf16 -- one padded image, spatial flattened (H+3, W+2)
    w_ref:    (9, Cin, tn) bf16 -- taps ordered (dy, dx)
    output grid is (H, W+2) flattened; the last 2 columns of each row are junk
    (they read across the row boundary) and are dropped by the caller.
    """
    if len(rest) == 2:
        res_ref, o_ref = rest
    else:
        (o_ref,) = rest
        res_ref = None
    tn = o_ref.shape[-1]
    acc = jnp.zeros((mout, tn), jnp.float32)
    for k in range(9):                      # unrolled: 9 accumulating MXU dots
        dy, dx = k // 3, k % 3
        off = dy * wp + dx                  # static flat offset of this tap
        xs = x_ref[pl.ds(off, mout), :]     # (mout, Cin) bf16
        acc = acc + jnp.dot(xs, w_ref[k], preferred_element_type=jnp.float32)
    acc = acc * scale_ref[...] + bias_ref[...]
    if res_ref is not None:
        acc = acc + res_ref[...].astype(jnp.float32)
    if apply_relu:
        acc = jnp.maximum(acc, 0.0)
    o_ref[...] = acc.astype(o_ref.dtype)


def _matmul_bn_act_kernel(x_ref, w_ref, scale_ref, bias_ref, o_ref, *,
                          apply_relu):
    """Generic [tile_m, K] @ [K, tn] + folded BN (+ ReLU) (im2col / 1x1 path)."""
    acc = jnp.dot(x_ref[...], w_ref[...], preferred_element_type=jnp.float32)
    acc = acc * scale_ref[...] + bias_ref[...]
    if apply_relu:
        acc = jnp.maximum(acc, 0.0)
    o_ref[...] = acc.astype(o_ref.dtype)


def _head_kernel(f_ref, w_ref, b_ref, o_ref):
    """Adaptive-avg-pool (mean over spatial) + Linear (classes padded to 128)."""
    pooled = jnp.mean(f_ref[...].astype(jnp.float32), axis=1)          # [N, C]
    o_ref[...] = (jnp.dot(pooled, w_ref[...],
                          preferred_element_type=jnp.float32)
                  + b_ref[...]).astype(o_ref.dtype)


# --------------------------------------------------------------------------
# Pallas wrappers
# --------------------------------------------------------------------------
def conv3x3_s1_bn_act(x, w_mat, scale, bias, residual=None, relu=True):
    """3x3 / stride-1 conv + BN (+ residual) (+ ReLU).  x: NHWC bf16."""
    N, H, W, C = x.shape
    Wp = W + 2
    Lp = (H + 3) * Wp                 # pad H by (1, 2), W by (1, 1), flatten
    Mout = H * Wp                     # outputs computed on an (H, Wp) grid
    Cout = w_mat.shape[1]
    tn = _pick_tn(Cout)

    xp = jnp.pad(x, ((0, 0), (1, 2), (1, 1), (0, 0))).reshape(N, Lp, C)
    w3 = w_mat.reshape(9, C, Cout)

    args = [xp, w3, scale.reshape(1, -1), bias.reshape(1, -1)]
    in_specs = [
        pl.BlockSpec((None, Lp, C), lambda n, j: (n, 0, 0)),
        pl.BlockSpec((9, C, tn), lambda n, j: (0, 0, j)),
        pl.BlockSpec((1, tn), lambda n, j: (0, j)),
        pl.BlockSpec((1, tn), lambda n, j: (0, j)),
    ]
    bytes_accessed = (N * Lp * C + 9 * C * Cout + N * Mout * Cout) * 2
    if residual is not None:
        res = jnp.pad(residual.astype(jnp.bfloat16),
                      ((0, 0), (0, 0), (0, 2), (0, 0))).reshape(N, Mout, Cout)
        in_specs.append(pl.BlockSpec((None, Mout, tn), lambda n, j: (n, 0, j)))
        args.append(res)
        bytes_accessed += N * Mout * Cout * 2

    out = pl.pallas_call(
        functools.partial(_conv3x3_s1_kernel, wp=Wp, mout=Mout,
                          apply_relu=relu),
        out_shape=jax.ShapeDtypeStruct((N, Mout, Cout), jnp.bfloat16),
        grid=(N, Cout // tn),
        in_specs=in_specs,
        out_specs=pl.BlockSpec((None, Mout, tn), lambda n, j: (n, 0, j)),
        compiler_params=pltpu.CompilerParams(
            dimension_semantics=("parallel", "parallel")),
        cost_estimate=pl.CostEstimate(flops=2 * N * Mout * 9 * C * Cout,
                                      transcendentals=0,
                                      bytes_accessed=bytes_accessed),
    )(*args)
    # drop the 2 junk columns per row produced by the flat-offset trick
    return out.reshape(N, H, Wp, Cout)[:, :, :W, :]


def matmul_bn_act(x2d, w_mat, scale, bias, relu=True):
    """patches [M, K] @ w_mat [K, Cout] with fused BN / ReLU (bf16 operands)."""
    M, K = x2d.shape
    Cout = w_mat.shape[1]
    tn = _pick_tn(Cout)
    tile_m = 256 if M >= 256 else _round_up(M, 8)
    Mp = _round_up(M, tile_m)
    if Mp != M:
        x2d = jnp.pad(x2d, ((0, Mp - M), (0, 0)))

    out = pl.pallas_call(
        functools.partial(_matmul_bn_act_kernel, apply_relu=relu),
        out_shape=jax.ShapeDtypeStruct((Mp, Cout), jnp.bfloat16),
        grid=(Mp // tile_m, Cout // tn),
        in_specs=[
            pl.BlockSpec((tile_m, K), lambda i, j: (i, 0)),
            pl.BlockSpec((K, tn), lambda i, j: (0, j)),
            pl.BlockSpec((1, tn), lambda i, j: (0, j)),
            pl.BlockSpec((1, tn), lambda i, j: (0, j)),
        ],
        out_specs=pl.BlockSpec((tile_m, tn), lambda i, j: (i, j)),
        compiler_params=pltpu.CompilerParams(
            dimension_semantics=("parallel", "parallel")),
        cost_estimate=pl.CostEstimate(
            flops=2 * Mp * K * Cout, transcendentals=0,
            bytes_accessed=(Mp * K + K * Cout + Mp * Cout) * 2),
    )(x2d, w_mat, scale.reshape(1, -1), bias.reshape(1, -1))
    return out[:M]


def head(feats, fc_w, fc_b, num_classes):
    """feats [N, HW, C] bf16 -> logits [N, num_classes] f32."""
    N, HW, C = feats.shape
    NCp = fc_w.shape[1]               # padded to a multiple of 128
    out = pl.pallas_call(
        _head_kernel,
        out_shape=jax.ShapeDtypeStruct((N, NCp), jnp.float32),
        grid=(1,),
        in_specs=[
            pl.BlockSpec((N, HW, C), lambda i: (0, 0, 0)),
            pl.BlockSpec((C, NCp), lambda i: (0, 0)),
            pl.BlockSpec((1, NCp), lambda i: (0, 0)),
        ],
        out_specs=pl.BlockSpec((N, NCp), lambda i: (0, 0)),
        compiler_params=pltpu.CompilerParams(
            dimension_semantics=("arbitrary",)),
    )(feats, fc_w, fc_b.reshape(1, -1))
    return out[:, :num_classes]


# --------------------------------------------------------------------------
# Glue: im2col (stride-2 convs only) + layer composition (plain JAX)
# --------------------------------------------------------------------------
def im2col_3x3(x, stride):
    """x: NHWC bf16 -> patches [N*Ho*Wo, 9*C] with (kh, kw, C) ordering."""
    N, H, W, C = x.shape
    xp = jnp.pad(x, ((0, 0), (1, 1), (1, 1), (0, 0)))
    Ho = (H + 2 - 3) // stride + 1
    Wo = (W + 2 - 3) // stride + 1
    cols = []
    for dy in range(3):
        for dx in range(3):
            cols.append(xp[:, dy:dy + stride * Ho:stride,
                           dx:dx + stride * Wo:stride, :])
    patches = jnp.concatenate(cols, axis=-1)
    return patches.reshape(N * Ho * Wo, 9 * C), Ho, Wo


def conv_bn(x, w_mat, scale, bias, stride, ksize, residual=None, relu=True):
    """x NHWC bf16 -> NHWC bf16."""
    N, H, W, Cin = x.shape
    if ksize == 3 and stride == 1:
        return conv3x3_s1_bn_act(x, w_mat, scale, bias, residual, relu)
    # stride-2 3x3 (stage transitions) and 1x1 shortcut convs
    assert residual is None
    if ksize == 3:
        patches, Ho, Wo = im2col_3x3(x, stride)
    else:  # 1x1 conv
        xs = x[:, ::stride, ::stride, :]
        Ho, Wo = xs.shape[1], xs.shape[2]
        patches = xs.reshape(N * Ho * Wo, Cin)
    Cout = w_mat.shape[1]
    out = matmul_bn_act(patches, w_mat, scale, bias, relu)
    return out.reshape(N, Ho, Wo, Cout)


def residual_block(x, blk):
    out = conv_bn(x, blk["w1"], blk["scale1"], blk["bias1"],
                  stride=blk["stride"], ksize=3, relu=True)
    if "ws" in blk:
        identity = conv_bn(x, blk["ws"], blk["ss"], blk["sb"],
                           stride=blk["stride"], ksize=1, relu=False)
    else:
        identity = x
    out = conv_bn(out, blk["w2"], blk["scale2"], blk["bias2"],
                  stride=1, ksize=3, residual=identity, relu=True)
    return out


def resnet_forward(x_nchw, params):
    x = jnp.transpose(x_nchw, (0, 2, 3, 1)).astype(jnp.bfloat16)  # NCHW -> NHWC
    stem = params["stem"]
    x = conv_bn(x, stem["w"], stem["scale"], stem["bias"],
                stride=1, ksize=3, relu=True)
    for blk in params["blocks"]:
        x = residual_block(x, blk)
    N, H, W, C = x.shape
    feats = x.reshape(N, H * W, C)
    return head(feats, params["fc_w"], params["fc_b"], params["num_classes"])


# --------------------------------------------------------------------------
# Deterministic parameter init (mirrors ResNet._initialize_weights shapes)
# --------------------------------------------------------------------------
def init_params(key, num_classes=100):
    eps = 1e-5
    bn_scale = lambda c: jnp.full((c,), (1.0 + eps) ** -0.5, jnp.float32)
    bn_bias = lambda c: jnp.zeros((c,), jnp.float32)
    keys = list(jax.random.split(key, 64))
    k_idx = [0]

    def nxt():
        k = keys[k_idx[0]]
        k_idx[0] += 1
        return k

    def conv_w(k, cin, cout):
        # kaiming_normal_(mode='fan_out', nonlinearity='relu')
        fan_out = cout * k * k
        std = (2.0 / fan_out) ** 0.5
        w = jax.random.normal(nxt(), (k, k, cin, cout), jnp.float32) * std
        # rows ordered (kh, kw, cin); stored bf16 for the MXU
        return w.reshape(k * k * cin, cout).astype(jnp.bfloat16)

    params = {"stem": dict(w=conv_w(3, 3, 64),
                           scale=bn_scale(64), bias=bn_bias(64)),
              "num_classes": num_classes}
    blocks = []
    in_c = 64
    for out_c, n_blocks, stride in [(64, 3, 1), (128, 4, 2),
                                    (256, 6, 2), (512, 3, 2)]:
        for b in range(n_blocks):
            s = stride if b == 0 else 1
            blk = dict(
                stride=s,
                w1=conv_w(3, in_c, out_c),
                scale1=bn_scale(out_c), bias1=bn_bias(out_c),
                w2=conv_w(3, out_c, out_c),
                scale2=bn_scale(out_c), bias2=bn_bias(out_c),
            )
            if s != 1 or in_c != out_c:
                blk["ws"] = conv_w(1, in_c, out_c)
                blk["ss"] = bn_scale(out_c)
                blk["sb"] = bn_bias(out_c)
            blocks.append(blk)
            in_c = out_c
    params["blocks"] = blocks

    # Linear: kaiming_uniform_(mode='fan_in', nonlinearity='linear'), bias = 0
    fan_in = 512
    bound = (3.0 / fan_in) ** 0.5
    fc_w = jax.random.uniform(nxt(), (512, num_classes),
                              jnp.float32, -bound, bound)
    nc_pad = _round_up(num_classes, 128)          # lane-dense head output
    params["fc_w"] = jnp.pad(fc_w, ((0, 0), (0, nc_pad - num_classes)))
    params["fc_b"] = jnp.zeros((nc_pad,), jnp.float32)
    return params


# --------------------------------------------------------------------------
if __name__ == "__main__":
    key = jax.random.PRNGKey(0)
    pkey, xkey = jax.random.split(key)
    params = init_params(pkey, num_classes=100)

    # Small input consistent with the module: NCHW, 3 input channels.
    x = jax.random.normal(xkey, (2, 3, 16, 16), jnp.float32)

    logits = resnet_forward(x, params)
    logits = jax.block_until_ready(logits)
    assert logits.shape == (2, 100), logits.shape
    assert bool(jnp.all(jnp.isfinite(logits)))
    print("KERNEL_OK")
</pallas_src>

<mosaic_0001>
module attributes {stable_mosaic.version = 11 : i64} {
  func.func @_conv3x3_s1_kernel(%arg0: i32, %arg1: i32, %arg2: memref<1x342x3xbf16, #tpu.memory_space<vmem>>, %arg3: memref<9x3x64xbf16, #tpu.memory_space<vmem>>, %arg4: memref<1x64xf32, #tpu.memory_space<vmem>>, %arg5: memref<1x64xf32, #tpu.memory_space<vmem>>, %arg6: memref<1x288x64xbf16, #tpu.memory_space<vmem>>) attributes {dimension_semantics = [#tpu.dimension_semantics<parallel>, #tpu.dimension_semantics<parallel>], iteration_bounds = array<i64: 2, 1>, scalar_prefetch = 0 : i64, scratch_operands = 0 : i64, tpu.core_type = #tpu.core_type<tc>, window_params = [{transform_indices = @transform_0, window_bounds = array<i64: 1, 342, 3>}, {transform_indices = @transform_1, window_bounds = array<i64: 9, 3, 64>}, {transform_indices = @transform_2, window_bounds = array<i64: 1, 64>}, {transform_indices = @transform_3, window_bounds = array<i64: 1, 64>}, {transform_indices = @transform_4, window_bounds = array<i64: 1, 288, 64>}]} {
    %cst = arith.constant 0.000000e+00 : f32
    %0 = vector.broadcast %cst : f32 to vector<288x64xf32>
    %c0 = arith.constant 0 : index
    %c0_0 = arith.constant 0 : index
    %c0_1 = arith.constant 0 : index
    %1 = vector.load %arg2[%c0, %c0_0, %c0_1] : memref<1x342x3xbf16, #tpu.memory_space<vmem>>, vector<1x288x3xbf16>
    %2 = vector.shape_cast %1 : vector<1x288x3xbf16> to vector<288x3xbf16>
    %c0_2 = arith.constant 0 : index
    %c0_3 = arith.constant 0 : index
    %c0_4 = arith.constant 0 : index
    %3 = vector.load %arg3[%c0_2, %c0_3, %c0_4] : memref<9x3x64xbf16, #tpu.memory_space<vmem>>, vector<1x3x64xbf16>
    %4 = vector.shape_cast %3 : vector<1x3x64xbf16> to vector<3x64xbf16>
    %cst_5 = arith.constant dense<0.000000e+00> : vector<288x64xf32>
    %5 = tpu.matmul %2, %4, %cst_5 {dimension_numbers = #tpu.dot_dimension_numbers<[1], [0], [0], [1], [0, 0, 1, 1], [], []>} : vector<288x3xbf16>, vector<3x64xbf16>, vector<288x64xf32> -> vector<288x64xf32>
    %6 = arith.addf %0, %5 : vector<288x64xf32>
    %c0_6 = arith.constant 0 : index
    %c1 = arith.constant 1 : index
    %c0_7 = arith.constant 0 : index
    %7 = vector.load %arg2[%c0_6, %c1, %c0_7] : memref<1x342x3xbf16, #tpu.memory_space<vmem>>, vector<1x288x3xbf16>
    %8 = vector.shape_cast %7 : vector<1x288x3xbf16> to vector<288x3xbf16>
    %c1_8 = arith.constant 1 : index
    %c0_9 = arith.constant 0 : index
    %c0_10 = arith.constant 0 : index
    %9 = vector.load %arg3[%c1_8, %c0_9, %c0_10] : memref<9x3x64xbf16, #tpu.memory_space<vmem>>, vector<1x3x64xbf16>
    %10 = vector.shape_cast %9 : vector<1x3x64xbf16> to vector<3x64xbf16>
    %cst_11 = arith.constant dense<0.000000e+00> : vector<288x64xf32>
    %11 = tpu.matmul %8, %10, %cst_11 {dimension_numbers = #tpu.dot_dimension_numbers<[1], [0], [0], [1], [0, 0, 1, 1], [], []>} : vector<288x3xbf16>, vector<3x64xbf16>, vector<288x64xf32> -> vector<288x64xf32>
    %12 = arith.addf %6, %11 : vector<288x64xf32>
    %c0_12 = arith.constant 0 : index
    %c2 = arith.constant 2 : index
    %c0_13 = arith.constant 0 : index
    %13 = vector.load %arg2[%c0_12, %c2, %c0_13] : memref<1x342x3xbf16, #tpu.memory_space<vmem>>, vector<1x288x3xbf16>
    %14 = vector.shape_cast %13 : vector<1x288x3xbf16> to vector<288x3xbf16>
    %c2_14 = arith.constant 2 : index
    %c0_15 = arith.constant 0 : index
    %c0_16 = arith.constant 0 : index
    %15 = vector.load %arg3[%c2_14, %c0_15, %c0_16] : memref<9x3x64xbf16, #tpu.memory_space<vmem>>, vector<1x3x64xbf16>
    %16 = vector.shape_cast %15 : vector<1x3x64xbf16> to vector<3x64xbf16>
    %cst_17 = arith.constant dense<0.000000e+00> : vector<288x64xf32>
    %17 = tpu.matmul %14, %16, %cst_17 {dimension_numbers = #tpu.dot_dimension_numbers<[1], [0], [0], [1], [0, 0, 1, 1], [], []>} : vector<288x3xbf16>, vector<3x64xbf16>, vector<288x64xf32> -> vector<288x64xf32>
    %18 = arith.addf %12, %17 : vector<288x64xf32>
    %c0_18 = arith.constant 0 : index
    %c18 = arith.constant 18 : index
    %c0_19 = arith.constant 0 : index
    %19 = vector.load %arg2[%c0_18, %c18, %c0_19] : memref<1x342x3xbf16, #tpu.memory_space<vmem>>, vector<1x288x3xbf16>
    %20 = vector.shape_cast %19 : vector<1x288x3xbf16> to vector<288x3xbf16>
    %c3 = arith.constant 3 : index
    %c0_20 = arith.constant 0 : index
    %c0_21 = arith.constant 0 : index
    %21 = vector.load %arg3[%c3, %c0_20, %c0_21] : memref<9x3x64xbf16, #tpu.memory_space<vmem>>, vector<1x3x64xbf16>
    %22 = vector.shape_cast %21 : vector<1x3x64xbf16> to vector<3x64xbf16>
    %cst_22 = arith.constant dense<0.000000e+00> : vector<288x64xf32>
    %23 = tpu.matmul %20, %22, %cst_22 {dimension_numbers = #tpu.dot_dimension_numbers<[1], [0], [0], [1], [0, 0, 1, 1], [], []>} : vector<288x3xbf16>, vector<3x64xbf16>, vector<288x64xf32> -> vector<288x64xf32>
    %24 = arith.addf %18, %23 : vector<288x64xf32>
    %c0_23 = arith.constant 0 : index
    %c19 = arith.constant 19 : index
    %c0_24 = arith.constant 0 : index
    %25 = vector.load %arg2[%c0_23, %c19, %c0_24] : memref<1x342x3xbf16, #tpu.memory_space<vmem>>, vector<1x288x3xbf16>
    %26 = vector.shape_cast %25 : vector<1x288x3xbf16> to vector<288x3xbf16>
    %c4 = arith.constant 4 : index
    %c0_25 = arith.constant 0 : index
    %c0_26 = arith.constant 0 : index
    %27 = vector.load %arg3[%c4, %c0_25, %c0_26] : memref<9x3x64xbf16, #tpu.memory_space<vmem>>, vector<1x3x64xbf16>
    %28 = vector.shape_cast %27 : vector<1x3x64xbf16> to vector<3x64xbf16>
    %cst_27 = arith.constant dense<0.000000e+00> : vector<288x64xf32>
    %29 = tpu.matmul %26, %28, %cst_27 {dimension_numbers = #tpu.dot_dimension_numbers<[1], [0], [0], [1], [0, 0, 1, 1], [], []>} : vector<288x3xbf16>, vector<3x64xbf16>, vector<288x64xf32> -> vector<288x64xf32>
    %30 = arith.addf %24, %29 : vector<288x64xf32>
    %c0_28 = arith.constant 0 : index
    %c20 = arith.constant 20 : index
    %c0_29 = arith.constant 0 : index
    %31 = vector.load %arg2[%c0_28, %c20, %c0_29] : memref<1x342x3xbf16, #tpu.memory_space<vmem>>, vector<1x288x3xbf16>
    %32 = vector.shape_cast %31 : vector<1x288x3xbf16> to vector<288x3xbf16>
    %c5 = arith.constant 5 : index
    %c0_30 = arith.constant 0 : index
    %c0_31 = arith.constant 0 : index
    %33 = vector.load %arg3[%c5, %c0_30, %c0_31] : memref<9x3x64xbf16, #tpu.memory_space<vmem>>, vector<1x3x64xbf16>
    %34 = vector.shape_cast %33 : vector<1x3x64xbf16> to vector<3x64xbf16>
    %cst_32 = arith.constant dense<0.000000e+00> : vector<288x64xf32>
    %35 = tpu.matmul %32, %34, %cst_32 {dimension_numbers = #tpu.dot_dimension_numbers<[1], [0], [0], [1], [0, 0, 1, 1], [], []>} : vector<288x3xbf16>, vector<3x64xbf16>, vector<288x64xf32> -> vector<288x64xf32>
    %36 = arith.addf %30, %35 : vector<288x64xf32>
    %c0_33 = arith.constant 0 : index
    %c36 = arith.constant 36 : index
    %c0_34 = arith.constant 0 : index
    %37 = vector.load %arg2[%c0_33, %c36, %c0_34] : memref<1x342x3xbf16, #tpu.memory_space<vmem>>, vector<1x288x3xbf16>
    %38 = vector.shape_cast %37 : vector<1x288x3xbf16> to vector<288x3xbf16>
    %c6 = arith.constant 6 : index
    %c0_35 = arith.constant 0 : index
    %c0_36 = arith.constant 0 : index
    %39 = vector.load %arg3[%c6, %c0_35, %c0_36] : memref<9x3x64xbf16, #tpu.memory_space<vmem>>, vector<1x3x64xbf16>
    %40 = vector.shape_cast %39 : vector<1x3x64xbf16> to vector<3x64xbf16>
    %cst_37 = arith.constant dense<0.000000e+00> : vector<288x64xf32>
    %41 = tpu.matmul %38, %40, %cst_37 {dimension_numbers = #tpu.dot_dimension_numbers<[1], [0], [0], [1], [0, 0, 1, 1], [], []>} : vector<288x3xbf16>, vector<3x64xbf16>, vector<288x64xf32> -> vector<288x64xf32>
    %42 = arith.addf %36, %41 : vector<288x64xf32>
    %c0_38 = arith.constant 0 : index
    %c37 = arith.constant 37 : index
    %c0_39 = arith.constant 0 : index
    %43 = vector.load %arg2[%c0_38, %c37, %c0_39] : memref<1x342x3xbf16, #tpu.memory_space<vmem>>, vector<1x288x3xbf16>
    %44 = vector.shape_cast %43 : vector<1x288x3xbf16> to vector<288x3xbf16>
    %c7 = arith.constant 7 : index
    %c0_40 = arith.constant 0 : index
    %c0_41 = arith.constant 0 : index
    %45 = vector.load %arg3[%c7, %c0_40, %c0_41] : memref<9x3x64xbf16, #tpu.memory_space<vmem>>, vector<1x3x64xbf16>
    %46 = vector.shape_cast %45 : vector<1x3x64xbf16> to vector<3x64xbf16>
    %cst_42 = arith.constant dense<0.000000e+00> : vector<288x64xf32>
    %47 = tpu.matmul %44, %46, %cst_42 {dimension_numbers = #tpu.dot_dimension_numbers<[1], [0], [0], [1], [0, 0, 1, 1], [], []>} : vector<288x3xbf16>, vector<3x64xbf16>, vector<288x64xf32> -> vector<288x64xf32>
    %48 = arith.addf %42, %47 : vector<288x64xf32>
    %c0_43 = arith.constant 0 : index
    %c38 = arith.constant 38 : index
    %c0_44 = arith.constant 0 : index
    %49 = vector.load %arg2[%c0_43, %c38, %c0_44] : memref<1x342x3xbf16, #tpu.memory_space<vmem>>, vector<1x288x3xbf16>
    %50 = vector.shape_cast %49 : vector<1x288x3xbf16> to vector<288x3xbf16>
    %c8 = arith.constant 8 : index
    %c0_45 = arith.constant 0 : index
    %c0_46 = arith.constant 0 : index
    %51 = vector.load %arg3[%c8, %c0_45, %c0_46] : memref<9x3x64xbf16, #tpu.memory_space<vmem>>, vector<1x3x64xbf16>
    %52 = vector.shape_cast %51 : vector<1x3x64xbf16> to vector<3x64xbf16>
    %cst_47 = arith.constant dense<0.000000e+00> : vector<288x64xf32>
    %53 = tpu.matmul %50, %52, %cst_47 {dimension_numbers = #tpu.dot_dimension_numbers<[1], [0], [0], [1], [0, 0, 1, 1], [], []>} : vector<288x3xbf16>, vector<3x64xbf16>, vector<288x64xf32> -> vector<288x64xf32>
    %54 = arith.addf %48, %53 : vector<288x64xf32>
    %c0_48 = arith.constant 0 : index
    %c0_49 = arith.constant 0 : index
    %55 = vector.load %arg4[%c0_48, %c0_49] : memref<1x64xf32, #tpu.memory_space<vmem>>, vector<1x64xf32>
    %56 = vector.broadcast %55 : vector<1x64xf32> to vector<288x64xf32>
    %57 = arith.mulf %54, %56 : vector<288x64xf32>
    %c0_50 = arith.constant 0 : index
    %c0_51 = arith.constant 0 : index
    %58 = vector.load %arg5[%c0_50, %c0_51] : memref<1x64xf32, #tpu.memory_space<vmem>>, vector<1x64xf32>
    %59 = vector.broadcast %58 : vector<1x64xf32> to vector<288x64xf32>
    %60 = arith.addf %57, %59 : vector<288x64xf32>
    %cst_52 = arith.constant 0.000000e+00 : f32
    %61 = vector.broadcast %cst_52 : f32 to vector<288x64xf32>
    %62 = arith.maximumf %60, %61 : vector<288x64xf32>
    %63 = arith.truncf %62 : vector<288x64xf32> to vector<288x64xbf16>
    %c0_53 = arith.constant 0 : index
    %c0_54 = arith.constant 0 : index
    %c0_55 = arith.constant 0 : index
    %64 = vector.load %arg6[%c0_53, %c0_54, %c0_55] : memref<1x288x64xbf16, #tpu.memory_space<vmem>>, vector<1x288x64xbf16>
    %65 = vector.shape_cast %64 : vector<1x288x64xbf16> to vector<288x64xbf16>
    %66 = vector.shape_cast %63 : vector<288x64xbf16> to vector<1x288x64xbf16>
    tpu.vector_store %arg6[%c0_53, %c0_54, %c0_55], %66 {strides = array<i32>} : memref<1x288x64xbf16, #tpu.memory_space<vmem>>, vector<1x288x64xbf16>,
    return
  }
  func.func @transform_0(%arg0: i32, %arg1: i32) -> (i32, i32, i32) {
    %c0_i32 = arith.constant 0 : i32
    %c0_i32_0 = arith.constant 0 : i32
    %c0_i32_1 = arith.constant 0 : i32
    return %arg0, %c0_i32, %c0_i32_0 : i32, i32, i32
  }
  func.func @transform_1(%arg0: i32, %arg1: i32) -> (i32, i32, i32) {
    %c0_i32 = arith.constant 0 : i32
    %c0_i32_0 = arith.constant 0 : i32
    %c0_i32_1 = arith.constant 0 : i32
    return %c0_i32, %c0_i32_0, %arg1 : i32, i32, i32
  }
  func.func @transform_2(%arg0: i32, %arg1: i32) -> (i32, i32) {
    %c0_i32 = arith.constant 0 : i32
    %c0_i32_0 = arith.constant 0 : i32
    return %c0_i32, %arg1 : i32, i32
  }
  func.func @transform_3(%arg0: i32, %arg1: i32) -> (i32, i32) {
    %c0_i32 = arith.constant 0 : i32
    %c0_i32_0 = arith.constant 0 : i32
    return %c0_i32, %arg1 : i32, i32
  }
  func.func @transform_4(%arg0: i32, %arg1: i32) -> (i32, i32, i32) {
    %c0_i32 = arith.constant 0 : i32
    %c0_i32_0 = arith.constant 0 : i32
    return %arg0, %c0_i32, %arg1 : i32, i32, i32
  }
}

</mosaic_0001>

<llo_original>
// kernel: tpu_custom_call.1
$region0: #{tpu_custom_call.1}
  #allocation0 [shape = 'u32[]', space=smem, size = 0x4, offset = 0x4, fixed_abs, tag = 'smem constant byte address 0x4 - core index']
  #allocation1 [shape = 'u32[144,128]{1,0:T(1,128)}', space=vmem, size = 0x12000, scoped, tag = 'internal scratch']
  %s0 = inlined_call_operand.vmem [shape: bf16[2,342,3], index: 0, kind: input, shape index: {}]
  %s1 = inlined_call_operand.vmem [shape: bf16[9,3,64], index: 1, kind: input, shape index: {}]
  %s2 = inlined_call_operand.vmem [shape: f32[1,64], index: 2, kind: input, shape index: {}]
  %s3 = inlined_call_operand.vmem [shape: f32[1,64], index: 3, kind: input, shape index: {}]
  %s4 = inlined_call_operand.vmem [shape: bf16[2,288,64], index: 4, kind: output, shape index: {}]
  %s5 = sld [smem:[#allocation0]]
  $region49: #{tpu_custom_call.1} parent=0
    _
  %s7 = ssub.s32 1, %s5
  %s8 = scalar_select 0, %s7, %s5
  loop: start=0, step=1, limit=4
  $region2: #{tpu_custom_call.1} parent=0 // loop_pre_header
    _
  $region3: #{tpu_custom_call.1} parent=0 // loop_header
    %s10 = sphi 0, %s14
    %p11 = scmp.ge.s32.totalorder %s10, 4
    %s17 = sphi 0, %s29
    %s18 = sphi 0, %s25
    %s19 = sphi 0, %s17
    %s20 = sphi 0, %s18
    %s21 = sphi 0, %s19
    %s22 = sphi 0, %s20
    %s32 = sphi 0, %s34
    %s35 = sphi 0, %s32
    %s36 = sphi 0, %s35
    %s52 = sphi 0, %s36
    %s58 = sphi 0, %s60
    %s61 = sphi 0, %s58
    %s62 = sphi 0, %s61
    %s78 = sphi 0, %s62
    %s84 = sphi 0, %s86
    %s87 = sphi 0, %s84
    %s88 = sphi 0, %s87
    %s104 = sphi 0, %s88
    %s110 = sphi 0, %s112
    %s113 = sphi 0, %s110
    %s114 = sphi 0, %s113
    %s130 = sphi 0, %s114
    %s138 = sphi 0, %s140
    %s141 = sphi 0, %s138
    %s142 = sphi 0, %s141
    %s158 = sphi 0, %s142
  $region4: #{tpu_custom_call.1} parent=0 // loop_header_branch
    %13 = sbr.rel (%p11) target = $region8
  $region5: #{tpu_custom_call.1} parent=0 // loop_body
    %s15 = ssub.s32 %s10, 1
    %s16 = ssub.s32 %s10, 2
    %s23 = sadd.s32 1, %s18
    %p24 = scmp.ge.s32.totalorder %s23, 1
    %s25 = scalar_select %p24, 0, %s23
    %s26 = sadd.s32 1, %s17
    %s27 = scalar_select %p24, %s26, %s17
    %p28 = scmp.ge.s32.totalorder %s27, 2
    %s29 = scalar_select %p28, 0, %s27
    %s30 = ssub.s32 %s17, %s29
    %p31 = scmp.eq.s32.totalorder %s30, 0
    %s33 = sadd.s32 %s32, 1
    %s34 = scalar_select %p31, %s32, %s33
    %p37 = pneg %p31
    %p38 = scmp.eq.s32.totalorder %s10, 1
    %p39 = por %p37, %p38
    %p40 = scmp.ne.s32.totalorder %s32, %s35
    %p41 = scmp.eq.s32.totalorder %s10, 0
    %p42 = por %p40, %p41
    %p43 = scmp.ne.s32.totalorder %s32, %s35
    %p44 = scmp.eq.s32.totalorder %s15, 1
    %p45 = por %p43, %p44
    %p46 = scmp.ne.s32.totalorder %s35, %s36
    %p47 = scmp.eq.s32.totalorder %s15, 0
    %p48 = por %p46, %p47
    %p49 = scmp.ne.s32.totalorder %s35, %s36
    %p50 = scmp.eq.s32.totalorder %s16, 1
    %p51 = por %p49, %p50
    %p53 = scmp.ne.s32.totalorder %s36, %s52
    %p54 = scmp.eq.s32.totalorder %s16, 0
    %p55 = por %p53, %p54
    %s56 = ssub.s32 %s18, %s25
    %p57 = scmp.eq.s32.totalorder %s56, 0
    %s59 = sadd.s32 %s58, 1
    %s60 = scalar_select %p57, %s58, %s59
    %p63 = pneg %p57
    %p64 = scmp.eq.s32.totalorder %s10, 1
    %p65 = por %p63, %p64
    %p66 = scmp.ne.s32.totalorder %s58, %s61
    %p67 = scmp.eq.s32.totalorder %s10, 0
    %p68 = por %p66, %p67
    %p69 = scmp.ne.s32.totalorder %s58, %s61
    %p70 = scmp.eq.s32.totalorder %s15, 1
    %p71 = por %p69, %p70
    %p72 = scmp.ne.s32.totalorder %s61, %s62
    %p73 = scmp.eq.s32.totalorder %s15, 0
    %p74 = por %p72, %p73
    %p75 = scmp.ne.s32.totalorder %s61, %s62
    %p76 = scmp.eq.s32.totalorder %s16, 1
    %p77 = por %p75, %p76
    %p79 = scmp.ne.s32.totalorder %s62, %s78
    %p80 = scmp.eq.s32.totalorder %s16, 0
    %p81 = por %p79, %p80
    %s82 = ssub.s32 %s18, %s25
    %p83 = scmp.eq.s32.totalorder %s82, 0
    %s85 = sadd.s32 %s84, 1
    %s86 = scalar_select %p83, %s84, %s85
    %p89 = pneg %p83
    %p90 = scmp.eq.s32.totalorder %s10, 1
    %p91 = por %p89, %p90
    %p92 = scmp.ne.s32.totalorder %s84, %s87
    %p93 = scmp.eq.s32.totalorder %s10, 0
    %p94 = por %p92, %p93
    %p95 = scmp.ne.s32.totalorder %s84, %s87
    %p96 = scmp.eq.s32.totalorder %s15, 1
    %p97 = por %p95, %p96
    %p98 = scmp.ne.s32.totalorder %s87, %s88
    %p99 = scmp.eq.s32.totalorder %s15, 0
    %p100 = por %p98, %p99
    %p101 = scmp.ne.s32.totalorder %s87, %s88
    %p102 = scmp.eq.s32.totalorder %s16, 1
    %p103 = por %p101, %p102
    %p105 = scmp.ne.s32.totalorder %s88, %s104
    %p106 = scmp.eq.s32.totalorder %s16, 0
    %p107 = por %p105, %p106
    %s108 = ssub.s32 %s18, %s25
    %p109 = scmp.eq.s32.totalorder %s108, 0
    %s111 = sadd.s32 %s110, 1
    %s112 = scalar_select %p109, %s110, %s111
    %p115 = pneg %p109
    %p116 = scmp.eq.s32.totalorder %s10, 1
    %p117 = por %p115, %p116
    %p118 = scmp.ne.s32.totalorder %s110, %s113
    %p119 = scmp.eq.s32.totalorder %s10, 0
    %p120 = por %p118, %p119
    %p121 = scmp.ne.s32.totalorder %s110, %s113
    %p122 = scmp.eq.s32.totalorder %s15, 1
    %p123 = por %p121, %p122
    %p124 = scmp.ne.s32.totalorder %s113, %s114
    %p125 = scmp.eq.s32.totalorder %s15, 0
    %p126 = por %p124, %p125
    %p127 = scmp.ne.s32.totalorder %s113, %s114
    %p128 = scmp.eq.s32.totalorder %s16, 1
    %p129 = por %p127, %p128
    %p131 = scmp.ne.s32.totalorder %s114, %s130
    %p132 = scmp.eq.s32.totalorder %s16, 0
    %p133 = por %p131, %p132
    %s134 = ssub.s32 %s17, %s29
    %s135 = ssub.s32 %s18, %s25
    %s136 = sor.u32 %s134, %s135
    %p137 = scmp.eq.s32.totalorder %s136, 0
    %s139 = sadd.s32 %s138, 1
    %s140 = scalar_select %p137, %s138, %s139
    %p143 = pneg %p137
    %p144 = scmp.eq.s32.totalorder %s10, 1
    %p145 = por %p143, %p144
    %p146 = scmp.ne.s32.totalorder %s138, %s141
    %p147 = scmp.eq.s32.totalorder %s10, 0
    %p148 = por %p146, %p147
    %p149 = scmp.ne.s32.totalorder %s138, %s141
    %p150 = scmp.eq.s32.totalorder %s15, 1
    %p151 = por %p149, %p150
    %p152 = scmp.ne.s32.totalorder %s141, %s142
    %p153 = scmp.eq.s32.totalorder %s15, 0
    %p154 = por %p152, %p153
    %p155 = scmp.ne.s32.totalorder %s141, %s142
    %p156 = scmp.eq.s32.totalorder %s16, 1
    %p157 = por %p155, %p156
    %p159 = scmp.ne.s32.totalorder %s142, %s158
    %p160 = scmp.eq.s32.totalorder %s16, 0
    %p161 = por %p159, %p160
    %p162 = scmp.le.s32.totalorder 1, %s10
    %p163 = scmp.lt.s32.totalorder %s10, 3
    %p164 = pnand %p162, %p163
    %p165 = pneg %p164
    // Predicated region
    $region9: #{tpu_custom_call.1} parent=5 // pred_check
      _
    $region10: #{tpu_custom_call.1} parent=5 // pred_check_branch
      %167 = sbr.rel (%p164) target = $region12
    $region11: #{tpu_custom_call.1} parent=5 // pred_region
      %s168 = ssub.s32 %s10, 1
      // Predicated region
      $region13: #{tpu_custom_call.1} parent=11 // pred_check
        %p169 = pneg %p74
      $region14: #{tpu_custom_call.1} parent=11 // pred_check_branch
        %171 = sbr.rel (%p169) target = $region16
      $region15: #{tpu_custom_call.1} parent=11 // pred_region
        %p172 = scmp.lt.s32.totalorder %s20, 0
        %s173 = scalar_select %p172, %s20, 0
        %s174 = smul.addr %s173, 2
        %s175 = scalar_lea.vmem %s1, %s174
      $region16: #{tpu_custom_call.1} parent=11 // pred_fallthru
        _
      // Predicated region
      $region17: #{tpu_custom_call.1} parent=11 // pred_check
        %p176 = pneg %p100
      $region18: #{tpu_custom_call.1} parent=11 // pred_check_branch
        %178 = sbr.rel (%p176) target = $region20
      $region19: #{tpu_custom_call.1} parent=11 // pred_region
        %p179 = scmp.lt.s32.totalorder %s20, 0
        %s180 = scalar_select %p179, %s20, 0
        %s181 = scalar_lea.vmem %s2, %s180
      $region20: #{tpu_custom_call.1} parent=11 // pred_fallthru
        _
      // Predicated region
      $region21: #{tpu_custom_call.1} parent=11 // pred_check
        %p182 = pneg %p126
      $region22: #{tpu_custom_call.1} parent=11 // pred_check_branch
        %184 = sbr.rel (%p182) target = $region24
      $region23: #{tpu_custom_call.1} parent=11 // pred_region
        %p185 = scmp.lt.s32.totalorder %s20, 0
        %s186 = scalar_select %p185, %s20, 0
        %s187 = scalar_lea.vmem %s3, %s186
      $region24: #{tpu_custom_call.1} parent=11 // pred_fallthru
        _
    $region12: #{tpu_custom_call.1} parent=5 // pred_fallthru
      _
    %p188 = scmp.lt.s32.totalorder %s10, 2
    // Predicated region
    $region25: #{tpu_custom_call.1} parent=5 // pred_check
      %p189 = pneg %p188
    $region26: #{tpu_custom_call.1} parent=5 // pred_check_branch
      %191 = sbr.rel (%p189) target = $region28
    $region27: #{tpu_custom_call.1} parent=5 // pred_region
      // Predicated region
      $region29: #{tpu_custom_call.1} parent=27 // pred_check
        %p192 = pneg %p42
      $region30: #{tpu_custom_call.1} parent=27 // pred_check_branch
        %194 = sbr.rel (%p192) target = $region32
      $region31: #{tpu_custom_call.1} parent=27 // pred_region
        %p195 = scmp.lt.s32.totalorder %s17, 1
        %s196 = scalar_select %p195, %s17, 1
        %s197 = smul.addr %s196, 43
        %s198 = smul.addr %s197, 4
        %s199 = scalar_lea.vmem %s0, %s198
      $region32: #{tpu_custom_call.1} parent=27 // pred_fallthru
        _
    $region28: #{tpu_custom_call.1} parent=5 // pred_fallthru
      _
    %p200 = scmp.le.s32.totalorder 1, %s10
    %p201 = scmp.lt.s32.totalorder %s10, 3
    %p202 = pnand %p200, %p201
    %p203 = pneg %p202
    // Predicated region
    $region33: #{tpu_custom_call.1} parent=5 // pred_check
      _
    $region34: #{tpu_custom_call.1} parent=5 // pred_check_branch
      %205 = sbr.rel (%p202) target = $region36
    $region35: #{tpu_custom_call.1} parent=5 // pred_region
      %s206 = ssub.s32 %s10, 1
      %p207 = scmp.lt.s32.totalorder %s19, 1
      %s208 = scalar_select %p207, %s19, 1
      %s209 = smul.addr %s208, 43
      %s210 = smul.addr %s209, 4
      %s211 = scalar_lea.vmem %s0, %s210
      %p212 = pneg %p48
      %p213 = pneg %p45
      %p214 = scmp.lt.s32.totalorder %s20, 0
      %s215 = scalar_select %p214, %s20, 0
      %s216 = smul.addr %s215, 2
      %s217 = scalar_lea.vmem %s1, %s216
      %p218 = pneg %p74
      %p219 = pneg %p71
      %p220 = scmp.lt.s32.totalorder %s20, 0
      %s221 = scalar_select %p220, %s20, 0
      %s222 = scalar_lea.vmem %s2, %s221
      %p223 = pneg %p100
      %p224 = pneg %p97
      %p225 = scmp.lt.s32.totalorder %s20, 0
      %s226 = scalar_select %p225, %s20, 0
      %s227 = scalar_lea.vmem %s3, %s226
      %p228 = pneg %p126
      %p229 = pneg %p123
      %p230 = pneg %p154
      %p231 = pneg %p151
      %p232 = scmp.lt.s32.totalorder %s19, 1
      %s233 = scalar_select %p232, %s19, 1
      %p234 = scmp.lt.s32.totalorder %s20, 0
      %s235 = scalar_select %p234, %s20, 0
      %s236 = smul.addr %s233, 36
      %s237 = sadd.s32 %s235, %s236
      %s238 = smul.addr %s237, 4
      %s239 = scalar_lea.vmem %s4, %s238
      %p240 = scmp.lt.s32.totalorder %s19, 1
      %s241 = scalar_select %p240, %s19, 1
      %s242 = smul.addr %s241, 43
      %s243 = smul.addr %s242, 4
      %s244 = scalar_lea.vmem %s0, %s243
      %p245 = scmp.lt.s32.totalorder %s20, 0
      %s246 = scalar_select %p245, %s20, 0
      %s247 = smul.addr %s246, 2
      %s248 = scalar_lea.vmem %s1, %s247
      %p249 = scmp.lt.s32.totalorder %s20, 0
      %s250 = scalar_select %p249, %s20, 0
      %s251 = scalar_lea.vmem %s2, %s250
      %p252 = scmp.lt.s32.totalorder %s20, 0
      %s253 = scalar_select %p252, %s20, 0
      %s254 = scalar_lea.vmem %s3, %s253
      %p255 = scmp.lt.s32.totalorder %s19, 1
      %s256 = scalar_select %p255, %s19, 1
      %p257 = scmp.lt.s32.totalorder %s20, 0
      %s258 = scalar_select %p257, %s20, 0
      %s259 = smul.addr %s256, 36
      %s260 = sadd.s32 %s258, %s259
      %s261 = smul.addr %s260, 4
      %s262 = scalar_lea.vmem %s4, %s261
      %v264 = vld [vmem:[%s244] sm:$0xf]
      %v265 = vld [vmem:[%s244 + $0x4] sm:$0xf]
      %v266 = vld [vmem:[%s244 + $0x8] sm:$0xf]
      %v267 = vld [vmem:[%s244 + $0xc] sm:$0xf]
      %v268 = vld [vmem:[%s244 + $0x10] sm:$0xf]
      %v269 = vld [vmem:[%s244 + $0x14] sm:$0xf]
      %v270 = vld [vmem:[%s244 + $0x18] sm:$0xf]
      %v271 = vld [vmem:[%s244 + $0x1c] sm:$0xf]
      %v272 = vld [vmem:[%s244 + $0x20] sm:$0xf]
      %v273 = vld [vmem:[%s244 + $0x24] sm:$0xf]
      %v274 = vld [vmem:[%s244 + $0x28] sm:$0xf]
      %v275 = vld [vmem:[%s244 + $0x2c] sm:$0xf]
      %v276 = vld [vmem:[%s244 + $0x30] sm:$0xf]
      %v277 = vld [vmem:[%s244 + $0x34] sm:$0xf]
      %v278 = vld [vmem:[%s244 + $0x38] sm:$0xf]
      %v279 = vld [vmem:[%s244 + $0x3c] sm:$0xf]
      %v280 = vld [vmem:[%s244 + $0x40] sm:$0xf]
      %v281 = vld [vmem:[%s244 + $0x44] sm:$0xf]
      %v282 = vld [vmem:[%s244 + $0x48] sm:$0xf]
      %v283 = vld [vmem:[%s244 + $0x4c] sm:$0xf]
      %v284 = vld [vmem:[%s244 + $0x50] sm:$0xf]
      %v285 = vld [vmem:[%s244 + $0x54] sm:$0xf]
      %v286 = vld [vmem:[%s244 + $0x58] sm:$0xf]
      %v287 = vld [vmem:[%s244 + $0x5c] sm:$0xf]
      %v288 = vld [vmem:[%s244 + $0x60] sm:$0xf]
      %v289 = vld [vmem:[%s244 + $0x64] sm:$0xf]
      %v290 = vld [vmem:[%s244 + $0x68] sm:$0xf]
      %v291 = vld [vmem:[%s244 + $0x6c] sm:$0xf]
      %v292 = vld [vmem:[%s244 + $0x70] sm:$0xf]
      %v293 = vld [vmem:[%s244 + $0x74] sm:$0xf]
      %v294 = vld [vmem:[%s244 + $0x78] sm:$0xf]
      %v295 = vld [vmem:[%s244 + $0x7c] sm:$0xf]
      %v296 = vld [vmem:[%s244 + $0x80] sm:$0xf]
      %v297 = vld [vmem:[%s244 + $0x84] sm:$0xf]
      %v298 = vld [vmem:[%s244 + $0x88] sm:$0xf]
      %v299 = vld [vmem:[%s244 + $0x8c] sm:$0xf]
      %v300 = vld [vmem:[%s248] sm:$0x3]
      %v301 = vld [vmem:[%s244 + $0x90] sm:$0x1]
      %s302 = scalar_lea.vmem %s248, 2
      %v303 = vld [vmem:[%s302] sm:$0x3]
      %v341 = vunpack.c.l.b16 %v264
      %v342 = vunpack.c.l.b16 %v265
      %v343 = vunpack.c.l.b16 %v266
      %v344 = vunpack.c.l.b16 %v267
      %v345 = vunpack.c.l.b16 %v268
      %v346 = vunpack.c.l.b16 %v269
      %v347 = vunpack.c.l.b16 %v270
      %v348 = vunpack.c.l.b16 %v271
      %v349 = vunpack.c.l.b16 %v272
      %v350 = vunpack.c.l.b16 %v273
      %v351 = vunpack.c.l.b16 %v274
      %v352 = vunpack.c.l.b16 %v275
      %v353 = vunpack.c.l.b16 %v276
      %v354 = vunpack.c.l.b16 %v277
      %v355 = vunpack.c.l.b16 %v278
      %v356 = vunpack.c.l.b16 %v279
      %v357 = vunpack.c.l.b16 %v280
      %v358 = vunpack.c.l.b16 %v281
      %v359 = vunpack.c.l.b16 %v282
      %v360 = vunpack.c.l.b16 %v283
      %v361 = vunpack.c.l.b16 %v284
      %v362 = vunpack.c.l.b16 %v285
      %v363 = vunpack.c.l.b16 %v286
      %v364 = vunpack.c.l.b16 %v287
      %v365 = vunpack.c.l.b16 %v288
      %v366 = vunpack.c.l.b16 %v289
      %v367 = vunpack.c.l.b16 %v290
      %v368 = vunpack.c.l.b16 %v291
      %v369 = vunpack.c.l.b16 %v292
      %v370 = vunpack.c.l.b16 %v293
      %v371 = vunpack.c.l.b16 %v294
      %v372 = vunpack.c.l.b16 %v295
      %v373 = vunpack.c.l.b16 %v296
      %v374 = vunpack.c.l.b16 %v297
      %v375 = vunpack.c.l.b16 %v298
      %v376 = vunpack.c.l.b16 %v299
      %v377 = vunpack.c.l.b16 %v301
      %v378 = vpack.c.b16 %v342, %v341
      %v379 = vpack.c.b16 %v344, %v343
      %v380 = vpack.c.b16 %v346, %v345
      %v381 = vpack.c.b16 %v348, %v347
      %v382 = vpack.c.b16 %v350, %v349
      %v383 = vpack.c.b16 %v352, %v351
      %v384 = vpack.c.b16 %v354, %v353
      %v385 = vpack.c.b16 %v356, %v355
      %v386 = vpack.c.b16 %v358, %v357
      %v387 = vpack.c.b16 %v360, %v359
      %v388 = vpack.c.b16 %v362, %v361
      %v389 = vpack.c.b16 %v364, %v363
      %v390 = vpack.c.b16 %v366, %v365
      %v391 = vpack.c.b16 %v368, %v367
      %v392 = vpack.c.b16 %v370, %v369
      %v393 = vpack.c.b16 %v372, %v371
      %v394 = vpack.c.b16 %v374, %v373
      %v395 = vpack.c.b16 %v376, %v375
      %v396 = vpack.c.b16 %v377, %v377
      %vm397 = vsmask.f32 7424
      %v399 = vshrl.u32 %v378, 16
      %v401 = vshll.u32 %v378, 16
      %v403 = vrot.slane %v401, 1
      %v404 = vor.u32 %v399, %v403
      %v406 = vshll.u32 %v379, 16
      %v408 = vrot.slane %v406, 1
      %v409 = vsel %vm397, %v404, %v408
      %v410 = vshrl.u32 %v379, 16
      %v412 = vor.u32 %v410, %v408
      %v414 = vshll.u32 %v380, 16
      %v416 = vrot.slane %v414, 1
      %v417 = vsel %vm397, %v412, %v416
      %v418 = vshrl.u32 %v380, 16
      %v420 = vor.u32 %v418, %v416
      %v422 = vshll.u32 %v381, 16
      %v424 = vrot.slane %v422, 1
      %v425 = vsel %vm397, %v420, %v424
      %v426 = vshrl.u32 %v381, 16
      %v428 = vor.u32 %v426, %v424
      %v430 = vshll.u32 %v382, 16
      %v432 = vrot.slane %v430, 1
      %v433 = vsel %vm397, %v428, %v432
      %v434 = vshrl.u32 %v382, 16
      %v436 = vor.u32 %v434, %v432
      %v438 = vshll.u32 %v383, 16
      %v440 = vrot.slane %v438, 1
      %v441 = vsel %vm397, %v436, %v440
      %v442 = vshrl.u32 %v383, 16
      %v444 = vor.u32 %v442, %v440
      %v446 = vshll.u32 %v384, 16
      %v448 = vrot.slane %v446, 1
      %v449 = vsel %vm397, %v444, %v448
      %v450 = vshrl.u32 %v384, 16
      %v452 = vor.u32 %v450, %v448
      %v454 = vshll.u32 %v385, 16
      %v456 = vrot.slane %v454, 1
      %v457 = vsel %vm397, %v452, %v456
      %v458 = vshrl.u32 %v385, 16
      %v460 = vor.u32 %v458, %v456
      %v462 = vshll.u32 %v386, 16
      %v464 = vrot.slane %v462, 1
      %v465 = vsel %vm397, %v460, %v464
      %v466 = vshrl.u32 %v386, 16
      %v468 = vor.u32 %v466, %v464
      %v470 = vshll.u32 %v387, 16
      %v472 = vrot.slane %v470, 1
      %v473 = vsel %vm397, %v468, %v472
      %v474 = vshrl.u32 %v387, 16
      %v476 = vor.u32 %v474, %v472
      %v478 = vshll.u32 %v388, 16
      %v480 = vrot.slane %v478, 1
      %v481 = vsel %vm397, %v476, %v480
      %v482 = vshrl.u32 %v388, 16
      %v484 = vor.u32 %v482, %v480
      %v486 = vshll.u32 %v389, 16
      %v488 = vrot.slane %v486, 1
      %v489 = vsel %vm397, %v484, %v488
      %v490 = vshrl.u32 %v389, 16
      %v492 = vor.u32 %v490, %v488
      %v494 = vshll.u32 %v390, 16
      %v496 = vrot.slane %v494, 1
      %v497 = vsel %vm397, %v492, %v496
      %v498 = vshrl.u32 %v390, 16
      %v500 = vor.u32 %v498, %v496
      %v502 = vshll.u32 %v391, 16
      %v504 = vrot.slane %v502, 1
      %v505 = vsel %vm397, %v500, %v504
      %v506 = vshrl.u32 %v391, 16
      %v508 = vor.u32 %v506, %v504
      %v510 = vshll.u32 %v392, 16
      %v512 = vrot.slane %v510, 1
      %v513 = vsel %vm397, %v508, %v512
      %v514 = vshrl.u32 %v392, 16
      %v516 = vor.u32 %v514, %v512
      %v518 = vshll.u32 %v393, 16
      %v520 = vrot.slane %v518, 1
      %v521 = vsel %vm397, %v516, %v520
      %v522 = vshrl.u32 %v393, 16
      %v524 = vor.u32 %v522, %v520
      %v526 = vshll.u32 %v394, 16
      %v528 = vrot.slane %v526, 1
      %v529 = vsel %vm397, %v524, %v528
      %v530 = vshrl.u32 %v394, 16
      %v532 = vor.u32 %v530, %v528
      %v534 = vshll.u32 %v395, 16
      %v536 = vrot.slane %v534, 1
      %v537 = vsel %vm397, %v532, %v536
      %v538 = vshrl.u32 %v395, 16
      %v540 = vor.u32 %v538, %v536
      %v542 = vshll.u32 %v396, 16
      %v544 = vrot.slane %v542, 1
      %v545 = vsel %vm397, %v540, %v544
      %vm546 = vcmask 23552
      %v548 = vsel %vm546, %v409, 0
      %v551 = vsel %vm546, %v417, 0
      %v554 = vsel %vm546, %v425, 0
      %v557 = vsel %vm546, %v433, 0
      %v560 = vsel %vm546, %v441, 0
      %v563 = vsel %vm546, %v449, 0
      %v566 = vsel %vm546, %v457, 0
      %v569 = vsel %vm546, %v465, 0
      %v572 = vsel %vm546, %v473, 0
      %v575 = vsel %vm546, %v481, 0
      %v578 = vsel %vm546, %v489, 0
      %v581 = vsel %vm546, %v497, 0
      %v584 = vsel %vm546, %v505, 0
      %v587 = vsel %vm546, %v513, 0
      %v590 = vsel %vm546, %v521, 0
      %v593 = vsel %vm546, %v529, 0
      %v596 = vsel %vm546, %v537, 0
      %v599 = vsel %vm546, %v545, 0
      %vm601 = vcmask 1040384
      %vm602 = vcmask 1041408
      %v603 = vsel %vm601, 4294967295, 65535
      %v604 = vsel %vm602, %v603, 0
      %v606 = vand.u32 %v303, %v604
      %608 = vmatprep.subr.bf16.mxu0 0
      %609 = vmatpush1.bf16.msra.mxu0 0
      %610 = vmatprep.subr.bf16.mxu0 0
      %611 = vmatpush1.bf16.msra.mxu0 0
      %612 = vmatprep.subr.bf16.mxu0 0
      %613 = vmatpush1.bf16.msra.mxu0 0
      %614 = vmatprep.subr.bf16.mxu0 0
      %615 = vmatpush1.bf16.msra.mxu0 0
      %616 = vmatprep.subr.bf16.mxu0 0
      %617 = vmatpush1.bf16.msra.mxu0 0
      %618 = vmatprep.subr.bf16.mxu0 0
      %619 = vmatpush1.bf16.msra.mxu0 0
      %620 = vmatprep.subr.bf16.mxu0 0
      %621 = vmatpush1.bf16.msra.mxu0 0
      %622 = vmatprep.subr.bf16.mxu0 0
      %623 = vmatpush1.bf16.msra.mxu0 %v606
      %624 = vmatprep.subr.bf16.mxu0 0
      %625 = vmatpush2.bf16.msra.mxu0 0
      %626 = vmatprep.subr.bf16.mxu0 0
      %627 = vmatpush2.bf16.msra.mxu0 0
      %628 = vmatprep.subr.bf16.mxu0 0
      %629 = vmatpush2.bf16.msra.mxu0 0
      %630 = vmatprep.subr.bf16.mxu0 0
      %631 = vmatpush2.bf16.msra.mxu0 0
      %632 = vmatprep.subr.bf16.mxu0 0
      %633 = vmatpush2.bf16.msra.mxu0 0
      %634 = vmatprep.subr.bf16.mxu0 0
      %635 = vmatpush2.bf16.msra.mxu0 0
      %636 = vmatprep.subr.bf16.mxu0 0
      %637 = vmatpush2.bf16.msra.mxu0 0
      %638 = vmatprep.subr.bf16.mxu0 0
      %639 = vmatpush2.bf16.msra.mxu0 0
      %640 = vmatprep.mubr.bf16.mxu0 0
      %641 = vmatmul.mubr.bf16.gmra.mxu0 %v548
      %v642 = vpop.f32.mrf.mxu0
      %v643 = vadd.f32 0.0, %v642
      %v644 = vpop.f32.mrf.mxu0
      %v645 = vpop.f32.mrf.mxu0
      %v646 = vadd.f32 0.0, %v645
      %v647 = vpop.f32.mrf.mxu0
      %648 = vmatprep.mubr.bf16.mxu0 0
      %649 = vmatmul.mubr.bf16.gmra.mxu0 %v551
      %v650 = vpop.f32.mrf.mxu0
      %v651 = vadd.f32 0.0, %v650
      %v652 = vpop.f32.mrf.mxu0
      %v653 = vpop.f32.mrf.mxu0
      %v654 = vadd.f32 0.0, %v653
      %v655 = vpop.f32.mrf.mxu0
      %656 = vmatprep.mubr.bf16.mxu0 0
      %657 = vmatmul.mubr.bf16.gmra.mxu0 %v554
      %v658 = vpop.f32.mrf.mxu0
      %v659 = vadd.f32 0.0, %v658
      %v660 = vpop.f32.mrf.mxu0
      %v661 = vpop.f32.mrf.mxu0
      %v662 = vadd.f32 0.0, %v661
      %v663 = vpop.f32.mrf.mxu0
      %664 = vmatprep.mubr.bf16.mxu0 0
      %665 = vmatmul.mubr.bf16.gmra.mxu0 %v557
      %v666 = vpop.f32.mrf.mxu0
      %v667 = vadd.f32 0.0, %v666
      %v668 = vpop.f32.mrf.mxu0
      %v669 = vpop.f32.mrf.mxu0
      %v670 = vadd.f32 0.0, %v669
      %v671 = vpop.f32.mrf.mxu0
      %672 = vmatprep.mubr.bf16.mxu0 0
      %673 = vmatmul.mubr.bf16.gmra.mxu0 %v560
      %v674 = vpop.f32.mrf.mxu0
      %v675 = vadd.f32 0.0, %v674
      %v676 = vpop.f32.mrf.mxu0
      %v677 = vpop.f32.mrf.mxu0
      %v678 = vadd.f32 0.0, %v677
      %v679 = vpop.f32.mrf.mxu0
      %680 = vmatprep.mubr.bf16.mxu0 0
      %681 = vmatmul.mubr.bf16.gmra.mxu0 %v563
      %v682 = vpop.f32.mrf.mxu0
      %v683 = vadd.f32 0.0, %v682
      %v684 = vpop.f32.mrf.mxu0
      %v685 = vpop.f32.mrf.mxu0
      %v686 = vadd.f32 0.0, %v685
      %v687 = vpop.f32.mrf.mxu0
      %688 = vmatprep.mubr.bf16.mxu0 0
      %689 = vmatmul.mubr.bf16.gmra.mxu0 %v566
      %v690 = vpop.f32.mrf.mxu0
      %v691 = vadd.f32 0.0, %v690
      %v692 = vpop.f32.mrf.mxu0
      %v693 = vpop.f32.mrf.mxu0
      %v694 = vadd.f32 0.0, %v693
      %v695 = vpop.f32.mrf.mxu0
      %696 = vmatprep.mubr.bf16.mxu0 0
      %697 = vmatmul.mubr.bf16.gmra.mxu0 %v569
      %v698 = vpop.f32.mrf.mxu0
      %v699 = vadd.f32 0.0, %v698
      %v700 = vpop.f32.mrf.mxu0
      %v701 = vpop.f32.mrf.mxu0
      %v702 = vadd.f32 0.0, %v701
      %v703 = vpop.f32.mrf.mxu0
      %704 = vmatprep.mubr.bf16.mxu0 0
      %705 = vmatmul.mubr.bf16.gmra.mxu0 %v572
      %v706 = vpop.f32.mrf.mxu0
      %v707 = vadd.f32 0.0, %v706
      %v708 = vpop.f32.mrf.mxu0
      %v709 = vpop.f32.mrf.mxu0
      %v710 = vadd.f32 0.0, %v709
      %v711 = vpop.f32.mrf.mxu0
      %712 = vmatprep.mubr.bf16.mxu0 0
      %713 = vmatmul.mubr.bf16.gmra.mxu0 %v575
      %v714 = vpop.f32.mrf.mxu0
      %v715 = vadd.f32 0.0, %v714
      %v716 = vpop.f32.mrf.mxu0
      %v717 = vpop.f32.mrf.mxu0
      %v718 = vadd.f32 0.0, %v717
      %v719 = vpop.f32.mrf.mxu0
      %720 = vmatprep.mubr.bf16.mxu0 0
      %721 = vmatmul.mubr.bf16.gmra.mxu0 %v578
      %v722 = vpop.f32.mrf.mxu0
      %v723 = vadd.f32 0.0, %v722
      %v724 = vpop.f32.mrf.mxu0
      %v725 = vpop.f32.mrf.mxu0
      %v726 = vadd.f32 0.0, %v725
      %v727 = vpop.f32.mrf.mxu0
      %728 = vmatprep.mubr.bf16.mxu0 0
      %729 = vmatmul.mubr.bf16.gmra.mxu0 %v581
      %v730 = vpop.f32.mrf.mxu0
      %v731 = vadd.f32 0.0, %v730
      %v732 = vpop.f32.mrf.mxu0
      %v733 = vpop.f32.mrf.mxu0
      %v734 = vadd.f32 0.0, %v733
      %v735 = vpop.f32.mrf.mxu0
      %736 = vmatprep.mubr.bf16.mxu0 0
      %737 = vmatmul.mubr.bf16.gmra.mxu0 %v584
      %v738 = vpop.f32.mrf.mxu0
      %v739 = vadd.f32 0.0, %v738
      %v740 = vpop.f32.mrf.mxu0
      %v741 = vpop.f32.mrf.mxu0
      %v742 = vadd.f32 0.0, %v741
      %v743 = vpop.f32.mrf.mxu0
      %744 = vmatprep.mubr.bf16.mxu0 0
      %745 = vmatmul.mubr.bf16.gmra.mxu0 %v587
      %v746 = vpop.f32.mrf.mxu0
      %v747 = vadd.f32 0.0, %v746
      %v748 = vpop.f32.mrf.mxu0
      %v749 = vpop.f32.mrf.mxu0
      %v750 = vadd.f32 0.0, %v749
      %v751 = vpop.f32.mrf.mxu0
      %752 = vmatprep.mubr.bf16.mxu0 0
      %753 = vmatmul.mubr.bf16.gmra.mxu0 %v590
      %v754 = vpop.f32.mrf.mxu0
      %v755 = vadd.f32 0.0, %v754
      %v756 = vpop.f32.mrf.mxu0
      %v757 = vpop.f32.mrf.mxu0
      %v758 = vadd.f32 0.0, %v757
      %v759 = vpop.f32.mrf.mxu0
      %760 = vmatprep.mubr.bf16.mxu0 0
      %761 = vmatmul.mubr.bf16.gmra.mxu0 %v593
      %v762 = vpop.f32.mrf.mxu0
      %v763 = vadd.f32 0.0, %v762
      %v764 = vpop.f32.mrf.mxu0
      %v765 = vpop.f32.mrf.mxu0
      %v766 = vadd.f32 0.0, %v765
      %v767 = vpop.f32.mrf.mxu0
      %768 = vmatprep.mubr.bf16.mxu0 0
      %769 = vmatmul.mubr.bf16.gmra.mxu0 %v596
      %v770 = vpop.f32.mrf.mxu0
      %v771 = vadd.f32 0.0, %v770
      %v772 = vpop.f32.mrf.mxu0
      %v773 = vpop.f32.mrf.mxu0
      %v774 = vadd.f32 0.0, %v773
      %v775 = vpop.f32.mrf.mxu0
      %776 = vmatprep.mubr.bf16.mxu0 0
      %777 = vmatmul.mubr.bf16.gmra.mxu0 %v599
      %v778 = vpop.f32.mrf.mxu0
      %v779 = vadd.f32 0.0, %v778
      %v780 = vpop.f32.mrf.mxu0
      %v781 = vpop.f32.mrf.mxu0
      %v782 = vadd.f32 0.0, %v781
      %v783 = vpop.f32.mrf.mxu0
      %784 = vdwg.mxu0
      %v785 = vsel %vm546, %v378, 0
      %v787 = vsel %vm546, %v379, 0
      %v789 = vsel %vm546, %v380, 0
      %v791 = vsel %vm546, %v381, 0
      %v793 = vsel %vm546, %v382, 0
      %v795 = vsel %vm546, %v383, 0
      %v797 = vsel %vm546, %v384, 0
      %v799 = vsel %vm546, %v385, 0
      %v801 = vsel %vm546, %v386, 0
      %v803 = vsel %vm546, %v387, 0
      %v805 = vsel %vm546, %v388, 0
      %v807 = vsel %vm546, %v389, 0
      %v809 = vsel %vm546, %v390, 0
      %v811 = vsel %vm546, %v391, 0
      %v813 = vsel %vm546, %v392, 0
      %v815 = vsel %vm546, %v393, 0
      %v817 = vsel %vm546, %v394, 0
      %v819 = vsel %vm546, %v395, 0
      %v822 = vand.u32 %v300, %v604
      %824 = vmatprep.subr.bf16.mxu0 0
      %825 = vmatpush1.bf16.msra.mxu0 0
      %826 = vmatprep.subr.bf16.mxu0 0
      %827 = vmatpush1.bf16.msra.mxu0 0
      %828 = vmatprep.subr.bf16.mxu0 0
      %829 = vmatpush1.bf16.msra.mxu0 0
      %830 = vmatprep.subr.bf16.mxu0 0
      %831 = vmatpush1.bf16.msra.mxu0 0
      %832 = vmatprep.subr.bf16.mxu0 0
      %833 = vmatpush1.bf16.msra.mxu0 0
      %834 = vmatprep.subr.bf16.mxu0 0
      %835 = vmatpush1.bf16.msra.mxu0 0
      %836 = vmatprep.subr.bf16.mxu0 0
      %837 = vmatpush1.bf16.msra.mxu0 0
      %838 = vmatprep.subr.bf16.mxu0 0
      %839 = vmatpush1.bf16.msra.mxu0 %v822
      %840 = vmatprep.subr.bf16.mxu0 0
      %841 = vmatpush2.bf16.msra.mxu0 0
      %842 = vmatprep.subr.bf16.mxu0 0
      %843 = vmatpush2.bf16.msra.mxu0 0
      %844 = vmatprep.subr.bf16.mxu0 0
      %845 = vmatpush2.bf16.msra.mxu0 0
      %846 = vmatprep.subr.bf16.mxu0 0
      %847 = vmatpush2.bf16.msra.mxu0 0
      %848 = vmatprep.subr.bf16.mxu0 0
      %849 = vmatpush2.bf16.msra.mxu0 0
      %850 = vmatprep.subr.bf16.mxu0 0
      %851 = vmatpush2.bf16.msra.mxu0 0
      %852 = vmatprep.subr.bf16.mxu0 0
      %853 = vmatpush2.bf16.msra.mxu0 0
      %854 = vmatprep.subr.bf16.mxu0 0
      %855 = vmatpush2.bf16.msra.mxu0 0
      %856 = vmatprep.mubr.bf16.mxu0 0
      %857 = vmatmul.mubr.bf16.gmra.mxu0 %v785
      %v858 = vpop.f32.mrf.mxu0
      %v859 = vadd.f32 %v643, %v858
      %v860 = vpop.f32.mrf.mxu0
      %v861 = vpop.f32.mrf.mxu0
      %v862 = vadd.f32 %v646, %v861
      %v863 = vpop.f32.mrf.mxu0
      %864 = vmatprep.mubr.bf16.mxu0 0
      %865 = vmatmul.mubr.bf16.gmra.mxu0 %v787
      %v866 = vpop.f32.mrf.mxu0
      %v867 = vadd.f32 %v651, %v866
      %v868 = vpop.f32.mrf.mxu0
      %v869 = vpop.f32.mrf.mxu0
      %v870 = vadd.f32 %v654, %v869
      %v871 = vpop.f32.mrf.mxu0
      %872 = vmatprep.mubr.bf16.mxu0 0
      %873 = vmatmul.mubr.bf16.gmra.mxu0 %v789
      %v874 = vpop.f32.mrf.mxu0
      %v875 = vadd.f32 %v659, %v874
      %v876 = vpop.f32.mrf.mxu0
      %v877 = vpop.f32.mrf.mxu0
      %v878 = vadd.f32 %v662, %v877
      %v879 = vpop.f32.mrf.mxu0
      %880 = vmatprep.mubr.bf16.mxu0 0
      %881 = vmatmul.mubr.bf16.gmra.mxu0 %v791
      %v882 = vpop.f32.mrf.mxu0
      %v883 = vadd.f32 %v667, %v882
      %v884 = vpop.f32.mrf.mxu0
      %v885 = vpop.f32.mrf.mxu0
      %v886 = vadd.f32 %v670, %v885
      %v887 = vpop.f32.mrf.mxu0
      %888 = vmatprep.mubr.bf16.mxu0 0
      %889 = vmatmul.mubr.bf16.gmra.mxu0 %v793
      %v890 = vpop.f32.mrf.mxu0
      %v891 = vadd.f32 %v675, %v890
      %v892 = vpop.f32.mrf.mxu0
      %v893 = vpop.f32.mrf.mxu0
      %v894 = vadd.f32 %v678, %v893
      %v895 = vpop.f32.mrf.mxu0
      %896 = vmatprep.mubr.bf16.mxu0 0
      %897 = vmatmul.mubr.bf16.gmra.mxu0 %v795
      %v898 = vpop.f32.mrf.mxu0
      %v899 = vadd.f32 %v683, %v898
      %v900 = vpop.f32.mrf.mxu0
      %v901 = vpop.f32.mrf.mxu0
      %v902 = vadd.f32 %v686, %v901
      %v903 = vpop.f32.mrf.mxu0
      %904 = vmatprep.mubr.bf16.mxu0 0
      %905 = vmatmul.mubr.bf16.gmra.mxu0 %v797
      %v906 = vpop.f32.mrf.mxu0
      %v907 = vadd.f32 %v691, %v906
      %v908 = vpop.f32.mrf.mxu0
      %v909 = vpop.f32.mrf.mxu0
      %v910 = vadd.f32 %v694, %v909
      %v911 = vpop.f32.mrf.mxu0
      %912 = vmatprep.mubr.bf16.mxu0 0
      %913 = vmatmul.mubr.bf16.gmra.mxu0 %v799
      %v914 = vpop.f32.mrf.mxu0
      %v915 = vadd.f32 %v699, %v914
      %v916 = vpop.f32.mrf.mxu0
      %v917 = vpop.f32.mrf.mxu0
      %v918 = vadd.f32 %v702, %v917
      %v919 = vpop.f32.mrf.mxu0
      %920 = vmatprep.mubr.bf16.mxu0 0
      %921 = vmatmul.mubr.bf16.gmra.mxu0 %v801
      %v922 = vpop.f32.mrf.mxu0
      %v923 = vadd.f32 %v707, %v922
      %v924 = vpop.f32.mrf.mxu0
      %v925 = vpop.f32.mrf.mxu0
      %v926 = vadd.f32 %v710, %v925
      %v927 = vpop.f32.mrf.mxu0
      %928 = vmatprep.mubr.bf16.mxu0 0
      %929 = vmatmul.mubr.bf16.gmra.mxu0 %v803
      %v930 = vpop.f32.mrf.mxu0
      %v931 = vadd.f32 %v715, %v930
      %v932 = vpop.f32.mrf.mxu0
      %v933 = vpop.f32.mrf.mxu0
      %v934 = vadd.f32 %v718, %v933
      %v935 = vpop.f32.mrf.mxu0
      %936 = vmatprep.mubr.bf16.mxu0 0
      %937 = vmatmul.mubr.bf16.gmra.mxu0 %v805
      %v938 = vpop.f32.mrf.mxu0
      %v939 = vadd.f32 %v723, %v938
      %v940 = vpop.f32.mrf.mxu0
      %v941 = vpop.f32.mrf.mxu0
      %v942 = vadd.f32 %v726, %v941
      %v943 = vpop.f32.mrf.mxu0
      %944 = vmatprep.mubr.bf16.mxu0 0
      %945 = vmatmul.mubr.bf16.gmra.mxu0 %v807
      %v946 = vpop.f32.mrf.mxu0
      %v947 = vadd.f32 %v731, %v946
      %v948 = vpop.f32.mrf.mxu0
      %v949 = vpop.f32.mrf.mxu0
      %v950 = vadd.f32 %v734, %v949
      %v951 = vpop.f32.mrf.mxu0
      %952 = vmatprep.mubr.bf16.mxu0 0
      %953 = vmatmul.mubr.bf16.gmra.mxu0 %v809
      %v954 = vpop.f32.mrf.mxu0
      %v955 = vadd.f32 %v739, %v954
      %v956 = vpop.f32.mrf.mxu0
      %v957 = vpop.f32.mrf.mxu0
      %v958 = vadd.f32 %v742, %v957
      %v959 = vpop.f32.mrf.mxu0
      %960 = vmatprep.mubr.bf16.mxu0 0
      %961 = vmatmul.mubr.bf16.gmra.mxu0 %v811
      %v962 = vpop.f32.mrf.mxu0
      %v963 = vadd.f32 %v747, %v962
      %v964 = vpop.f32.mrf.mxu0
      %v965 = vpop.f32.mrf.mxu0
      %v966 = vadd.f32 %v750, %v965
      %v967 = vpop.f32.mrf.mxu0
      %968 = vmatprep.mubr.bf16.mxu0 0
      %969 = vmatmul.mubr.bf16.gmra.mxu0 %v813
      %v970 = vpop.f32.mrf.mxu0
      %v971 = vadd.f32 %v755, %v970
      %v972 = vpop.f32.mrf.mxu0
      %v973 = vpop.f32.mrf.mxu0
      %v974 = vadd.f32 %v758, %v973
      %v975 = vpop.f32.mrf.mxu0
      %976 = vmatprep.mubr.bf16.mxu0 0
      %977 = vmatmul.mubr.bf16.gmra.mxu0 %v815
      %v978 = vpop.f32.mrf.mxu0
      %v979 = vadd.f32 %v763, %v978
      %v980 = vpop.f32.mrf.mxu0
      %v981 = vpop.f32.mrf.mxu0
      %v982 = vadd.f32 %v766, %v981
      %v983 = vpop.f32.mrf.mxu0
      %984 = vmatprep.mubr.bf16.mxu0 0
      %985 = vmatmul.mubr.bf16.gmra.mxu0 %v817
      %v986 = vpop.f32.mrf.mxu0
      %v987 = vadd.f32 %v771, %v986
      %v988 = vpop.f32.mrf.mxu0
      %v989 = vpop.f32.mrf.mxu0
      %v990 = vadd.f32 %v774, %v989
      %v991 = vpop.f32.mrf.mxu0
      %992 = vmatprep.mubr.bf16.mxu0 0
      %993 = vmatmul.mubr.bf16.gmra.mxu0 %v819
      %v994 = vpop.f32.mrf.mxu0
      %v995 = vadd.f32 %v779, %v994
      %v996 = vpop.f32.mrf.mxu0
      %v997 = vpop.f32.mrf.mxu0
      %v998 = vadd.f32 %v782, %v997
      %v999 = vpop.f32.mrf.mxu0
      %1000 = vdwg.mxu0
      %v1001 = vld [vmem:[%s244] sm:$0xe]
      %s1002 = scalar_lea.vmem %s248, 4
      %v1003 = vld [vmem:[%s1002] sm:$0x3]
      %v1005 = vunpack.c.l.b16 %v1001
      %v1006 = vpack.c.b16 %v342, %v1005
      %vm1007 = vcmask 1046528
      %v1008 = vrot.slane %v1006, 1
      %v1009 = vrot.slane %v379, 1
      %v1010 = vsel %vm1007, %v1008, %v1009
      %v1011 = vrot.slane %v380, 1
      %v1012 = vsel %vm1007, %v1009, %v1011
      %v1013 = vrot.slane %v381, 1
      %v1014 = vsel %vm1007, %v1011, %v1013
      %v1015 = vrot.slane %v382, 1
      %v1016 = vsel %vm1007, %v1013, %v1015
      %v1017 = vrot.slane %v383, 1
      %v1018 = vsel %vm1007, %v1015, %v1017
      %v1019 = vrot.slane %v384, 1
      %v1020 = vsel %vm1007, %v1017, %v1019
      %v1021 = vrot.slane %v385, 1
      %v1022 = vsel %vm1007, %v1019, %v1021
      %v1023 = vrot.slane %v386, 1
      %v1024 = vsel %vm1007, %v1021, %v1023
      %v1025 = vrot.slane %v387, 1
      %v1026 = vsel %vm1007, %v1023, %v1025
      %v1027 = vrot.slane %v388, 1
      %v1028 = vsel %vm1007, %v1025, %v1027
      %v1029 = vrot.slane %v389, 1
      %v1030 = vsel %vm1007, %v1027, %v1029
      %v1031 = vrot.slane %v390, 1
      %v1032 = vsel %vm1007, %v1029, %v1031
      %v1033 = vrot.slane %v391, 1
      %v1034 = vsel %vm1007, %v1031, %v1033
      %v1035 = vrot.slane %v392, 1
      %v1036 = vsel %vm1007, %v1033, %v1035
      %v1037 = vrot.slane %v393, 1
      %v1038 = vsel %vm1007, %v1035, %v1037
      %v1039 = vrot.slane %v394, 1
      %v1040 = vsel %vm1007, %v1037, %v1039
      %v1041 = vrot.slane %v395, 1
      %v1042 = vsel %vm1007, %v1039, %v1041
      %v1043 = vrot.slane %v396, 1
      %v1044 = vsel %vm1007, %v1041, %v1043
      %v1046 = vsel %vm546, %v1010, 0
      %v1049 = vsel %vm546, %v1012, 0
      %v1052 = vsel %vm546, %v1014, 0
      %v1055 = vsel %vm546, %v1016, 0
      %v1058 = vsel %vm546, %v1018, 0
      %v1061 = vsel %vm546, %v1020, 0
      %v1064 = vsel %vm546, %v1022, 0
      %v1067 = vsel %vm546, %v1024, 0
      %v1070 = vsel %vm546, %v1026, 0
      %v1073 = vsel %vm546, %v1028, 0
      %v1076 = vsel %vm546, %v1030, 0
      %v1079 = vsel %vm546, %v1032, 0
      %v1082 = vsel %vm546, %v1034, 0
      %v1085 = vsel %vm546, %v1036, 0
      %v1088 = vsel %vm546, %v1038, 0
      %v1091 = vsel %vm546, %v1040, 0
      %v1094 = vsel %vm546, %v1042, 0
      %v1097 = vsel %vm546, %v1044, 0
      %v1100 = vand.u32 %v1003, %v604
      %1102 = vmatprep.subr.bf16.mxu0 0
      %1103 = vmatpush1.bf16.msra.mxu0 0
      %1104 = vmatprep.subr.bf16.mxu0 0
      %1105 = vmatpush1.bf16.msra.mxu0 0
      %1106 = vmatprep.subr.bf16.mxu0 0
      %1107 = vmatpush1.bf16.msra.mxu0 0
      %1108 = vmatprep.subr.bf16.mxu0 0
      %1109 = vmatpush1.bf16.msra.mxu0 0
      %1110 = vmatprep.subr.bf16.mxu0 0
      %1111 = vmatpush1.bf16.msra.mxu0 0
      %1112 = vmatprep.subr.bf16.mxu0 0
      %1113 = vmatpush1.bf16.msra.mxu0 0
      %1114 = vmatprep.subr.bf16.mxu0 0
      %1115 = vmatpush1.bf16.msra.mxu0 0
      %1116 = vmatprep.subr.bf16.mxu0 0
      %1117 = vmatpush1.bf16.msra.mxu0 %v1100
      %1118 = vmatprep.subr.bf16.mxu0 0
      %1119 = vmatpush2.bf16.msra.mxu0 0
      %1120 = vmatprep.subr.bf16.mxu0 0
      %1121 = vmatpush2.bf16.msra.mxu0 0
      %1122 = vmatprep.subr.bf16.mxu0 0
      %1123 = vmatpush2.bf16.msra.mxu0 0
      %1124 = vmatprep.subr.bf16.mxu0 0
      %1125 = vmatpush2.bf16.msra.mxu0 0
      %1126 = vmatprep.subr.bf16.mxu0 0
      %1127 = vmatpush2.bf16.msra.mxu0 0
      %1128 = vmatprep.subr.bf16.mxu0 0
      %1129 = vmatpush2.bf16.msra.mxu0 0
      %1130 = vmatprep.subr.bf16.mxu0 0
      %1131 = vmatpush2.bf16.msra.mxu0 0
      %1132 = vmatprep.subr.bf16.mxu0 0
      %1133 = vmatpush2.bf16.msra.mxu0 0
      %1134 = vmatprep.mubr.bf16.mxu0 0
      %1135 = vmatmul.mubr.bf16.gmra.mxu0 %v1046
      %v1136 = vpop.f32.mrf.mxu0
      %v1137 = vadd.f32 0.0, %v1136
      %v1138 = vpop.f32.mrf.mxu0
      %v1139 = vpop.f32.mrf.mxu0
      %v1140 = vadd.f32 0.0, %v1139
      %v1141 = vpop.f32.mrf.mxu0
      %1142 = vmatprep.mubr.bf16.mxu0 0
      %1143 = vmatmul.mubr.bf16.gmra.mxu0 %v1049
      %v1144 = vpop.f32.mrf.mxu0
      %v1145 = vadd.f32 0.0, %v1144
      %v1146 = vpop.f32.mrf.mxu0
      %v1147 = vpop.f32.mrf.mxu0
      %v1148 = vadd.f32 0.0, %v1147
      %v1149 = vpop.f32.mrf.mxu0
      %1150 = vmatprep.mubr.bf16.mxu0 0
      %1151 = vmatmul.mubr.bf16.gmra.mxu0 %v1052
      %v1152 = vpop.f32.mrf.mxu0
      %v1153 = vadd.f32 0.0, %v1152
      %v1154 = vpop.f32.mrf.mxu0
      %v1155 = vpop.f32.mrf.mxu0
      %v1156 = vadd.f32 0.0, %v1155
      %v1157 = vpop.f32.mrf.mxu0
      %1158 = vmatprep.mubr.bf16.mxu0 0
      %1159 = vmatmul.mubr.bf16.gmra.mxu0 %v1055
      %v1160 = vpop.f32.mrf.mxu0
      %v1161 = vadd.f32 0.0, %v1160
      %v1162 = vpop.f32.mrf.mxu0
      %v1163 = vpop.f32.mrf.mxu0
      %v1164 = vadd.f32 0.0, %v1163
      %v1165 = vpop.f32.mrf.mxu0
      %1166 = vmatprep.mubr.bf16.mxu0 0
      %1167 = vmatmul.mubr.bf16.gmra.mxu0 %v1058
      %v1168 = vpop.f32.mrf.mxu0
      %v1169 = vadd.f32 0.0, %v1168
      %v1170 = vpop.f32.mrf.mxu0
      %v1171 = vpop.f32.mrf.mxu0
      %v1172 = vadd.f32 0.0, %v1171
      %v1173 = vpop.f32.mrf.mxu0
      %1174 = vmatprep.mubr.bf16.mxu0 0
      %1175 = vmatmul.mubr.bf16.gmra.mxu0 %v1061
      %v1176 = vpop.f32.mrf.mxu0
      %v1177 = vadd.f32 0.0, %v1176
      %v1178 = vpop.f32.mrf.mxu0
      %v1179 = vpop.f32.mrf.mxu0
      %v1180 = vadd.f32 0.0, %v1179
      %v1181 = vpop.f32.mrf.mxu0
      %1182 = vmatprep.mubr.bf16.mxu0 0
      %1183 = vmatmul.mubr.bf16.gmra.mxu0 %v1064
      %v1184 = vpop.f32.mrf.mxu0
      %v1185 = vadd.f32 0.0, %v1184
      %v1186 = vpop.f32.mrf.mxu0
      %v1187 = vpop.f32.mrf.mxu0
      %v1188 = vadd.f32 0.0, %v1187
      %v1189 = vpop.f32.mrf.mxu0
      %1190 = vmatprep.mubr.bf16.mxu0 0
      %1191 = vmatmul.mubr.bf16.gmra.mxu0 %v1067
      %v1192 = vpop.f32.mrf.mxu0
      %v1193 = vadd.f32 0.0, %v1192
      %v1194 = vpop.f32.mrf.mxu0
      %v1195 = vpop.f32.mrf.mxu0
      %v1196 = vadd.f32 0.0, %v1195
      %v1197 = vpop.f32.mrf.mxu0
      %1198 = vmatprep.mubr.bf16.mxu0 0
      %1199 = vmatmul.mubr.bf16.gmra.mxu0 %v1070
      %v1200 = vpop.f32.mrf.mxu0
      %v1201 = vadd.f32 0.0, %v1200
      %v1202 = vpop.f32.mrf.mxu0
      %v1203 = vpop.f32.mrf.mxu0
      %v1204 = vadd.f32 0.0, %v1203
      %v1205 = vpop.f32.mrf.mxu0
      %1206 = vmatprep.mubr.bf16.mxu0 0
      %1207 = vmatmul.mubr.bf16.gmra.mxu0 %v1073
      %v1208 = vpop.f32.mrf.mxu0
      %v1209 = vadd.f32 0.0, %v1208
      %v1210 = vpop.f32.mrf.mxu0
      %v1211 = vpop.f32.mrf.mxu0
      %v1212 = vadd.f32 0.0, %v1211
      %v1213 = vpop.f32.mrf.mxu0
      %1214 = vmatprep.mubr.bf16.mxu0 0
      %1215 = vmatmul.mubr.bf16.gmra.mxu0 %v1076
      %v1216 = vpop.f32.mrf.mxu0
      %v1217 = vadd.f32 0.0, %v1216
      %v1218 = vpop.f32.mrf.mxu0
      %v1219 = vpop.f32.mrf.mxu0
      %v1220 = vadd.f32 0.0, %v1219
      %v1221 = vpop.f32.mrf.mxu0
      %1222 = vmatprep.mubr.bf16.mxu0 0
      %1223 = vmatmul.mubr.bf16.gmra.mxu0 %v1079
      %v1224 = vpop.f32.mrf.mxu0
      %v1225 = vadd.f32 0.0, %v1224
      %v1226 = vpop.f32.mrf.mxu0
      %v1227 = vpop.f32.mrf.mxu0
      %v1228 = vadd.f32 0.0, %v1227
      %v1229 = vpop.f32.mrf.mxu0
      %1230 = vmatprep.mubr.bf16.mxu0 0
      %1231 = vmatmul.mubr.bf16.gmra.mxu0 %v1082
      %v1232 = vpop.f32.mrf.mxu0
      %v1233 = vadd.f32 0.0, %v1232
      %v1234 = vpop.f32.mrf.mxu0
      %v1235 = vpop.f32.mrf.mxu0
      %v1236 = vadd.f32 0.0, %v1235
      %v1237 = vpop.f32.mrf.mxu0
      %1238 = vmatprep.mubr.bf16.mxu0 0
      %1239 = vmatmul.mubr.bf16.gmra.mxu0 %v1085
      %v1240 = vpop.f32.mrf.mxu0
      %v1241 = vadd.f32 0.0, %v1240
      %v1242 = vpop.f32.mrf.mxu0
      %v1243 = vpop.f32.mrf.mxu0
      %v1244 = vadd.f32 0.0, %v1243
      %v1245 = vpop.f32.mrf.mxu0
      %1246 = vmatprep.mubr.bf16.mxu0 0
      %1247 = vmatmul.mubr.bf16.gmra.mxu0 %v1088
      %v1248 = vpop.f32.mrf.mxu0
      %v1249 = vadd.f32 0.0, %v1248
      %v1250 = vpop.f32.mrf.mxu0
      %v1251 = vpop.f32.mrf.mxu0
      %v1252 = vadd.f32 0.0, %v1251
      %v1253 = vpop.f32.mrf.mxu0
      %1254 = vmatprep.mubr.bf16.mxu0 0
      %1255 = vmatmul.mubr.bf16.gmra.mxu0 %v1091
      %v1256 = vpop.f32.mrf.mxu0
      %v1257 = vadd.f32 0.0, %v1256
      %v1258 = vpop.f32.mrf.mxu0
      %v1259 = vpop.f32.mrf.mxu0
      %v1260 = vadd.f32 0.0, %v1259
      %v1261 = vpop.f32.mrf.mxu0
      %1262 = vmatprep.mubr.bf16.mxu0 0
      %1263 = vmatmul.mubr.bf16.gmra.mxu0 %v1094
      %v1264 = vpop.f32.mrf.mxu0
      %v1265 = vadd.f32 0.0, %v1264
      %v1266 = vpop.f32.mrf.mxu0
      %v1267 = vpop.f32.mrf.mxu0
      %v1268 = vadd.f32 0.0, %v1267
      %v1269 = vpop.f32.mrf.mxu0
      %1270 = vmatprep.mubr.bf16.mxu0 0
      %1271 = vmatmul.mubr.bf16.gmra.mxu0 %v1097
      %v1272 = vpop.f32.mrf.mxu0
      %v1273 = vadd.f32 0.0, %v1272
      %v1274 = vpop.f32.mrf.mxu0
      %v1275 = vpop.f32.mrf.mxu0
      %v1276 = vadd.f32 0.0, %v1275
      %v1277 = vpop.f32.mrf.mxu0
      %1278 = vdwg.mxu0
      %v1279 = vadd.f32 %v859, %v1137
      %v1280 = vadd.f32 %v862, %v1140
      %v1281 = vadd.f32 %v867, %v1145
      %v1282 = vadd.f32 %v870, %v1148
      %v1283 = vadd.f32 %v875, %v1153
      %v1284 = vadd.f32 %v878, %v1156
      %v1285 = vadd.f32 %v883, %v1161
      %v1286 = vadd.f32 %v886, %v1164
      %v1287 = vadd.f32 %v891, %v1169
      %v1288 = vadd.f32 %v894, %v1172
      %v1289 = vadd.f32 %v899, %v1177
      %v1290 = vadd.f32 %v902, %v1180
      %v1291 = vadd.f32 %v907, %v1185
      %v1292 = vadd.f32 %v910, %v1188
      %v1293 = vadd.f32 %v915, %v1193
      %v1294 = vadd.f32 %v918, %v1196
      %v1295 = vadd.f32 %v923, %v1201
      %v1296 = vadd.f32 %v926, %v1204
      %v1297 = vadd.f32 %v931, %v1209
      %v1298 = vadd.f32 %v934, %v1212
      %v1299 = vadd.f32 %v939, %v1217
      %v1300 = vadd.f32 %v942, %v1220
      %v1301 = vadd.f32 %v947, %v1225
      %v1302 = vadd.f32 %v950, %v1228
      %v1303 = vadd.f32 %v955, %v1233
      %v1304 = vadd.f32 %v958, %v1236
      %v1305 = vadd.f32 %v963, %v1241
      %v1306 = vadd.f32 %v966, %v1244
      %v1307 = vadd.f32 %v971, %v1249
      %v1308 = vadd.f32 %v974, %v1252
      %v1309 = vadd.f32 %v979, %v1257
      %v1310 = vadd.f32 %v982, %v1260
      %v1311 = vadd.f32 %v987, %v1265
      %v1312 = vadd.f32 %v990, %v1268
      %v1313 = vadd.f32 %v995, %v1273
      %v1314 = vadd.f32 %v998, %v1276
      %v1315 = vld [vmem:[%s244 + $0x8] sm:$0xe]
      %v1316 = vld [vmem:[%s244 + $0xc] sm:$0xf]
      %v1317 = vld [vmem:[%s244 + $0x10] sm:$0xf]
      %v1318 = vld [vmem:[%s244 + $0x14] sm:$0xf]
      %v1319 = vld [vmem:[%s244 + $0x18] sm:$0xf]
      %v1320 = vld [vmem:[%s244 + $0x1c] sm:$0xf]
      %v1321 = vld [vmem:[%s244 + $0x20] sm:$0xf]
      %v1322 = vld [vmem:[%s244 + $0x24] sm:$0xf]
      %v1323 = vld [vmem:[%s244 + $0x28] sm:$0xf]
      %v1324 = vld [vmem:[%s244 + $0x2c] sm:$0xf]
      %v1325 = vld [vmem:[%s244 + $0x30] sm:$0xf]
      %v1326 = vld [vmem:[%s244 + $0x34] sm:$0xf]
      %v1327 = vld [vmem:[%s244 + $0x38] sm:$0xf]
      %v1328 = vld [vmem:[%s244 + $0x3c] sm:$0xf]
      %v1329 = vld [vmem:[%s244 + $0x40] sm:$0xf]
      %v1330 = vld [vmem:[%s244 + $0x44] sm:$0xf]
      %v1331 = vld [vmem:[%s244 + $0x48] sm:$0xf]
      %v1332 = vld [vmem:[%s244 + $0x4c] sm:$0xf]
      %v1333 = vld [vmem:[%s244 + $0x50] sm:$0xf]
      %v1334 = vld [vmem:[%s244 + $0x54] sm:$0xf]
      %v1335 = vld [vmem:[%s244 + $0x58] sm:$0xf]
      %v1336 = vld [vmem:[%s244 + $0x5c] sm:$0xf]
      %v1337 = vld [vmem:[%s244 + $0x60] sm:$0xf]
      %v1338 = vld [vmem:[%s244 + $0x64] sm:$0xf]
      %v1339 = vld [vmem:[%s244 + $0x68] sm:$0xf]
      %v1340 = vld [vmem:[%s244 + $0x6c] sm:$0xf]
      %v1341 = vld [vmem:[%s244 + $0x70] sm:$0xf]
      %v1342 = vld [vmem:[%s244 + $0x74] sm:$0xf]
      %v1343 = vld [vmem:[%s244 + $0x78] sm:$0xf]
      %v1344 = vld [vmem:[%s244 + $0x7c] sm:$0xf]
      %v1345 = vld [vmem:[%s244 + $0x80] sm:$0xf]
      %v1346 = vld [vmem:[%s244 + $0x84] sm:$0xf]
      %v1347 = vld [vmem:[%s244 + $0x88] sm:$0xf]
      %v1348 = vld [vmem:[%s244 + $0x8c] sm:$0xf]
      %v1349 = vld [vmem:[%s244 + $0x90] sm:$0xf]
      %v1350 = vld [vmem:[%s244 + $0x94] sm:$0xf]
      %v1351 = vld [vmem:[%s244 + $0x98] sm:$0x1]
      %s1352 = scalar_lea.vmem %s248, 6
      %v1353 = vld [vmem:[%s1352] sm:$0x3]
      %v1391 = vunpack.c.l.b16 %v1315
      %v1392 = vunpack.c.l.b16 %v1316
      %v1393 = vunpack.c.l.b16 %v1317
      %v1394 = vunpack.c.l.b16 %v1318
      %v1395 = vunpack.c.l.b16 %v1319
      %v1396 = vunpack.c.l.b16 %v1320
      %v1397 = vunpack.c.l.b16 %v1321
      %v1398 = vunpack.c.l.b16 %v1322
      %v1399 = vunpack.c.l.b16 %v1323
      %v1400 = vunpack.c.l.b16 %v1324
      %v1401 = vunpack.c.l.b16 %v1325
      %v1402 = vunpack.c.l.b16 %v1326
      %v1403 = vunpack.c.l.b16 %v1327
      %v1404 = vunpack.c.l.b16 %v1328
      %v1405 = vunpack.c.l.b16 %v1329
      %v1406 = vunpack.c.l.b16 %v1330
      %v1407 = vunpack.c.l.b16 %v1331
      %v1408 = vunpack.c.l.b16 %v1332
      %v1409 = vunpack.c.l.b16 %v1333
      %v1410 = vunpack.c.l.b16 %v1334
      %v1411 = vunpack.c.l.b16 %v1335
      %v1412 = vunpack.c.l.b16 %v1336
      %v1413 = vunpack.c.l.b16 %v1337
      %v1414 = vunpack.c.l.b16 %v1338
      %v1415 = vunpack.c.l.b16 %v1339
      %v1416 = vunpack.c.l.b16 %v1340
      %v1417 = vunpack.c.l.b16 %v1341
      %v1418 = vunpack.c.l.b16 %v1342
      %v1419 = vunpack.c.l.b16 %v1343
      %v1420 = vunpack.c.l.b16 %v1344
      %v1421 = vunpack.c.l.b16 %v1345
      %v1422 = vunpack.c.l.b16 %v1346
      %v1423 = vunpack.c.l.b16 %v1347
      %v1424 = vunpack.c.l.b16 %v1348
      %v1425 = vunpack.c.l.b16 %v1349
      %v1426 = vunpack.c.l.b16 %v1350
      %v1427 = vunpack.c.l.b16 %v1351
      %v1428 = vpack.c.b16 %v1392, %v1391
      %v1429 = vpack.c.b16 %v1394, %v1393
      %v1430 = vpack.c.b16 %v1396, %v1395
      %v1431 = vpack.c.b16 %v1398, %v1397
      %v1432 = vpack.c.b16 %v1400, %v1399
      %v1433 = vpack.c.b16 %v1402, %v1401
      %v1434 = vpack.c.b16 %v1404, %v1403
      %v1435 = vpack.c.b16 %v1406, %v1405
      %v1436 = vpack.c.b16 %v1408, %v1407
      %v1437 = vpack.c.b16 %v1410, %v1409
      %v1438 = vpack.c.b16 %v1412, %v1411
      %v1439 = vpack.c.b16 %v1414, %v1413
      %v1440 = vpack.c.b16 %v1416, %v1415
      %v1441 = vpack.c.b16 %v1418, %v1417
      %v1442 = vpack.c.b16 %v1420, %v1419
      %v1443 = vpack.c.b16 %v1422, %v1421
      %v1444 = vpack.c.b16 %v1424, %v1423
      %v1445 = vpack.c.b16 %v1426, %v1425
      %v1446 = vpack.c.b16 %v1427, %v1427
      %v1447 = vrot.slane %v1428, 1
      %v1448 = vrot.slane %v1429, 1
      %v1449 = vsel %vm1007, %v1447, %v1448
      %v1450 = vrot.slane %v1430, 1
      %v1451 = vsel %vm1007, %v1448, %v1450
      %v1452 = vrot.slane %v1431, 1
      %v1453 = vsel %vm1007, %v1450, %v1452
      %v1454 = vrot.slane %v1432, 1
      %v1455 = vsel %vm1007, %v1452, %v1454
      %v1456 = vrot.slane %v1433, 1
      %v1457 = vsel %vm1007, %v1454, %v1456
      %v1458 = vrot.slane %v1434, 1
      %v1459 = vsel %vm1007, %v1456, %v1458
      %v1460 = vrot.slane %v1435, 1
      %v1461 = vsel %vm1007, %v1458, %v1460
      %v1462 = vrot.slane %v1436, 1
      %v1463 = vsel %vm1007, %v1460, %v1462
      %v1464 = vrot.slane %v1437, 1
      %v1465 = vsel %vm1007, %v1462, %v1464
      %v1466 = vrot.slane %v1438, 1
      %v1467 = vsel %vm1007, %v1464, %v1466
      %v1468 = vrot.slane %v1439, 1
      %v1469 = vsel %vm1007, %v1466, %v1468
      %v1470 = vrot.slane %v1440, 1
      %v1471 = vsel %vm1007, %v1468, %v1470
      %v1472 = vrot.slane %v1441, 1
      %v1473 = vsel %vm1007, %v1470, %v1472
      %v1474 = vrot.slane %v1442, 1
      %v1475 = vsel %vm1007, %v1472, %v1474
      %v1476 = vrot.slane %v1443, 1
      %v1477 = vsel %vm1007, %v1474, %v1476
      %v1478 = vrot.slane %v1444, 1
      %v1479 = vsel %vm1007, %v1476, %v1478
      %v1480 = vrot.slane %v1445, 1
      %v1481 = vsel %vm1007, %v1478, %v1480
      %v1482 = vrot.slane %v1446, 1
      %v1483 = vsel %vm1007, %v1480, %v1482
      %v1485 = vsel %vm546, %v1449, 0
      %v1488 = vsel %vm546, %v1451, 0
      %v1491 = vsel %vm546, %v1453, 0
      %v1494 = vsel %vm546, %v1455, 0
      %v1497 = vsel %vm546, %v1457, 0
      %v1500 = vsel %vm546, %v1459, 0
      %v1503 = vsel %vm546, %v1461, 0
      %v1506 = vsel %vm546, %v1463, 0
      %v1509 = vsel %vm546, %v1465, 0
      %v1512 = vsel %vm546, %v1467, 0
      %v1515 = vsel %vm546, %v1469, 0
      %v1518 = vsel %vm546, %v1471, 0
      %v1521 = vsel %vm546, %v1473, 0
      %v1524 = vsel %vm546, %v1475, 0
      %v1527 = vsel %vm546, %v1477, 0
      %v1530 = vsel %vm546, %v1479, 0
      %v1533 = vsel %vm546, %v1481, 0
      %v1536 = vsel %vm546, %v1483, 0
      %v1539 = vand.u32 %v1353, %v604
      %1541 = vmatprep.subr.bf16.mxu0 0
      %1542 = vmatpush1.bf16.msra.mxu0 0
      %1543 = vmatprep.subr.bf16.mxu0 0
      %1544 = vmatpush1.bf16.msra.mxu0 0
      %1545 = vmatprep.subr.bf16.mxu0 0
      %1546 = vmatpush1.bf16.msra.mxu0 0
      %1547 = vmatprep.subr.bf16.mxu0 0
      %1548 = vmatpush1.bf16.msra.mxu0 0
      %1549 = vmatprep.subr.bf16.mxu0 0
      %1550 = vmatpush1.bf16.msra.mxu0 0
      %1551 = vmatprep.subr.bf16.mxu0 0
      %1552 = vmatpush1.bf16.msra.mxu0 0
      %1553 = vmatprep.subr.bf16.mxu0 0
      %1554 = vmatpush1.bf16.msra.mxu0 0
      %1555 = vmatprep.subr.bf16.mxu0 0
      %1556 = vmatpush1.bf16.msra.mxu0 %v1539
      %1557 = vmatprep.subr.bf16.mxu0 0
      %1558 = vmatpush2.bf16.msra.mxu0 0
      %1559 = vmatprep.subr.bf16.mxu0 0
      %1560 = vmatpush2.bf16.msra.mxu0 0
      %1561 = vmatprep.subr.bf16.mxu0 0
      %1562 = vmatpush2.bf16.msra.mxu0 0
      %1563 = vmatprep.subr.bf16.mxu0 0
      %1564 = vmatpush2.bf16.msra.mxu0 0
      %1565 = vmatprep.subr.bf16.mxu0 0
      %1566 = vmatpush2.bf16.msra.mxu0 0
      %1567 = vmatprep.subr.bf16.mxu0 0
      %1568 = vmatpush2.bf16.msra.mxu0 0
      %1569 = vmatprep.subr.bf16.mxu0 0
      %1570 = vmatpush2.bf16.msra.mxu0 0
      %1571 = vmatprep.subr.bf16.mxu0 0
      %1572 = vmatpush2.bf16.msra.mxu0 0
      %1573 = vmatprep.mubr.bf16.mxu0 0
      %1574 = vmatmul.mubr.bf16.gmra.mxu0 %v1485
      %v1575 = vpop.f32.mrf.mxu0
      %v1576 = vadd.f32 0.0, %v1575
      %v1577 = vpop.f32.mrf.mxu0
      %v1578 = vpop.f32.mrf.mxu0
      %v1579 = vadd.f32 0.0, %v1578
      %v1580 = vpop.f32.mrf.mxu0
      %1581 = vmatprep.mubr.bf16.mxu0 0
      %1582 = vmatmul.mubr.bf16.gmra.mxu0 %v1488
      %v1583 = vpop.f32.mrf.mxu0
      %v1584 = vadd.f32 0.0, %v1583
      %v1585 = vpop.f32.mrf.mxu0
      %v1586 = vpop.f32.mrf.mxu0
      %v1587 = vadd.f32 0.0, %v1586
      %v1588 = vpop.f32.mrf.mxu0
      %1589 = vmatprep.mubr.bf16.mxu0 0
      %1590 = vmatmul.mubr.bf16.gmra.mxu0 %v1491
      %v1591 = vpop.f32.mrf.mxu0
      %v1592 = vadd.f32 0.0, %v1591
      %v1593 = vpop.f32.mrf.mxu0
      %v1594 = vpop.f32.mrf.mxu0
      %v1595 = vadd.f32 0.0, %v1594
      %v1596 = vpop.f32.mrf.mxu0
      %1597 = vmatprep.mubr.bf16.mxu0 0
      %1598 = vmatmul.mubr.bf16.gmra.mxu0 %v1494
      %v1599 = vpop.f32.mrf.mxu0
      %v1600 = vadd.f32 0.0, %v1599
      %v1601 = vpop.f32.mrf.mxu0
      %v1602 = vpop.f32.mrf.mxu0
      %v1603 = vadd.f32 0.0, %v1602
      %v1604 = vpop.f32.mrf.mxu0
      %1605 = vmatprep.mubr.bf16.mxu0 0
      %1606 = vmatmul.mubr.bf16.gmra.mxu0 %v1497
      %v1607 = vpop.f32.mrf.mxu0
      %v1608 = vadd.f32 0.0, %v1607
      %v1609 = vpop.f32.mrf.mxu0
      %v1610 = vpop.f32.mrf.mxu0
      %v1611 = vadd.f32 0.0, %v1610
      %v1612 = vpop.f32.mrf.mxu0
      %1613 = vmatprep.mubr.bf16.mxu0 0
      %1614 = vmatmul.mubr.bf16.gmra.mxu0 %v1500
      %v1615 = vpop.f32.mrf.mxu0
      %v1616 = vadd.f32 0.0, %v1615
      %v1617 = vpop.f32.mrf.mxu0
      %v1618 = vpop.f32.mrf.mxu0
      %v1619 = vadd.f32 0.0, %v1618
      %v1620 = vpop.f32.mrf.mxu0
      %1621 = vmatprep.mubr.bf16.mxu0 0
      %1622 = vmatmul.mubr.bf16.gmra.mxu0 %v1503
      %v1623 = vpop.f32.mrf.mxu0
      %v1624 = vadd.f32 0.0, %v1623
      %v1625 = vpop.f32.mrf.mxu0
      %v1626 = vpop.f32.mrf.mxu0
      %v1627 = vadd.f32 0.0, %v1626
      %v1628 = vpop.f32.mrf.mxu0
      %1629 = vmatprep.mubr.bf16.mxu0 0
      %1630 = vmatmul.mubr.bf16.gmra.mxu0 %v1506
      %v1631 = vpop.f32.mrf.mxu0
      %v1632 = vadd.f32 0.0, %v1631
      %v1633 = vpop.f32.mrf.mxu0
      %v1634 = vpop.f32.mrf.mxu0
      %v1635 = vadd.f32 0.0, %v1634
      %v1636 = vpop.f32.mrf.mxu0
      %1637 = vmatprep.mubr.bf16.mxu0 0
      %1638 = vmatmul.mubr.bf16.gmra.mxu0 %v1509
      %v1639 = vpop.f32.mrf.mxu0
      %v1640 = vadd.f32 0.0, %v1639
      %v1641 = vpop.f32.mrf.mxu0
      %v1642 = vpop.f32.mrf.mxu0
      %v1643 = vadd.f32 0.0, %v1642
      %v1644 = vpop.f32.mrf.mxu0
      %1645 = vmatprep.mubr.bf16.mxu0 0
      %1646 = vmatmul.mubr.bf16.gmra.mxu0 %v1512
      %v1647 = vpop.f32.mrf.mxu0
      %v1648 = vadd.f32 0.0, %v1647
      %v1649 = vpop.f32.mrf.mxu0
      %v1650 = vpop.f32.mrf.mxu0
      %v1651 = vadd.f32 0.0, %v1650
      %v1652 = vpop.f32.mrf.mxu0
      %1653 = vmatprep.mubr.bf16.mxu0 0
      %1654 = vmatmul.mubr.bf16.gmra.mxu0 %v1515
      %v1655 = vpop.f32.mrf.mxu0
      %v1656 = vadd.f32 0.0, %v1655
      %v1657 = vpop.f32.mrf.mxu0
      %v1658 = vpop.f32.mrf.mxu0
      %v1659 = vadd.f32 0.0, %v1658
      %v1660 = vpop.f32.mrf.mxu0
      %1661 = vmatprep.mubr.bf16.mxu0 0
      %1662 = vmatmul.mubr.bf16.gmra.mxu0 %v1518
      %v1663 = vpop.f32.mrf.mxu0
      %v1664 = vadd.f32 0.0, %v1663
      %v1665 = vpop.f32.mrf.mxu0
      %v1666 = vpop.f32.mrf.mxu0
      %v1667 = vadd.f32 0.0, %v1666
      %v1668 = vpop.f32.mrf.mxu0
      %1669 = vmatprep.mubr.bf16.mxu0 0
      %1670 = vmatmul.mubr.bf16.gmra.mxu0 %v1521
      %v1671 = vpop.f32.mrf.mxu0
      %v1672 = vadd.f32 0.0, %v1671
      %v1673 = vpop.f32.mrf.mxu0
      %v1674 = vpop.f32.mrf.mxu0
      %v1675 = vadd.f32 0.0, %v1674
      %v1676 = vpop.f32.mrf.mxu0
      %1677 = vmatprep.mubr.bf16.mxu0 0
      %1678 = vmatmul.mubr.bf16.gmra.mxu0 %v1524
      %v1679 = vpop.f32.mrf.mxu0
      %v1680 = vadd.f32 0.0, %v1679
      %v1681 = vpop.f32.mrf.mxu0
      %v1682 = vpop.f32.mrf.mxu0
      %v1683 = vadd.f32 0.0, %v1682
      %v1684 = vpop.f32.mrf.mxu0
      %1685 = vmatprep.mubr.bf16.mxu0 0
      %1686 = vmatmul.mubr.bf16.gmra.mxu0 %v1527
      %v1687 = vpop.f32.mrf.mxu0
      %v1688 = vadd.f32 0.0, %v1687
      %v1689 = vpop.f32.mrf.mxu0
      %v1690 = vpop.f32.mrf.mxu0
      %v1691 = vadd.f32 0.0, %v1690
      %v1692 = vpop.f32.mrf.mxu0
      %1693 = vmatprep.mubr.bf16.mxu0 0
      %1694 = vmatmul.mubr.bf16.gmra.mxu0 %v1530
      %v1695 = vpop.f32.mrf.mxu0
      %v1696 = vadd.f32 0.0, %v1695
      %v1697 = vpop.f32.mrf.mxu0
      %v1698 = vpop.f32.mrf.mxu0
      %v1699 = vadd.f32 0.0, %v1698
      %v1700 = vpop.f32.mrf.mxu0
      %1701 = vmatprep.mubr.bf16.mxu0 0
      %1702 = vmatmul.mubr.bf16.gmra.mxu0 %v1533
      %v1703 = vpop.f32.mrf.mxu0
      %v1704 = vadd.f32 0.0, %v1703
      %v1705 = vpop.f32.mrf.mxu0
      %v1706 = vpop.f32.mrf.mxu0
      %v1707 = vadd.f32 0.0, %v1706
      %v1708 = vpop.f32.mrf.mxu0
      %1709 = vmatprep.mubr.bf16.mxu0 0
      %1710 = vmatmul.mubr.bf16.gmra.mxu0 %v1536
      %v1711 = vpop.f32.mrf.mxu0
      %v1712 = vadd.f32 0.0, %v1711
      %v1713 = vpop.f32.mrf.mxu0
      %v1714 = vpop.f32.mrf.mxu0
      %v1715 = vadd.f32 0.0, %v1714
      %v1716 = vpop.f32.mrf.mxu0
      %1717 = vdwg.mxu0
      %v1718 = vadd.f32 %v1279, %v1576
      %v1719 = vadd.f32 %v1280, %v1579
      %v1720 = vadd.f32 %v1281, %v1584
      %v1721 = vadd.f32 %v1282, %v1587
      %v1722 = vadd.f32 %v1283, %v1592
      %v1723 = vadd.f32 %v1284, %v1595
      %v1724 = vadd.f32 %v1285, %v1600
      %v1725 = vadd.f32 %v1286, %v1603
      %v1726 = vadd.f32 %v1287, %v1608
      %v1727 = vadd.f32 %v1288, %v1611
      %v1728 = vadd.f32 %v1289, %v1616
      %v1729 = vadd.f32 %v1290, %v1619
      %v1730 = vadd.f32 %v1291, %v1624
      %v1731 = vadd.f32 %v1292, %v1627
      %v1732 = vadd.f32 %v1293, %v1632
      %v1733 = vadd.f32 %v1294, %v1635
      %v1734 = vadd.f32 %v1295, %v1640
      %v1735 = vadd.f32 %v1296, %v1643
      %v1736 = vadd.f32 %v1297, %v1648
      %v1737 = vadd.f32 %v1298, %v1651
      %v1738 = vadd.f32 %v1299, %v1656
      %v1739 = vadd.f32 %v1300, %v1659
      %v1740 = vadd.f32 %v1301, %v1664
      %v1741 = vadd.f32 %v1302, %v1667
      %v1742 = vadd.f32 %v1303, %v1672
      %v1743 = vadd.f32 %v1304, %v1675
      %v1744 = vadd.f32 %v1305, %v1680
      %v1745 = vadd.f32 %v1306, %v1683
      %v1746 = vadd.f32 %v1307, %v1688
      %v1747 = vadd.f32 %v1308, %v1691
      %v1748 = vadd.f32 %v1309, %v1696
      %v1749 = vadd.f32 %v1310, %v1699
      %v1750 = vadd.f32 %v1311, %v1704
      %v1751 = vadd.f32 %v1312, %v1707
      %v1752 = vadd.f32 %v1313, %v1712
      %v1753 = vadd.f32 %v1314, %v1715
      %v1754 = vld [vmem:[%s244 + $0x98] sm:$0x3]
      %s1755 = scalar_lea.vmem %s248, 8
      %v1756 = vld [vmem:[%s1755] sm:$0x3]
      %v1758 = vunpack.c.l.b16 %v1754
      %v1759 = vpack.c.b16 %v1758, %v1758
      %vm1760 = vsmask.f32 6400
      %v1762 = vshrl.u32 %v1428, 16
      %v1764 = vrot.slane %v1762, 1
      %v1765 = vshll.u32 %v1428, 16
      %v1767 = vrot.slane %v1765, 2
      %v1768 = vor.u32 %v1764, %v1767
      %v1770 = vshrl.u32 %v1429, 16
      %v1772 = vrot.slane %v1770, 1
      %v1773 = vshll.u32 %v1429, 16
      %v1775 = vrot.slane %v1773, 2
      %v1776 = vor.u32 %v1772, %v1775
      %v1777 = vsel %vm1760, %v1768, %v1776
      %v1779 = vshrl.u32 %v1430, 16
      %v1781 = vrot.slane %v1779, 1
      %v1782 = vshll.u32 %v1430, 16
      %v1784 = vrot.slane %v1782, 2
      %v1785 = vor.u32 %v1781, %v1784
      %v1786 = vsel %vm1760, %v1776, %v1785
      %v1788 = vshrl.u32 %v1431, 16
      %v1790 = vrot.slane %v1788, 1
      %v1791 = vshll.u32 %v1431, 16
      %v1793 = vrot.slane %v1791, 2
      %v1794 = vor.u32 %v1790, %v1793
      %v1795 = vsel %vm1760, %v1785, %v1794
      %v1797 = vshrl.u32 %v1432, 16
      %v1799 = vrot.slane %v1797, 1
      %v1800 = vshll.u32 %v1432, 16
      %v1802 = vrot.slane %v1800, 2
      %v1803 = vor.u32 %v1799, %v1802
      %v1804 = vsel %vm1760, %v1794, %v1803
      %v1806 = vshrl.u32 %v1433, 16
      %v1808 = vrot.slane %v1806, 1
      %v1809 = vshll.u32 %v1433, 16
      %v1811 = vrot.slane %v1809, 2
      %v1812 = vor.u32 %v1808, %v1811
      %v1813 = vsel %vm1760, %v1803, %v1812
      %v1815 = vshrl.u32 %v1434, 16
      %v1817 = vrot.slane %v1815, 1
      %v1818 = vshll.u32 %v1434, 16
      %v1820 = vrot.slane %v1818, 2
      %v1821 = vor.u32 %v1817, %v1820
      %v1822 = vsel %vm1760, %v1812, %v1821
      %v1824 = vshrl.u32 %v1435, 16
      %v1826 = vrot.slane %v1824, 1
      %v1827 = vshll.u32 %v1435, 16
      %v1829 = vrot.slane %v1827, 2
      %v1830 = vor.u32 %v1826, %v1829
      %v1831 = vsel %vm1760, %v1821, %v1830
      %v1833 = vshrl.u32 %v1436, 16
      %v1835 = vrot.slane %v1833, 1
      %v1836 = vshll.u32 %v1436, 16
      %v1838 = vrot.slane %v1836, 2
      %v1839 = vor.u32 %v1835, %v1838
      %v1840 = vsel %vm1760, %v1830, %v1839
      %v1842 = vshrl.u32 %v1437, 16
      %v1844 = vrot.slane %v1842, 1
      %v1845 = vshll.u32 %v1437, 16
      %v1847 = vrot.slane %v1845, 2
      %v1848 = vor.u32 %v1844, %v1847
      %v1849 = vsel %vm1760, %v1839, %v1848
      %v1851 = vshrl.u32 %v1438, 16
      %v1853 = vrot.slane %v1851, 1
      %v1854 = vshll.u32 %v1438, 16
      %v1856 = vrot.slane %v1854, 2
      %v1857 = vor.u32 %v1853, %v1856
      %v1858 = vsel %vm1760, %v1848, %v1857
      %v1860 = vshrl.u32 %v1439, 16
      %v1862 = vrot.slane %v1860, 1
      %v1863 = vshll.u32 %v1439, 16
      %v1865 = vrot.slane %v1863, 2
      %v1866 = vor.u32 %v1862, %v1865
      %v1867 = vsel %vm1760, %v1857, %v1866
      %v1869 = vshrl.u32 %v1440, 16
      %v1871 = vrot.slane %v1869, 1
      %v1872 = vshll.u32 %v1440, 16
      %v1874 = vrot.slane %v1872, 2
      %v1875 = vor.u32 %v1871, %v1874
      %v1876 = vsel %vm1760, %v1866, %v1875
      %v1878 = vshrl.u32 %v1441, 16
      %v1880 = vrot.slane %v1878, 1
      %v1881 = vshll.u32 %v1441, 16
      %v1883 = vrot.slane %v1881, 2
      %v1884 = vor.u32 %v1880, %v1883
      %v1885 = vsel %vm1760, %v1875, %v1884
      %v1887 = vshrl.u32 %v1442, 16
      %v1889 = vrot.slane %v1887, 1
      %v1890 = vshll.u32 %v1442, 16
      %v1892 = vrot.slane %v1890, 2
      %v1893 = vor.u32 %v1889, %v1892
      %v1894 = vsel %vm1760, %v1884, %v1893
      %v1896 = vshrl.u32 %v1443, 16
      %v1898 = vrot.slane %v1896, 1
      %v1899 = vshll.u32 %v1443, 16
      %v1901 = vrot.slane %v1899, 2
      %v1902 = vor.u32 %v1898, %v1901
      %v1903 = vsel %vm1760, %v1893, %v1902
      %v1905 = vshrl.u32 %v1444, 16
      %v1907 = vrot.slane %v1905, 1
      %v1908 = vshll.u32 %v1444, 16
      %v1910 = vrot.slane %v1908, 2
      %v1911 = vor.u32 %v1907, %v1910
      %v1912 = vsel %vm1760, %v1902, %v1911
      %v1914 = vshrl.u32 %v1445, 16
      %v1916 = vrot.slane %v1914, 1
      %v1917 = vshll.u32 %v1445, 16
      %v1919 = vrot.slane %v1917, 2
      %v1920 = vor.u32 %v1916, %v1919
      %v1921 = vsel %vm1760, %v1911, %v1920
      %v1923 = vshrl.u32 %v1759, 16
      %v1925 = vrot.slane %v1923, 1
      %v1926 = vshll.u32 %v1759, 16
      %v1928 = vrot.slane %v1926, 2
      %v1929 = vor.u32 %v1925, %v1928
      %v1930 = vsel %vm1760, %v1920, %v1929
      %v1932 = vsel %vm546, %v1777, 0
      %v1935 = vsel %vm546, %v1786, 0
      %v1938 = vsel %vm546, %v1795, 0
      %v1941 = vsel %vm546, %v1804, 0
      %v1944 = vsel %vm546, %v1813, 0
      %v1947 = vsel %vm546, %v1822, 0
      %v1950 = vsel %vm546, %v1831, 0
      %v1953 = vsel %vm546, %v1840, 0
      %v1956 = vsel %vm546, %v1849, 0
      %v1959 = vsel %vm546, %v1858, 0
      %v1962 = vsel %vm546, %v1867, 0
      %v1965 = vsel %vm546, %v1876, 0
      %v1968 = vsel %vm546, %v1885, 0
      %v1971 = vsel %vm546, %v1894, 0
      %v1974 = vsel %vm546, %v1903, 0
      %v1977 = vsel %vm546, %v1912, 0
      %v1980 = vsel %vm546, %v1921, 0
      %v1983 = vsel %vm546, %v1930, 0
      %v1986 = vand.u32 %v1756, %v604
      %1988 = vmatprep.subr.bf16.mxu0 0
      %1989 = vmatpush1.bf16.msra.mxu0 0
      %1990 = vmatprep.subr.bf16.mxu0 0
      %1991 = vmatpush1.bf16.msra.mxu0 0
      %1992 = vmatprep.subr.bf16.mxu0 0
      %1993 = vmatpush1.bf16.msra.mxu0 0
      %1994 = vmatprep.subr.bf16.mxu0 0
      %1995 = vmatpush1.bf16.msra.mxu0 0
      %1996 = vmatprep.subr.bf16.mxu0 0
      %1997 = vmatpush1.bf16.msra.mxu0 0
      %1998 = vmatprep.subr.bf16.mxu0 0
      %1999 = vmatpush1.bf16.msra.mxu0 0
      %2000 = vmatprep.subr.bf16.mxu0 0
      %2001 = vmatpush1.bf16.msra.mxu0 0
      %2002 = vmatprep.subr.bf16.mxu0 0
      %2003 = vmatpush1.bf16.msra.mxu0 %v1986
      %2004 = vmatprep.subr.bf16.mxu0 0
      %2005 = vmatpush2.bf16.msra.mxu0 0
      %2006 = vmatprep.subr.bf16.mxu0 0
      %2007 = vmatpush2.bf16.msra.mxu0 0
      %2008 = vmatprep.subr.bf16.mxu0 0
      %2009 = vmatpush2.bf16.msra.mxu0 0
      %2010 = vmatprep.subr.bf16.mxu0 0
      %2011 = vmatpush2.bf16.msra.mxu0 0
      %2012 = vmatprep.subr.bf16.mxu0 0
      %2013 = vmatpush2.bf16.msra.mxu0 0
      %2014 = vmatprep.subr.bf16.mxu0 0
      %2015 = vmatpush2.bf16.msra.mxu0 0
      %2016 = vmatprep.subr.bf16.mxu0 0
      %2017 = vmatpush2.bf16.msra.mxu0 0
      %2018 = vmatprep.subr.bf16.mxu0 0
      %2019 = vmatpush2.bf16.msra.mxu0 0
      %2020 = vmatprep.mubr.bf16.mxu0 0
      %2021 = vmatmul.mubr.bf16.gmra.mxu0 %v1932
      %v2022 = vpop.f32.mrf.mxu0
      %v2023 = vadd.f32 0.0, %v2022
      %v2024 = vpop.f32.mrf.mxu0
      %v2025 = vpop.f32.mrf.mxu0
      %v2026 = vadd.f32 0.0, %v2025
      %v2027 = vpop.f32.mrf.mxu0
      %2028 = vmatprep.mubr.bf16.mxu0 0
      %2029 = vmatmul.mubr.bf16.gmra.mxu0 %v1935
      %v2030 = vpop.f32.mrf.mxu0
      %v2031 = vadd.f32 0.0, %v2030
      %v2032 = vpop.f32.mrf.mxu0
      %v2033 = vpop.f32.mrf.mxu0
      %v2034 = vadd.f32 0.0, %v2033
      %v2035 = vpop.f32.mrf.mxu0
      %2036 = vmatprep.mubr.bf16.mxu0 0
      %2037 = vmatmul.mubr.bf16.gmra.mxu0 %v1938
      %v2038 = vpop.f32.mrf.mxu0
      %v2039 = vadd.f32 0.0, %v2038
      %v2040 = vpop.f32.mrf.mxu0
      %v2041 = vpop.f32.mrf.mxu0
      %v2042 = vadd.f32 0.0, %v2041
      %v2043 = vpop.f32.mrf.mxu0
      %2044 = vmatprep.mubr.bf16.mxu0 0
      %2045 = vmatmul.mubr.bf16.gmra.mxu0 %v1941
      %v2046 = vpop.f32.mrf.mxu0
      %v2047 = vadd.f32 0.0, %v2046
      %v2048 = vpop.f32.mrf.mxu0
      %v2049 = vpop.f32.mrf.mxu0
      %v2050 = vadd.f32 0.0, %v2049
      %v2051 = vpop.f32.mrf.mxu0
      %2052 = vmatprep.mubr.bf16.mxu0 0
      %2053 = vmatmul.mubr.bf16.gmra.mxu0 %v1944
      %v2054 = vpop.f32.mrf.mxu0
      %v2055 = vadd.f32 0.0, %v2054
      %v2056 = vpop.f32.mrf.mxu0
      %v2057 = vpop.f32.mrf.mxu0
      %v2058 = vadd.f32 0.0, %v2057
      %v2059 = vpop.f32.mrf.mxu0
      %2060 = vmatprep.mubr.bf16.mxu0 0
      %2061 = vmatmul.mubr.bf16.gmra.mxu0 %v1947
      %v2062 = vpop.f32.mrf.mxu0
      %v2063 = vadd.f32 0.0, %v2062
      %v2064 = vpop.f32.mrf.mxu0
      %v2065 = vpop.f32.mrf.mxu0
      %v2066 = vadd.f32 0.0, %v2065
      %v2067 = vpop.f32.mrf.mxu0
      %2068 = vmatprep.mubr.bf16.mxu0 0
      %2069 = vmatmul.mubr.bf16.gmra.mxu0 %v1950
      %v2070 = vpop.f32.mrf.mxu0
      %v2071 = vadd.f32 0.0, %v2070
      %v2072 = vpop.f32.mrf.mxu0
      %v2073 = vpop.f32.mrf.mxu0
      %v2074 = vadd.f32 0.0, %v2073
      %v2075 = vpop.f32.mrf.mxu0
      %2076 = vmatprep.mubr.bf16.mxu0 0
      %2077 = vmatmul.mubr.bf16.gmra.mxu0 %v1953
      %v2078 = vpop.f32.mrf.mxu0
      %v2079 = vadd.f32 0.0, %v2078
      %v2080 = vpop.f32.mrf.mxu0
      %v2081 = vpop.f32.mrf.mxu0
      %v2082 = vadd.f32 0.0, %v2081
      %v2083 = vpop.f32.mrf.mxu0
      %2084 = vmatprep.mubr.bf16.mxu0 0
      %2085 = vmatmul.mubr.bf16.gmra.mxu0 %v1956
      %v2086 = vpop.f32.mrf.mxu0
      %v2087 = vadd.f32 0.0, %v2086
      %v2088 = vpop.f32.mrf.mxu0
      %v2089 = vpop.f32.mrf.mxu0
      %v2090 = vadd.f32 0.0, %v2089
      %v2091 = vpop.f32.mrf.mxu0
      %2092 = vmatprep.mubr.bf16.mxu0 0
      %2093 = vmatmul.mubr.bf16.gmra.mxu0 %v1959
      %v2094 = vpop.f32.mrf.mxu0
      %v2095 = vadd.f32 0.0, %v2094
      %v2096 = vpop.f32.mrf.mxu0
      %v2097 = vpop.f32.mrf.mxu0
      %v2098 = vadd.f32 0.0, %v2097
      %v2099 = vpop.f32.mrf.mxu0
      %2100 = vmatprep.mubr.bf16.mxu0 0
      %2101 = vmatmul.mubr.bf16.gmra.mxu0 %v1962
      %v2102 = vpop.f32.mrf.mxu0
      %v2103 = vadd.f32 0.0, %v2102
      %v2104 = vpop.f32.mrf.mxu0
      %v2105 = vpop.f32.mrf.mxu0
      %v2106 = vadd.f32 0.0, %v2105
      %v2107 = vpop.f32.mrf.mxu0
      %2108 = vmatprep.mubr.bf16.mxu0 0
      %2109 = vmatmul.mubr.bf16.gmra.mxu0 %v1965
      %v2110 = vpop.f32.mrf.mxu0
      %v2111 = vadd.f32 0.0, %v2110
      %v2112 = vpop.f32.mrf.mxu0
      %v2113 = vpop.f32.mrf.mxu0
      %v2114 = vadd.f32 0.0, %v2113
      %v2115 = vpop.f32.mrf.mxu0
      %2116 = vmatprep.mubr.bf16.mxu0 0
      %2117 = vmatmul.mubr.bf16.gmra.mxu0 %v1968
      %v2118 = vpop.f32.mrf.mxu0
      %v2119 = vadd.f32 0.0, %v2118
      %v2120 = vpop.f32.mrf.mxu0
      %v2121 = vpop.f32.mrf.mxu0
      %v2122 = vadd.f32 0.0, %v2121
      %v2123 = vpop.f32.mrf.mxu0
      %2124 = vmatprep.mubr.bf16.mxu0 0
      %2125 = vmatmul.mubr.bf16.gmra.mxu0 %v1971
      %v2126 = vpop.f32.mrf.mxu0
      %v2127 = vadd.f32 0.0, %v2126
      %v2128 = vpop.f32.mrf.mxu0
      %v2129 = vpop.f32.mrf.mxu0
      %v2130 = vadd.f32 0.0, %v2129
      %v2131 = vpop.f32.mrf.mxu0
      %2132 = vmatprep.mubr.bf16.mxu0 0
      %2133 = vmatmul.mubr.bf16.gmra.mxu0 %v1974
      %v2134 = vpop.f32.mrf.mxu0
      %v2135 = vadd.f32 0.0, %v2134
      %v2136 = vpop.f32.mrf.mxu0
      %v2137 = vpop.f32.mrf.mxu0
      %v2138 = vadd.f32 0.0, %v2137
      %v2139 = vpop.f32.mrf.mxu0
      %2140 = vmatprep.mubr.bf16.mxu0 0
      %2141 = vmatmul.mubr.bf16.gmra.mxu0 %v1977
      %v2142 = vpop.f32.mrf.mxu0
      %v2143 = vadd.f32 0.0, %v2142
      %v2144 = vpop.f32.mrf.mxu0
      %v2145 = vpop.f32.mrf.mxu0
      %v2146 = vadd.f32 0.0, %v2145
      %v2147 = vpop.f32.mrf.mxu0
      %2148 = vmatprep.mubr.bf16.mxu0 0
      %2149 = vmatmul.mubr.bf16.gmra.mxu0 %v1980
      %v2150 = vpop.f32.mrf.mxu0
      %v2151 = vadd.f32 0.0, %v2150
      %v2152 = vpop.f32.mrf.mxu0
      %v2153 = vpop.f32.mrf.mxu0
      %v2154 = vadd.f32 0.0, %v2153
      %v2155 = vpop.f32.mrf.mxu0
      %2156 = vmatprep.mubr.bf16.mxu0 0
      %2157 = vmatmul.mubr.bf16.gmra.mxu0 %v1983
      %v2158 = vpop.f32.mrf.mxu0
      %v2159 = vadd.f32 0.0, %v2158
      %v2160 = vpop.f32.mrf.mxu0
      %v2161 = vpop.f32.mrf.mxu0
      %v2162 = vadd.f32 0.0, %v2161
      %v2163 = vpop.f32.mrf.mxu0
      %2164 = vdwg.mxu0
      %v2165 = vadd.f32 %v1718, %v2023
      %v2166 = vadd.f32 %v1719, %v2026
      %v2167 = vadd.f32 %v1720, %v2031
      %v2168 = vadd.f32 %v1721, %v2034
      %v2169 = vadd.f32 %v1722, %v2039
      %v2170 = vadd.f32 %v1723, %v2042
      %v2171 = vadd.f32 %v1724, %v2047
      %v2172 = vadd.f32 %v1725, %v2050
      %v2173 = vadd.f32 %v1726, %v2055
      %v2174 = vadd.f32 %v1727, %v2058
      %v2175 = vadd.f32 %v1728, %v2063
      %v2176 = vadd.f32 %v1729, %v2066
      %v2177 = vadd.f32 %v1730, %v2071
      %v2178 = vadd.f32 %v1731, %v2074
      %v2179 = vadd.f32 %v1732, %v2079
      %v2180 = vadd.f32 %v1733, %v2082
      %v2181 = vadd.f32 %v1734, %v2087
      %v2182 = vadd.f32 %v1735, %v2090
      %v2183 = vadd.f32 %v1736, %v2095
      %v2184 = vadd.f32 %v1737, %v2098
      %v2185 = vadd.f32 %v1738, %v2103
      %v2186 = vadd.f32 %v1739, %v2106
      %v2187 = vadd.f32 %v1740, %v2111
      %v2188 = vadd.f32 %v1741, %v2114
      %v2189 = vadd.f32 %v1742, %v2119
      %v2190 = vadd.f32 %v1743, %v2122
      %v2191 = vadd.f32 %v1744, %v2127
      %v2192 = vadd.f32 %v1745, %v2130
      %v2193 = vadd.f32 %v1746, %v2135
      %v2194 = vadd.f32 %v1747, %v2138
      %v2195 = vadd.f32 %v1748, %v2143
      %v2196 = vadd.f32 %v1749, %v2146
      %v2197 = vadd.f32 %v1750, %v2151
      %v2198 = vadd.f32 %v1751, %v2154
      %v2199 = vadd.f32 %v1752, %v2159
      %v2200 = vadd.f32 %v1753, %v2162
      %v2201 = vld [vmem:[%s244 + $0x8] sm:$0xc]
      %s2202 = scalar_lea.vmem %s248, 10
      %v2203 = vld [vmem:[%s2202] sm:$0x3]
      %v2205 = vunpack.c.l.b16 %v2201
      %v2206 = vpack.c.b16 %v1392, %v2205
      %vm2207 = vcmask 1045504
      %v2208 = vrot.slane %v2206, 2
      %v2209 = vrot.slane %v1429, 2
      %v2210 = vsel %vm2207, %v2208, %v2209
      %v2211 = vrot.slane %v1430, 2
      %v2212 = vsel %vm2207, %v2209, %v2211
      %v2213 = vrot.slane %v1431, 2
      %v2214 = vsel %vm2207, %v2211, %v2213
      %v2215 = vrot.slane %v1432, 2
      %v2216 = vsel %vm2207, %v2213, %v2215
      %v2217 = vrot.slane %v1433, 2
      %v2218 = vsel %vm2207, %v2215, %v2217
      %v2219 = vrot.slane %v1434, 2
      %v2220 = vsel %vm2207, %v2217, %v2219
      %v2221 = vrot.slane %v1435, 2
      %v2222 = vsel %vm2207, %v2219, %v2221
      %v2223 = vrot.slane %v1436, 2
      %v2224 = vsel %vm2207, %v2221, %v2223
      %v2225 = vrot.slane %v1437, 2
      %v2226 = vsel %vm2207, %v2223, %v2225
      %v2227 = vrot.slane %v1438, 2
      %v2228 = vsel %vm2207, %v2225, %v2227
      %v2229 = vrot.slane %v1439, 2
      %v2230 = vsel %vm2207, %v2227, %v2229
      %v2231 = vrot.slane %v1440, 2
      %v2232 = vsel %vm2207, %v2229, %v2231
      %v2233 = vrot.slane %v1441, 2
      %v2234 = vsel %vm2207, %v2231, %v2233
      %v2235 = vrot.slane %v1442, 2
      %v2236 = vsel %vm2207, %v2233, %v2235
      %v2237 = vrot.slane %v1443, 2
      %v2238 = vsel %vm2207, %v2235, %v2237
      %v2239 = vrot.slane %v1444, 2
      %v2240 = vsel %vm2207, %v2237, %v2239
      %v2241 = vrot.slane %v1445, 2
      %v2242 = vsel %vm2207, %v2239, %v2241
      %v2243 = vrot.slane %v1759, 2
      %v2244 = vsel %vm2207, %v2241, %v2243
      %v2246 = vsel %vm546, %v2210, 0
      %v2249 = vsel %vm546, %v2212, 0
      %v2252 = vsel %vm546, %v2214, 0
      %v2255 = vsel %vm546, %v2216, 0
      %v2258 = vsel %vm546, %v2218, 0
      %v2261 = vsel %vm546, %v2220, 0
      %v2264 = vsel %vm546, %v2222, 0
      %v2267 = vsel %vm546, %v2224, 0
      %v2270 = vsel %vm546, %v2226, 0
      %v2273 = vsel %vm546, %v2228, 0
      %v2276 = vsel %vm546, %v2230, 0
      %v2279 = vsel %vm546, %v2232, 0
      %v2282 = vsel %vm546, %v2234, 0
      %v2285 = vsel %vm546, %v2236, 0
      %v2288 = vsel %vm546, %v2238, 0
      %v2291 = vsel %vm546, %v2240, 0
      %v2294 = vsel %vm546, %v2242, 0
      %v2297 = vsel %vm546, %v2244, 0
      %v2300 = vand.u32 %v2203, %v604
      %2302 = vmatprep.subr.bf16.mxu0 0
      %2303 = vmatpush1.bf16.msra.mxu0 0
      %2304 = vmatprep.subr.bf16.mxu0 0
      %2305 = vmatpush1.bf16.msra.mxu0 0
      %2306 = vmatprep.subr.bf16.mxu0 0
      %2307 = vmatpush1.bf16.msra.mxu0 0
      %2308 = vmatprep.subr.bf16.mxu0 0
      %2309 = vmatpush1.bf16.msra.mxu0 0
      %2310 = vmatprep.subr.bf16.mxu0 0
      %2311 = vmatpush1.bf16.msra.mxu0 0
      %2312 = vmatprep.subr.bf16.mxu0 0
      %2313 = vmatpush1.bf16.msra.mxu0 0
      %2314 = vmatprep.subr.bf16.mxu0 0
      %2315 = vmatpush1.bf16.msra.mxu0 0
      %2316 = vmatprep.subr.bf16.mxu0 0
      %2317 = vmatpush1.bf16.msra.mxu0 %v2300
      %2318 = vmatprep.subr.bf16.mxu0 0
      %2319 = vmatpush2.bf16.msra.mxu0 0
      %2320 = vmatprep.subr.bf16.mxu0 0
      %2321 = vmatpush2.bf16.msra.mxu0 0
      %2322 = vmatprep.subr.bf16.mxu0 0
      %2323 = vmatpush2.bf16.msra.mxu0 0
      %2324 = vmatprep.subr.bf16.mxu0 0
      %2325 = vmatpush2.bf16.msra.mxu0 0
      %2326 = vmatprep.subr.bf16.mxu0 0
      %2327 = vmatpush2.bf16.msra.mxu0 0
      %2328 = vmatprep.subr.bf16.mxu0 0
      %2329 = vmatpush2.bf16.msra.mxu0 0
      %2330 = vmatprep.subr.bf16.mxu0 0
      %2331 = vmatpush2.bf16.msra.mxu0 0
      %2332 = vmatprep.subr.bf16.mxu0 0
      %2333 = vmatpush2.bf16.msra.mxu0 0
      %2334 = vmatprep.mubr.bf16.mxu0 0
      %2335 = vmatmul.mubr.bf16.gmra.mxu0 %v2246
      %v2336 = vpop.f32.mrf.mxu0
      %v2337 = vadd.f32 0.0, %v2336
      %v2338 = vpop.f32.mrf.mxu0
      %v2339 = vpop.f32.mrf.mxu0
      %v2340 = vadd.f32 0.0, %v2339
      %v2341 = vpop.f32.mrf.mxu0
      %2342 = vmatprep.mubr.bf16.mxu0 0
      %2343 = vmatmul.mubr.bf16.gmra.mxu0 %v2249
      %v2344 = vpop.f32.mrf.mxu0
      %v2345 = vadd.f32 0.0, %v2344
      %v2346 = vpop.f32.mrf.mxu0
      %v2347 = vpop.f32.mrf.mxu0
      %v2348 = vadd.f32 0.0, %v2347
      %v2349 = vpop.f32.mrf.mxu0
      %2350 = vmatprep.mubr.bf16.mxu0 0
      %2351 = vmatmul.mubr.bf16.gmra.mxu0 %v2252
      %v2352 = vpop.f32.mrf.mxu0
      %v2353 = vadd.f32 0.0, %v2352
      %v2354 = vpop.f32.mrf.mxu0
      %v2355 = vpop.f32.mrf.mxu0
      %v2356 = vadd.f32 0.0, %v2355
      %v2357 = vpop.f32.mrf.mxu0
      %2358 = vmatprep.mubr.bf16.mxu0 0
      %2359 = vmatmul.mubr.bf16.gmra.mxu0 %v2255
      %v2360 = vpop.f32.mrf.mxu0
      %v2361 = vadd.f32 0.0, %v2360
      %v2362 = vpop.f32.mrf.mxu0
      %v2363 = vpop.f32.mrf.mxu0
      %v2364 = vadd.f32 0.0, %v2363
      %v2365 = vpop.f32.mrf.mxu0
      %2366 = vmatprep.mubr.bf16.mxu0 0
      %2367 = vmatmul.mubr.bf16.gmra.mxu0 %v2258
      %v2368 = vpop.f32.mrf.mxu0
      %v2369 = vadd.f32 0.0, %v2368
      %v2370 = vpop.f32.mrf.mxu0
      %v2371 = vpop.f32.mrf.mxu0
      %v2372 = vadd.f32 0.0, %v2371
      %v2373 = vpop.f32.mrf.mxu0
      %2374 = vmatprep.mubr.bf16.mxu0 0
      %2375 = vmatmul.mubr.bf16.gmra.mxu0 %v2261
      %v2376 = vpop.f32.mrf.mxu0
      %v2377 = vadd.f32 0.0, %v2376
      %v2378 = vpop.f32.mrf.mxu0
      %v2379 = vpop.f32.mrf.mxu0
      %v2380 = vadd.f32 0.0, %v2379
      %v2381 = vpop.f32.mrf.mxu0
      %2382 = vmatprep.mubr.bf16.mxu0 0
      %2383 = vmatmul.mubr.bf16.gmra.mxu0 %v2264
      %v2384 = vpop.f32.mrf.mxu0
      %v2385 = vadd.f32 0.0, %v2384
      %v2386 = vpop.f32.mrf.mxu0
      %v2387 = vpop.f32.mrf.mxu0
      %v2388 = vadd.f32 0.0, %v2387
      %v2389 = vpop.f32.mrf.mxu0
      %2390 = vmatprep.mubr.bf16.mxu0 0
      %2391 = vmatmul.mubr.bf16.gmra.mxu0 %v2267
      %v2392 = vpop.f32.mrf.mxu0
      %v2393 = vadd.f32 0.0, %v2392
      %v2394 = vpop.f32.mrf.mxu0
      %v2395 = vpop.f32.mrf.mxu0
      %v2396 = vadd.f32 0.0, %v2395
      %v2397 = vpop.f32.mrf.mxu0
      %2398 = vmatprep.mubr.bf16.mxu0 0
      %2399 = vmatmul.mubr.bf16.gmra.mxu0 %v2270
      %v2400 = vpop.f32.mrf.mxu0
      %v2401 = vadd.f32 0.0, %v2400
      %v2402 = vpop.f32.mrf.mxu0
      %v2403 = vpop.f32.mrf.mxu0
      %v2404 = vadd.f32 0.0, %v2403
      %v2405 = vpop.f32.mrf.mxu0
      %2406 = vmatprep.mubr.bf16.mxu0 0
      %2407 = vmatmul.mubr.bf16.gmra.mxu0 %v2273
      %v2408 = vpop.f32.mrf.mxu0
      %v2409 = vadd.f32 0.0, %v2408
      %v2410 = vpop.f32.mrf.mxu0
      %v2411 = vpop.f32.mrf.mxu0
      %v2412 = vadd.f32 0.0, %v2411
      %v2413 = vpop.f32.mrf.mxu0
      %2414 = vmatprep.mubr.bf16.mxu0 0
      %2415 = vmatmul.mubr.bf16.gmra.mxu0 %v2276
      %v2416 = vpop.f32.mrf.mxu0
      %v2417 = vadd.f32 0.0, %v2416
      %v2418 = vpop.f32.mrf.mxu0
      %v2419 = vpop.f32.mrf.mxu0
      %v2420 = vadd.f32 0.0, %v2419
      %v2421 = vpop.f32.mrf.mxu0
      %2422 = vmatprep.mubr.bf16.mxu0 0
      %2423 = vmatmul.mubr.bf16.gmra.mxu0 %v2279
      %v2424 = vpop.f32.mrf.mxu0
      %v2425 = vadd.f32 0.0, %v2424
      %v2426 = vpop.f32.mrf.mxu0
      %v2427 = vpop.f32.mrf.mxu0
      %v2428 = vadd.f32 0.0, %v2427
      %v2429 = vpop.f32.mrf.mxu0
      %2430 = vmatprep.mubr.bf16.mxu0 0
      %2431 = vmatmul.mubr.bf16.gmra.mxu0 %v2282
      %v2432 = vpop.f32.mrf.mxu0
      %v2433 = vadd.f32 0.0, %v2432
      %v2434 = vpop.f32.mrf.mxu0
      %v2435 = vpop.f32.mrf.mxu0
      %v2436 = vadd.f32 0.0, %v2435
      %v2437 = vpop.f32.mrf.mxu0
      %2438 = vmatprep.mubr.bf16.mxu0 0
      %2439 = vmatmul.mubr.bf16.gmra.mxu0 %v2285
      %v2440 = vpop.f32.mrf.mxu0
      %v2441 = vadd.f32 0.0, %v2440
      %v2442 = vpop.f32.mrf.mxu0
      %v2443 = vpop.f32.mrf.mxu0
      %v2444 = vadd.f32 0.0, %v2443
      %v2445 = vpop.f32.mrf.mxu0
      %2446 = vmatprep.mubr.bf16.mxu0 0
      %2447 = vmatmul.mubr.bf16.gmra.mxu0 %v2288
      %v2448 = vpop.f32.mrf.mxu0
      %v2449 = vadd.f32 0.0, %v2448
      %v2450 = vpop.f32.mrf.mxu0
      %v2451 = vpop.f32.mrf.mxu0
      %v2452 = vadd.f32 0.0, %v2451
      %v2453 = vpop.f32.mrf.mxu0
      %2454 = vmatprep.mubr.bf16.mxu0 0
      %2455 = vmatmul.mubr.bf16.gmra.mxu0 %v2291
      %v2456 = vpop.f32.mrf.mxu0
      %v2457 = vadd.f32 0.0, %v2456
      %v2458 = vpop.f32.mrf.mxu0
      %v2459 = vpop.f32.mrf.mxu0
      %v2460 = vadd.f32 0.0, %v2459
      %v2461 = vpop.f32.mrf.mxu0
      %2462 = vmatprep.mubr.bf16.mxu0 0
      %2463 = vmatmul.mubr.bf16.gmra.mxu0 %v2294
      %v2464 = vpop.f32.mrf.mxu0
      %v2465 = vadd.f32 0.0, %v2464
      %v2466 = vpop.f32.mrf.mxu0
      %v2467 = vpop.f32.mrf.mxu0
      %v2468 = vadd.f32 0.0, %v2467
      %v2469 = vpop.f32.mrf.mxu0
      %2470 = vmatprep.mubr.bf16.mxu0 0
      %2471 = vmatmul.mubr.bf16.gmra.mxu0 %v2297
      %v2472 = vpop.f32.mrf.mxu0
      %v2473 = vadd.f32 0.0, %v2472
      %v2474 = vpop.f32.mrf.mxu0
      %v2475 = vpop.f32.mrf.mxu0
      %v2476 = vadd.f32 0.0, %v2475
      %v2477 = vpop.f32.mrf.mxu0
      %2478 = vdwg.mxu0
      %v2479 = vadd.f32 %v2165, %v2337
      %v2480 = vadd.f32 %v2166, %v2340
      %v2481 = vadd.f32 %v2167, %v2345
      %v2482 = vadd.f32 %v2168, %v2348
      %v2483 = vadd.f32 %v2169, %v2353
      %v2484 = vadd.f32 %v2170, %v2356
      %v2485 = vadd.f32 %v2171, %v2361
      %v2486 = vadd.f32 %v2172, %v2364
      %v2487 = vadd.f32 %v2173, %v2369
      %v2488 = vadd.f32 %v2174, %v2372
      %v2489 = vadd.f32 %v2175, %v2377
      %v2490 = vadd.f32 %v2176, %v2380
      %v2491 = vadd.f32 %v2177, %v2385
      %v2492 = vadd.f32 %v2178, %v2388
      %v2493 = vadd.f32 %v2179, %v2393
      %v2494 = vadd.f32 %v2180, %v2396
      %v2495 = vadd.f32 %v2181, %v2401
      %v2496 = vadd.f32 %v2182, %v2404
      %v2497 = vadd.f32 %v2183, %v2409
      %v2498 = vadd.f32 %v2184, %v2412
      %v2499 = vadd.f32 %v2185, %v2417
      %v2500 = vadd.f32 %v2186, %v2420
      %v2501 = vadd.f32 %v2187, %v2425
      %v2502 = vadd.f32 %v2188, %v2428
      %v2503 = vadd.f32 %v2189, %v2433
      %v2504 = vadd.f32 %v2190, %v2436
      %v2505 = vadd.f32 %v2191, %v2441
      %v2506 = vadd.f32 %v2192, %v2444
      %v2507 = vadd.f32 %v2193, %v2449
      %v2508 = vadd.f32 %v2194, %v2452
      %v2509 = vadd.f32 %v2195, %v2457
      %v2510 = vadd.f32 %v2196, %v2460
      %v2511 = vadd.f32 %v2197, %v2465
      %v2512 = vadd.f32 %v2198, %v2468
      %v2513 = vadd.f32 %v2199, %v2473
      %v2514 = vadd.f32 %v2200, %v2476
      %v2515 = vld [vmem:[%s244 + $0x10] sm:$0xc]
      %v2516 = vld [vmem:[%s244 + $0x14] sm:$0xf]
      %v2517 = vld [vmem:[%s244 + $0x18] sm:$0xf]
      %v2518 = vld [vmem:[%s244 + $0x1c] sm:$0xf]
      %v2519 = vld [vmem:[%s244 + $0x20] sm:$0xf]
      %v2520 = vld [vmem:[%s244 + $0x24] sm:$0xf]
      %v2521 = vld [vmem:[%s244 + $0x28] sm:$0xf]
      %v2522 = vld [vmem:[%s244 + $0x2c] sm:$0xf]
      %v2523 = vld [vmem:[%s244 + $0x30] sm:$0xf]
      %v2524 = vld [vmem:[%s244 + $0x34] sm:$0xf]
      %v2525 = vld [vmem:[%s244 + $0x38] sm:$0xf]
      %v2526 = vld [vmem:[%s244 + $0x3c] sm:$0xf]
      %v2527 = vld [vmem:[%s244 + $0x40] sm:$0xf]
      %v2528 = vld [vmem:[%s244 + $0x44] sm:$0xf]
      %v2529 = vld [vmem:[%s244 + $0x48] sm:$0xf]
      %v2530 = vld [vmem:[%s244 + $0x4c] sm:$0xf]
      %v2531 = vld [vmem:[%s244 + $0x50] sm:$0xf]
      %v2532 = vld [vmem:[%s244 + $0x54] sm:$0xf]
      %v2533 = vld [vmem:[%s244 + $0x58] sm:$0xf]
      %v2534 = vld [vmem:[%s244 + $0x5c] sm:$0xf]
      %v2535 = vld [vmem:[%s244 + $0x60] sm:$0xf]
      %v2536 = vld [vmem:[%s244 + $0x64] sm:$0xf]
      %v2537 = vld [vmem:[%s244 + $0x68] sm:$0xf]
      %v2538 = vld [vmem:[%s244 + $0x6c] sm:$0xf]
      %v2539 = vld [vmem:[%s244 + $0x70] sm:$0xf]
      %v2540 = vld [vmem:[%s244 + $0x74] sm:$0xf]
      %v2541 = vld [vmem:[%s244 + $0x78] sm:$0xf]
      %v2542 = vld [vmem:[%s244 + $0x7c] sm:$0xf]
      %v2543 = vld [vmem:[%s244 + $0x80] sm:$0xf]
      %v2544 = vld [vmem:[%s244 + $0x84] sm:$0xf]
      %v2545 = vld [vmem:[%s244 + $0x88] sm:$0xf]
      %v2546 = vld [vmem:[%s244 + $0x8c] sm:$0xf]
      %v2547 = vld [vmem:[%s244 + $0x90] sm:$0xf]
      %v2548 = vld [vmem:[%s244 + $0x94] sm:$0xf]
      %v2549 = vld [vmem:[%s244 + $0x98] sm:$0xf]
      %v2550 = vld [vmem:[%s244 + $0x9c] sm:$0xf]
      %v2551 = vld [vmem:[%s244 + $0xa0] sm:$0x3]
      %s2552 = scalar_lea.vmem %s248, 12
      %v2553 = vld [vmem:[%s2552] sm:$0x3]
      %v2591 = vunpack.c.l.b16 %v2515
      %v2592 = vunpack.c.l.b16 %v2516
      %v2593 = vunpack.c.l.b16 %v2517
      %v2594 = vunpack.c.l.b16 %v2518
      %v2595 = vunpack.c.l.b16 %v2519
      %v2596 = vunpack.c.l.b16 %v2520
      %v2597 = vunpack.c.l.b16 %v2521
      %v2598 = vunpack.c.l.b16 %v2522
      %v2599 = vunpack.c.l.b16 %v2523
      %v2600 = vunpack.c.l.b16 %v2524
      %v2601 = vunpack.c.l.b16 %v2525
      %v2602 = vunpack.c.l.b16 %v2526
      %v2603 = vunpack.c.l.b16 %v2527
      %v2604 = vunpack.c.l.b16 %v2528
      %v2605 = vunpack.c.l.b16 %v2529
      %v2606 = vunpack.c.l.b16 %v2530
      %v2607 = vunpack.c.l.b16 %v2531
      %v2608 = vunpack.c.l.b16 %v2532
      %v2609 = vunpack.c.l.b16 %v2533
      %v2610 = vunpack.c.l.b16 %v2534
      %v2611 = vunpack.c.l.b16 %v2535
      %v2612 = vunpack.c.l.b16 %v2536
      %v2613 = vunpack.c.l.b16 %v2537
      %v2614 = vunpack.c.l.b16 %v2538
      %v2615 = vunpack.c.l.b16 %v2539
      %v2616 = vunpack.c.l.b16 %v2540
      %v2617 = vunpack.c.l.b16 %v2541
      %v2618 = vunpack.c.l.b16 %v2542
      %v2619 = vunpack.c.l.b16 %v2543
      %v2620 = vunpack.c.l.b16 %v2544
      %v2621 = vunpack.c.l.b16 %v2545
      %v2622 = vunpack.c.l.b16 %v2546
      %v2623 = vunpack.c.l.b16 %v2547
      %v2624 = vunpack.c.l.b16 %v2548
      %v2625 = vunpack.c.l.b16 %v2549
      %v2626 = vunpack.c.l.b16 %v2550
      %v2627 = vunpack.c.l.b16 %v2551
      %v2628 = vpack.c.b16 %v2592, %v2591
      %v2629 = vpack.c.b16 %v2594, %v2593
      %v2630 = vpack.c.b16 %v2596, %v2595
      %v2631 = vpack.c.b16 %v2598, %v2597
      %v2632 = vpack.c.b16 %v2600, %v2599
      %v2633 = vpack.c.b16 %v2602, %v2601
      %v2634 = vpack.c.b16 %v2604, %v2603
      %v2635 = vpack.c.b16 %v2606, %v2605
      %v2636 = vpack.c.b16 %v2608, %v2607
      %v2637 = vpack.c.b16 %v2610, %v2609
      %v2638 = vpack.c.b16 %v2612, %v2611
      %v2639 = vpack.c.b16 %v2614, %v2613
      %v2640 = vpack.c.b16 %v2616, %v2615
      %v2641 = vpack.c.b16 %v2618, %v2617
      %v2642 = vpack.c.b16 %v2620, %v2619
      %v2643 = vpack.c.b16 %v2622, %v2621
      %v2644 = vpack.c.b16 %v2624, %v2623
      %v2645 = vpack.c.b16 %v2626, %v2625
      %v2646 = vpack.c.b16 %v2627, %v2627
      %v2647 = vrot.slane %v2628, 2
      %v2648 = vrot.slane %v2629, 2
      %v2649 = vsel %vm2207, %v2647, %v2648
      %v2650 = vrot.slane %v2630, 2
      %v2651 = vsel %vm2207, %v2648, %v2650
      %v2652 = vrot.slane %v2631, 2
      %v2653 = vsel %vm2207, %v2650, %v2652
      %v2654 = vrot.slane %v2632, 2
      %v2655 = vsel %vm2207, %v2652, %v2654
      %v2656 = vrot.slane %v2633, 2
      %v2657 = vsel %vm2207, %v2654, %v2656
      %v2658 = vrot.slane %v2634, 2
      %v2659 = vsel %vm2207, %v2656, %v2658
      %v2660 = vrot.slane %v2635, 2
      %v2661 = vsel %vm2207, %v2658, %v2660
      %v2662 = vrot.slane %v2636, 2
      %v2663 = vsel %vm2207, %v2660, %v2662
      %v2664 = vrot.slane %v2637, 2
      %v2665 = vsel %vm2207, %v2662, %v2664
      %v2666 = vrot.slane %v2638, 2
      %v2667 = vsel %vm2207, %v2664, %v2666
      %v2668 = vrot.slane %v2639, 2
      %v2669 = vsel %vm2207, %v2666, %v2668
      %v2670 = vrot.slane %v2640, 2
      %v2671 = vsel %vm2207, %v2668, %v2670
      %v2672 = vrot.slane %v2641, 2
      %v2673 = vsel %vm2207, %v2670, %v2672
      %v2674 = vrot.slane %v2642, 2
      %v2675 = vsel %vm2207, %v2672, %v2674
      %v2676 = vrot.slane %v2643, 2
      %v2677 = vsel %vm2207, %v2674, %v2676
      %v2678 = vrot.slane %v2644, 2
      %v2679 = vsel %vm2207, %v2676, %v2678
      %v2680 = vrot.slane %v2645, 2
      %v2681 = vsel %vm2207, %v2678, %v2680
      %v2682 = vrot.slane %v2646, 2
      %v2683 = vsel %vm2207, %v2680, %v2682
      %v2685 = vsel %vm546, %v2649, 0
      %v2688 = vsel %vm546, %v2651, 0
      %v2691 = vsel %vm546, %v2653, 0
      %v2694 = vsel %vm546, %v2655, 0
      %v2697 = vsel %vm546, %v2657, 0
      %v2700 = vsel %vm546, %v2659, 0
      %v2703 = vsel %vm546, %v2661, 0
      %v2706 = vsel %vm546, %v2663, 0
      %v2709 = vsel %vm546, %v2665, 0
      %v2712 = vsel %vm546, %v2667, 0
      %v2715 = vsel %vm546, %v2669, 0
      %v2718 = vsel %vm546, %v2671, 0
      %v2721 = vsel %vm546, %v2673, 0
      %v2724 = vsel %vm546, %v2675, 0
      %v2727 = vsel %vm546, %v2677, 0
      %v2730 = vsel %vm546, %v2679, 0
      %v2733 = vsel %vm546, %v2681, 0
      %v2736 = vsel %vm546, %v2683, 0
      %v2739 = vand.u32 %v2553, %v604
      %2741 = vmatprep.subr.bf16.mxu0 0
      %2742 = vmatpush1.bf16.msra.mxu0 0
      %2743 = vmatprep.subr.bf16.mxu0 0
      %2744 = vmatpush1.bf16.msra.mxu0 0
      %2745 = vmatprep.subr.bf16.mxu0 0
      %2746 = vmatpush1.bf16.msra.mxu0 0
      %2747 = vmatprep.subr.bf16.mxu0 0
      %2748 = vmatpush1.bf16.msra.mxu0 0
      %2749 = vmatprep.subr.bf16.mxu0 0
      %2750 = vmatpush1.bf16.msra.mxu0 0
      %2751 = vmatprep.subr.bf16.mxu0 0
      %2752 = vmatpush1.bf16.msra.mxu0 0
      %2753 = vmatprep.subr.bf16.mxu0 0
      %2754 = vmatpush1.bf16.msra.mxu0 0
      %2755 = vmatprep.subr.bf16.mxu0 0
      %2756 = vmatpush1.bf16.msra.mxu0 %v2739
      %2757 = vmatprep.subr.bf16.mxu0 0
      %2758 = vmatpush2.bf16.msra.mxu0 0
      %2759 = vmatprep.subr.bf16.mxu0 0
      %2760 = vmatpush2.bf16.msra.mxu0 0
      %2761 = vmatprep.subr.bf16.mxu0 0
      %2762 = vmatpush2.bf16.msra.mxu0 0
      %2763 = vmatprep.subr.bf16.mxu0 0
      %2764 = vmatpush2.bf16.msra.mxu0 0
      %2765 = vmatprep.subr.bf16.mxu0 0
      %2766 = vmatpush2.bf16.msra.mxu0 0
      %2767 = vmatprep.subr.bf16.mxu0 0
      %2768 = vmatpush2.bf16.msra.mxu0 0
      %2769 = vmatprep.subr.bf16.mxu0 0
      %2770 = vmatpush2.bf16.msra.mxu0 0
      %2771 = vmatprep.subr.bf16.mxu0 0
      %2772 = vmatpush2.bf16.msra.mxu0 0
      %2773 = vmatprep.mubr.bf16.mxu0 0
      %2774 = vmatmul.mubr.bf16.gmra.mxu0 %v2685
      %v2775 = vpop.f32.mrf.mxu0
      %v2776 = vadd.f32 0.0, %v2775
      %v2777 = vpop.f32.mrf.mxu0
      %v2778 = vpop.f32.mrf.mxu0
      %v2779 = vadd.f32 0.0, %v2778
      %v2780 = vpop.f32.mrf.mxu0
      %2781 = vmatprep.mubr.bf16.mxu0 0
      %2782 = vmatmul.mubr.bf16.gmra.mxu0 %v2688
      %v2783 = vpop.f32.mrf.mxu0
      %v2784 = vadd.f32 0.0, %v2783
      %v2785 = vpop.f32.mrf.mxu0
      %v2786 = vpop.f32.mrf.mxu0
      %v2787 = vadd.f32 0.0, %v2786
      %v2788 = vpop.f32.mrf.mxu0
      %2789 = vmatprep.mubr.bf16.mxu0 0
      %2790 = vmatmul.mubr.bf16.gmra.mxu0 %v2691
      %v2791 = vpop.f32.mrf.mxu0
      %v2792 = vadd.f32 0.0, %v2791
      %v2793 = vpop.f32.mrf.mxu0
      %v2794 = vpop.f32.mrf.mxu0
      %v2795 = vadd.f32 0.0, %v2794
      %v2796 = vpop.f32.mrf.mxu0
      %2797 = vmatprep.mubr.bf16.mxu0 0
      %2798 = vmatmul.mubr.bf16.gmra.mxu0 %v2694
      %v2799 = vpop.f32.mrf.mxu0
      %v2800 = vadd.f32 0.0, %v2799
      %v2801 = vpop.f32.mrf.mxu0
      %v2802 = vpop.f32.mrf.mxu0
      %v2803 = vadd.f32 0.0, %v2802
      %v2804 = vpop.f32.mrf.mxu0
      %2805 = vmatprep.mubr.bf16.mxu0 0
      %2806 = vmatmul.mubr.bf16.gmra.mxu0 %v2697
      %v2807 = vpop.f32.mrf.mxu0
      %v2808 = vadd.f32 0.0, %v2807
      %v2809 = vpop.f32.mrf.mxu0
      %v2810 = vpop.f32.mrf.mxu0
      %v2811 = vadd.f32 0.0, %v2810
      %v2812 = vpop.f32.mrf.mxu0
      %2813 = vmatprep.mubr.bf16.mxu0 0
      %2814 = vmatmul.mubr.bf16.gmra.mxu0 %v2700
      %v2815 = vpop.f32.mrf.mxu0
      %v2816 = vadd.f32 0.0, %v2815
      %v2817 = vpop.f32.mrf.mxu0
      %v2818 = vpop.f32.mrf.mxu0
      %v2819 = vadd.f32 0.0, %v2818
      %v2820 = vpop.f32.mrf.mxu0
      %2821 = vmatprep.mubr.bf16.mxu0 0
      %2822 = vmatmul.mubr.bf16.gmra.mxu0 %v2703
      %v2823 = vpop.f32.mrf.mxu0
      %v2824 = vadd.f32 0.0, %v2823
      %v2825 = vpop.f32.mrf.mxu0
      %v2826 = vpop.f32.mrf.mxu0
      %v2827 = vadd.f32 0.0, %v2826
      %v2828 = vpop.f32.mrf.mxu0
      %2829 = vmatprep.mubr.bf16.mxu0 0
      %2830 = vmatmul.mubr.bf16.gmra.mxu0 %v2706
      %v2831 = vpop.f32.mrf.mxu0
      %v2832 = vadd.f32 0.0, %v2831
      %v2833 = vpop.f32.mrf.mxu0
      %v2834 = vpop.f32.mrf.mxu0
      %v2835 = vadd.f32 0.0, %v2834
      %v2836 = vpop.f32.mrf.mxu0
      %2837 = vmatprep.mubr.bf16.mxu0 0
      %2838 = vmatmul.mubr.bf16.gmra.mxu0 %v2709
      %v2839 = vpop.f32.mrf.mxu0
      %v2840 = vadd.f32 0.0, %v2839
      %v2841 = vpop.f32.mrf.mxu0
      %v2842 = vpop.f32.mrf.mxu0
      %v2843 = vadd.f32 0.0, %v2842
      %v2844 = vpop.f32.mrf.mxu0
      %2845 = vmatprep.mubr.bf16.mxu0 0
      %2846 = vmatmul.mubr.bf16.gmra.mxu0 %v2712
      %v2847 = vpop.f32.mrf.mxu0
      %v2848 = vadd.f32 0.0, %v2847
      %v2849 = vpop.f32.mrf.mxu0
      %v2850 = vpop.f32.mrf.mxu0
      %v2851 = vadd.f32 0.0, %v2850
      %v2852 = vpop.f32.mrf.mxu0
      %2853 = vmatprep.mubr.bf16.mxu0 0
      %2854 = vmatmul.mubr.bf16.gmra.mxu0 %v2715
      %v2855 = vpop.f32.mrf.mxu0
      %v2856 = vadd.f32 0.0, %v2855
      %v2857 = vpop.f32.mrf.mxu0
      %v2858 = vpop.f32.mrf.mxu0
      %v2859 = vadd.f32 0.0, %v2858
      %v2860 = vpop.f32.mrf.mxu0
      %2861 = vmatprep.mubr.bf16.mxu0 0
      %2862 = vmatmul.mubr.bf16.gmra.mxu0 %v2718
      %v2863 = vpop.f32.mrf.mxu0
      %v2864 = vadd.f32 0.0, %v2863
      %v2865 = vpop.f32.mrf.mxu0
      %v2866 = vpop.f32.mrf.mxu0
      %v2867 = vadd.f32 0.0, %v2866
      %v2868 = vpop.f32.mrf.mxu0
      %2869 = vmatprep.mubr.bf16.mxu0 0
      %2870 = vmatmul.mubr.bf16.gmra.mxu0 %v2721
      %v2871 = vpop.f32.mrf.mxu0
      %v2872 = vadd.f32 0.0, %v2871
      %v2873 = vpop.f32.mrf.mxu0
      %v2874 = vpop.f32.mrf.mxu0
      %v2875 = vadd.f32 0.0, %v2874
      %v2876 = vpop.f32.mrf.mxu0
      %2877 = vmatprep.mubr.bf16.mxu0 0
      %2878 = vmatmul.mubr.bf16.gmra.mxu0 %v2724
      %v2879 = vpop.f32.mrf.mxu0
      %v2880 = vadd.f32 0.0, %v2879
      %v2881 = vpop.f32.mrf.mxu0
      %v2882 = vpop.f32.mrf.mxu0
      %v2883 = vadd.f32 0.0, %v2882
      %v2884 = vpop.f32.mrf.mxu0
      %2885 = vmatprep.mubr.bf16.mxu0 0
      %2886 = vmatmul.mubr.bf16.gmra.mxu0 %v2727
      %v2887 = vpop.f32.mrf.mxu0
      %v2888 = vadd.f32 0.0, %v2887
      %v2889 = vpop.f32.mrf.mxu0
      %v2890 = vpop.f32.mrf.mxu0
      %v2891 = vadd.f32 0.0, %v2890
      %v2892 = vpop.f32.mrf.mxu0
      %2893 = vmatprep.mubr.bf16.mxu0 0
      %2894 = vmatmul.mubr.bf16.gmra.mxu0 %v2730
      %v2895 = vpop.f32.mrf.mxu0
      %v2896 = vadd.f32 0.0, %v2895
      %v2897 = vpop.f32.mrf.mxu0
      %v2898 = vpop.f32.mrf.mxu0
      %v2899 = vadd.f32 0.0, %v2898
      %v2900 = vpop.f32.mrf.mxu0
      %2901 = vmatprep.mubr.bf16.mxu0 0
      %2902 = vmatmul.mubr.bf16.gmra.mxu0 %v2733
      %v2903 = vpop.f32.mrf.mxu0
      %v2904 = vadd.f32 0.0, %v2903
      %v2905 = vpop.f32.mrf.mxu0
      %v2906 = vpop.f32.mrf.mxu0
      %v2907 = vadd.f32 0.0, %v2906
      %v2908 = vpop.f32.mrf.mxu0
      %2909 = vmatprep.mubr.bf16.mxu0 0
      %2910 = vmatmul.mubr.bf16.gmra.mxu0 %v2736
      %v2911 = vpop.f32.mrf.mxu0
      %v2912 = vadd.f32 0.0, %v2911
      %v2913 = vpop.f32.mrf.mxu0
      %v2914 = vpop.f32.mrf.mxu0
      %v2915 = vadd.f32 0.0, %v2914
      %v2916 = vpop.f32.mrf.mxu0
      %2917 = vdwg.mxu0
      %v2918 = vadd.f32 %v2479, %v2776
      %v2919 = vadd.f32 %v2480, %v2779
      %v2920 = vadd.f32 %v2481, %v2784
      %v2921 = vadd.f32 %v2482, %v2787
      %v2922 = vadd.f32 %v2483, %v2792
      %v2923 = vadd.f32 %v2484, %v2795
      %v2924 = vadd.f32 %v2485, %v2800
      %v2925 = vadd.f32 %v2486, %v2803
      %v2926 = vadd.f32 %v2487, %v2808
      %v2927 = vadd.f32 %v2488, %v2811
      %v2928 = vadd.f32 %v2489, %v2816
      %v2929 = vadd.f32 %v2490, %v2819
      %v2930 = vadd.f32 %v2491, %v2824
      %v2931 = vadd.f32 %v2492, %v2827
      %v2932 = vadd.f32 %v2493, %v2832
      %v2933 = vadd.f32 %v2494, %v2835
      %v2934 = vadd.f32 %v2495, %v2840
      %v2935 = vadd.f32 %v2496, %v2843
      %v2936 = vadd.f32 %v2497, %v2848
      %v2937 = vadd.f32 %v2498, %v2851
      %v2938 = vadd.f32 %v2499, %v2856
      %v2939 = vadd.f32 %v2500, %v2859
      %v2940 = vadd.f32 %v2501, %v2864
      %v2941 = vadd.f32 %v2502, %v2867
      %v2942 = vadd.f32 %v2503, %v2872
      %v2943 = vadd.f32 %v2504, %v2875
      %v2944 = vadd.f32 %v2505, %v2880
      %v2945 = vadd.f32 %v2506, %v2883
      %v2946 = vadd.f32 %v2507, %v2888
      %v2947 = vadd.f32 %v2508, %v2891
      %v2948 = vadd.f32 %v2509, %v2896
      %v2949 = vadd.f32 %v2510, %v2899
      %v2950 = vadd.f32 %v2511, %v2904
      %v2951 = vadd.f32 %v2512, %v2907
      %v2952 = vadd.f32 %v2513, %v2912
      %v2953 = vadd.f32 %v2514, %v2915
      %v2954 = vld [vmem:[%s244 + $0xa0] sm:$0x7]
      %s2955 = scalar_lea.vmem %s248, 14
      %v2956 = vld [vmem:[%s2955] sm:$0x3]
      %v2958 = vunpack.c.l.b16 %v2954
      %v2959 = vpack.c.b16 %v2958, %v2958
      %vm2960 = vsmask.f32 5376
      %v2962 = vshrl.u32 %v2628, 16
      %v2964 = vrot.slane %v2962, 2
      %v2965 = vshll.u32 %v2628, 16
      %v2967 = vrot.slane %v2965, 3
      %v2968 = vor.u32 %v2964, %v2967
      %v2970 = vshrl.u32 %v2629, 16
      %v2972 = vrot.slane %v2970, 2
      %v2973 = vshll.u32 %v2629, 16
      %v2975 = vrot.slane %v2973, 3
      %v2976 = vor.u32 %v2972, %v2975
      %v2977 = vsel %vm2960, %v2968, %v2976
      %v2979 = vshrl.u32 %v2630, 16
      %v2981 = vrot.slane %v2979, 2
      %v2982 = vshll.u32 %v2630, 16
      %v2984 = vrot.slane %v2982, 3
      %v2985 = vor.u32 %v2981, %v2984
      %v2986 = vsel %vm2960, %v2976, %v2985
      %v2988 = vshrl.u32 %v2631, 16
      %v2990 = vrot.slane %v2988, 2
      %v2991 = vshll.u32 %v2631, 16
      %v2993 = vrot.slane %v2991, 3
      %v2994 = vor.u32 %v2990, %v2993
      %v2995 = vsel %vm2960, %v2985, %v2994
      %v2997 = vshrl.u32 %v2632, 16
      %v2999 = vrot.slane %v2997, 2
      %v3000 = vshll.u32 %v2632, 16
      %v3002 = vrot.slane %v3000, 3
      %v3003 = vor.u32 %v2999, %v3002
      %v3004 = vsel %vm2960, %v2994, %v3003
      %v3006 = vshrl.u32 %v2633, 16
      %v3008 = vrot.slane %v3006, 2
      %v3009 = vshll.u32 %v2633, 16
      %v3011 = vrot.slane %v3009, 3
      %v3012 = vor.u32 %v3008, %v3011
      %v3013 = vsel %vm2960, %v3003, %v3012
      %v3015 = vshrl.u32 %v2634, 16
      %v3017 = vrot.slane %v3015, 2
      %v3018 = vshll.u32 %v2634, 16
      %v3020 = vrot.slane %v3018, 3
      %v3021 = vor.u32 %v3017, %v3020
      %v3022 = vsel %vm2960, %v3012, %v3021
      %v3024 = vshrl.u32 %v2635, 16
      %v3026 = vrot.slane %v3024, 2
      %v3027 = vshll.u32 %v2635, 16
      %v3029 = vrot.slane %v3027, 3
      %v3030 = vor.u32 %v3026, %v3029
      %v3031 = vsel %vm2960, %v3021, %v3030
      %v3033 = vshrl.u32 %v2636, 16
      %v3035 = vrot.slane %v3033, 2
      %v3036 = vshll.u32 %v2636, 16
      %v3038 = vrot.slane %v3036, 3
      %v3039 = vor.u32 %v3035, %v3038
      %v3040 = vsel %vm2960, %v3030, %v3039
      %v3042 = vshrl.u32 %v2637, 16
      %v3044 = vrot.slane %v3042, 2
      %v3045 = vshll.u32 %v2637, 16
      %v3047 = vrot.slane %v3045, 3
      %v3048 = vor.u32 %v3044, %v3047
      %v3049 = vsel %vm2960, %v3039, %v3048
      %v3051 = vshrl.u32 %v2638, 16
      %v3053 = vrot.slane %v3051, 2
      %v3054 = vshll.u32 %v2638, 16
      %v3056 = vrot.slane %v3054, 3
      %v3057 = vor.u32 %v3053, %v3056
      %v3058 = vsel %vm2960, %v3048, %v3057
      %v3060 = vshrl.u32 %v2639, 16
      %v3062 = vrot.slane %v3060, 2
      %v3063 = vshll.u32 %v2639, 16
      %v3065 = vrot.slane %v3063, 3
      %v3066 = vor.u32 %v3062, %v3065
      %v3067 = vsel %vm2960, %v3057, %v3066
      %v3069 = vshrl.u32 %v2640, 16
      %v3071 = vrot.slane %v3069, 2
      %v3072 = vshll.u32 %v2640, 16
      %v3074 = vrot.slane %v3072, 3
      %v3075 = vor.u32 %v3071, %v3074
      %v3076 = vsel %vm2960, %v3066, %v3075
      %v3078 = vshrl.u32 %v2641, 16
      %v3080 = vrot.slane %v3078, 2
      %v3081 = vshll.u32 %v2641, 16
      %v3083 = vrot.slane %v3081, 3
      %v3084 = vor.u32 %v3080, %v3083
      %v3085 = vsel %vm2960, %v3075, %v3084
      %v3087 = vshrl.u32 %v2642, 16
      %v3089 = vrot.slane %v3087, 2
      %v3090 = vshll.u32 %v2642, 16
      %v3092 = vrot.slane %v3090, 3
      %v3093 = vor.u32 %v3089, %v3092
      %v3094 = vsel %vm2960, %v3084, %v3093
      %v3096 = vshrl.u32 %v2643, 16
      %v3098 = vrot.slane %v3096, 2
      %v3099 = vshll.u32 %v2643, 16
      %v3101 = vrot.slane %v3099, 3
      %v3102 = vor.u32 %v3098, %v3101
      %v3103 = vsel %vm2960, %v3093, %v3102
      %v3105 = vshrl.u32 %v2644, 16
      %v3107 = vrot.slane %v3105, 2
      %v3108 = vshll.u32 %v2644, 16
      %v3110 = vrot.slane %v3108, 3
      %v3111 = vor.u32 %v3107, %v3110
      %v3112 = vsel %vm2960, %v3102, %v3111
      %v3114 = vshrl.u32 %v2645, 16
      %v3116 = vrot.slane %v3114, 2
      %v3117 = vshll.u32 %v2645, 16
      %v3119 = vrot.slane %v3117, 3
      %v3120 = vor.u32 %v3116, %v3119
      %v3121 = vsel %vm2960, %v3111, %v3120
      %v3123 = vshrl.u32 %v2959, 16
      %v3125 = vrot.slane %v3123, 2
      %v3126 = vshll.u32 %v2959, 16
      %v3128 = vrot.slane %v3126, 3
      %v3129 = vor.u32 %v3125, %v3128
      %v3130 = vsel %vm2960, %v3120, %v3129
      %v3132 = vsel %vm546, %v2977, 0
      %v3135 = vsel %vm546, %v2986, 0
      %v3138 = vsel %vm546, %v2995, 0
      %v3141 = vsel %vm546, %v3004, 0
      %v3144 = vsel %vm546, %v3013, 0
      %v3147 = vsel %vm546, %v3022, 0
      %v3150 = vsel %vm546, %v3031, 0
      %v3153 = vsel %vm546, %v3040, 0
      %v3156 = vsel %vm546, %v3049, 0
      %v3159 = vsel %vm546, %v3058, 0
      %v3162 = vsel %vm546, %v3067, 0
      %v3165 = vsel %vm546, %v3076, 0
      %v3168 = vsel %vm546, %v3085, 0
      %v3171 = vsel %vm546, %v3094, 0
      %v3174 = vsel %vm546, %v3103, 0
      %v3177 = vsel %vm546, %v3112, 0
      %v3180 = vsel %vm546, %v3121, 0
      %v3183 = vsel %vm546, %v3130, 0
      %v3186 = vand.u32 %v2956, %v604
      %3188 = vmatprep.subr.bf16.mxu0 0
      %3189 = vmatpush1.bf16.msra.mxu0 0
      %3190 = vmatprep.subr.bf16.mxu0 0
      %3191 = vmatpush1.bf16.msra.mxu0 0
      %3192 = vmatprep.subr.bf16.mxu0 0
      %3193 = vmatpush1.bf16.msra.mxu0 0
      %3194 = vmatprep.subr.bf16.mxu0 0
      %3195 = vmatpush1.bf16.msra.mxu0 0
      %3196 = vmatprep.subr.bf16.mxu0 0
      %3197 = vmatpush1.bf16.msra.mxu0 0
      %3198 = vmatprep.subr.bf16.mxu0 0
      %3199 = vmatpush1.bf16.msra.mxu0 0
      %3200 = vmatprep.subr.bf16.mxu0 0
      %3201 = vmatpush1.bf16.msra.mxu0 0
      %3202 = vmatprep.subr.bf16.mxu0 0
      %3203 = vmatpush1.bf16.msra.mxu0 %v3186
      %3204 = vmatprep.subr.bf16.mxu0 0
      %3205 = vmatpush2.bf16.msra.mxu0 0
      %3206 = vmatprep.subr.bf16.mxu0 0
      %3207 = vmatpush2.bf16.msra.mxu0 0
      %3208 = vmatprep.subr.bf16.mxu0 0
      %3209 = vmatpush2.bf16.msra.mxu0 0
      %3210 = vmatprep.subr.bf16.mxu0 0
      %3211 = vmatpush2.bf16.msra.mxu0 0
      %3212 = vmatprep.subr.bf16.mxu0 0
      %3213 = vmatpush2.bf16.msra.mxu0 0
      %3214 = vmatprep.subr.bf16.mxu0 0
      %3215 = vmatpush2.bf16.msra.mxu0 0
      %3216 = vmatprep.subr.bf16.mxu0 0
      %3217 = vmatpush2.bf16.msra.mxu0 0
      %3218 = vmatprep.subr.bf16.mxu0 0
      %3219 = vmatpush2.bf16.msra.mxu0 0
      %3220 = vmatprep.mubr.bf16.mxu0 0
      %3221 = vmatmul.mubr.bf16.gmra.mxu0 %v3132
      %v3222 = vpop.f32.mrf.mxu0
      %v3223 = vadd.f32 0.0, %v3222
      %v3224 = vpop.f32.mrf.mxu0
      %v3225 = vpop.f32.mrf.mxu0
      %v3226 = vadd.f32 0.0, %v3225
      %v3227 = vpop.f32.mrf.mxu0
      %3228 = vmatprep.mubr.bf16.mxu0 0
      %3229 = vmatmul.mubr.bf16.gmra.mxu0 %v3135
      %v3230 = vpop.f32.mrf.mxu0
      %v3231 = vadd.f32 0.0, %v3230
      %v3232 = vpop.f32.mrf.mxu0
      %v3233 = vpop.f32.mrf.mxu0
      %v3234 = vadd.f32 0.0, %v3233
      %v3235 = vpop.f32.mrf.mxu0
      %3236 = vmatprep.mubr.bf16.mxu0 0
      %3237 = vmatmul.mubr.bf16.gmra.mxu0 %v3138
      %v3238 = vpop.f32.mrf.mxu0
      %v3239 = vadd.f32 0.0, %v3238
      %v3240 = vpop.f32.mrf.mxu0
      %v3241 = vpop.f32.mrf.mxu0
      %v3242 = vadd.f32 0.0, %v3241
      %v3243 = vpop.f32.mrf.mxu0
      %3244 = vmatprep.mubr.bf16.mxu0 0
      %3245 = vmatmul.mubr.bf16.gmra.mxu0 %v3141
      %v3246 = vpop.f32.mrf.mxu0
      %v3247 = vadd.f32 0.0, %v3246
      %v3248 = vpop.f32.mrf.mxu0
      %v3249 = vpop.f32.mrf.mxu0
      %v3250 = vadd.f32 0.0, %v3249
      %v3251 = vpop.f32.mrf.mxu0
      %3252 = vmatprep.mubr.bf16.mxu0 0
      %3253 = vmatmul.mubr.bf16.gmra.mxu0 %v3144
      %v3254 = vpop.f32.mrf.mxu0
      %v3255 = vadd.f32 0.0, %v3254
      %v3256 = vpop.f32.mrf.mxu0
      %v3257 = vpop.f32.mrf.mxu0
      %v3258 = vadd.f32 0.0, %v3257
      %v3259 = vpop.f32.mrf.mxu0
      %3260 = vmatprep.mubr.bf16.mxu0 0
      %3261 = vmatmul.mubr.bf16.gmra.mxu0 %v3147
      %v3262 = vpop.f32.mrf.mxu0
      %v3263 = vadd.f32 0.0, %v3262
      %v3264 = vpop.f32.mrf.mxu0
      %v3265 = vpop.f32.mrf.mxu0
      %v3266 = vadd.f32 0.0, %v3265
      %v3267 = vpop.f32.mrf.mxu0
      %3268 = vmatprep.mubr.bf16.mxu0 0
      %3269 = vmatmul.mubr.bf16.gmra.mxu0 %v3150
      %v3270 = vpop.f32.mrf.mxu0
      %v3271 = vadd.f32 0.0, %v3270
      %v3272 = vpop.f32.mrf.mxu0
      %v3273 = vpop.f32.mrf.mxu0
      %v3274 = vadd.f32 0.0, %v3273
      %v3275 = vpop.f32.mrf.mxu0
      %3276 = vmatprep.mubr.bf16.mxu0 0
      %3277 = vmatmul.mubr.bf16.gmra.mxu0 %v3153
      %v3278 = vpop.f32.mrf.mxu0
      %v3279 = vadd.f32 0.0, %v3278
      %v3280 = vpop.f32.mrf.mxu0
      %v3281 = vpop.f32.mrf.mxu0
      %v3282 = vadd.f32 0.0, %v3281
      %v3283 = vpop.f32.mrf.mxu0
      %3284 = vmatprep.mubr.bf16.mxu0 0
      %3285 = vmatmul.mubr.bf16.gmra.mxu0 %v3156
      %v3286 = vpop.f32.mrf.mxu0
      %v3287 = vadd.f32 0.0, %v3286
      %v3288 = vpop.f32.mrf.mxu0
      %v3289 = vpop.f32.mrf.mxu0
      %v3290 = vadd.f32 0.0, %v3289
      %v3291 = vpop.f32.mrf.mxu0
      %3292 = vmatprep.mubr.bf16.mxu0 0
      %3293 = vmatmul.mubr.bf16.gmra.mxu0 %v3159
      %v3294 = vpop.f32.mrf.mxu0
      %v3295 = vadd.f32 0.0, %v3294
      %v3296 = vpop.f32.mrf.mxu0
      %v3297 = vpop.f32.mrf.mxu0
      %v3298 = vadd.f32 0.0, %v3297
      %v3299 = vpop.f32.mrf.mxu0
      %3300 = vmatprep.mubr.bf16.mxu0 0
      %3301 = vmatmul.mubr.bf16.gmra.mxu0 %v3162
      %v3302 = vpop.f32.mrf.mxu0
      %v3303 = vadd.f32 0.0, %v3302
      %v3304 = vpop.f32.mrf.mxu0
      %v3305 = vpop.f32.mrf.mxu0
      %v3306 = vadd.f32 0.0, %v3305
      %v3307 = vpop.f32.mrf.mxu0
      %3308 = vmatprep.mubr.bf16.mxu0 0
      %3309 = vmatmul.mubr.bf16.gmra.mxu0 %v3165
      %v3310 = vpop.f32.mrf.mxu0
      %v3311 = vadd.f32 0.0, %v3310
      %v3312 = vpop.f32.mrf.mxu0
      %v3313 = vpop.f32.mrf.mxu0
      %v3314 = vadd.f32 0.0, %v3313
      %v3315 = vpop.f32.mrf.mxu0
      %3316 = vmatprep.mubr.bf16.mxu0 0
      %3317 = vmatmul.mubr.bf16.gmra.mxu0 %v3168
      %v3318 = vpop.f32.mrf.mxu0
      %v3319 = vadd.f32 0.0, %v3318
      %v3320 = vpop.f32.mrf.mxu0
      %v3321 = vpop.f32.mrf.mxu0
      %v3322 = vadd.f32 0.0, %v3321
      %v3323 = vpop.f32.mrf.mxu0
      %3324 = vmatprep.mubr.bf16.mxu0 0
      %3325 = vmatmul.mubr.bf16.gmra.mxu0 %v3171
      %v3326 = vpop.f32.mrf.mxu0
      %v3327 = vadd.f32 0.0, %v3326
      %v3328 = vpop.f32.mrf.mxu0
      %v3329 = vpop.f32.mrf.mxu0
      %v3330 = vadd.f32 0.0, %v3329
      %v3331 = vpop.f32.mrf.mxu0
      %3332 = vmatprep.mubr.bf16.mxu0 0
      %3333 = vmatmul.mubr.bf16.gmra.mxu0 %v3174
      %v3334 = vpop.f32.mrf.mxu0
      %v3335 = vadd.f32 0.0, %v3334
      %v3336 = vpop.f32.mrf.mxu0
      %v3337 = vpop.f32.mrf.mxu0
      %v3338 = vadd.f32 0.0, %v3337
      %v3339 = vpop.f32.mrf.mxu0
      %3340 = vmatprep.mubr.bf16.mxu0 0
      %3341 = vmatmul.mubr.bf16.gmra.mxu0 %v3177
      %v3342 = vpop.f32.mrf.mxu0
      %v3343 = vadd.f32 0.0, %v3342
      %v3344 = vpop.f32.mrf.mxu0
      %v3345 = vpop.f32.mrf.mxu0
      %v3346 = vadd.f32 0.0, %v3345
      %v3347 = vpop.f32.mrf.mxu0
      %3348 = vmatprep.mubr.bf16.mxu0 0
      %3349 = vmatmul.mubr.bf16.gmra.mxu0 %v3180
      %v3350 = vpop.f32.mrf.mxu0
      %v3351 = vadd.f32 0.0, %v3350
      %v3352 = vpop.f32.mrf.mxu0
      %v3353 = vpop.f32.mrf.mxu0
      %v3354 = vadd.f32 0.0, %v3353
      %v3355 = vpop.f32.mrf.mxu0
      %3356 = vmatprep.mubr.bf16.mxu0 0
      %3357 = vmatmul.mubr.bf16.gmra.mxu0 %v3183
      %v3358 = vpop.f32.mrf.mxu0
      %v3359 = vadd.f32 0.0, %v3358
      %v3360 = vpop.f32.mrf.mxu0
      %v3361 = vpop.f32.mrf.mxu0
      %v3362 = vadd.f32 0.0, %v3361
      %v3363 = vpop.f32.mrf.mxu0
      %3364 = vdwg.mxu0
      %v3365 = vadd.f32 %v2918, %v3223
      %v3366 = vadd.f32 %v2919, %v3226
      %v3367 = vadd.f32 %v2920, %v3231
      %v3368 = vadd.f32 %v2921, %v3234
      %v3369 = vadd.f32 %v2922, %v3239
      %v3370 = vadd.f32 %v2923, %v3242
      %v3371 = vadd.f32 %v2924, %v3247
      %v3372 = vadd.f32 %v2925, %v3250
      %v3373 = vadd.f32 %v2926, %v3255
      %v3374 = vadd.f32 %v2927, %v3258
      %v3375 = vadd.f32 %v2928, %v3263
      %v3376 = vadd.f32 %v2929, %v3266
      %v3377 = vadd.f32 %v2930, %v3271
      %v3378 = vadd.f32 %v2931, %v3274
      %v3379 = vadd.f32 %v2932, %v3279
      %v3380 = vadd.f32 %v2933, %v3282
      %v3381 = vadd.f32 %v2934, %v3287
      %v3382 = vadd.f32 %v2935, %v3290
      %v3383 = vadd.f32 %v2936, %v3295
      %v3384 = vadd.f32 %v2937, %v3298
      %v3385 = vadd.f32 %v2938, %v3303
      %v3386 = vadd.f32 %v2939, %v3306
      %v3387 = vadd.f32 %v2940, %v3311
      %v3388 = vadd.f32 %v2941, %v3314
      %v3389 = vadd.f32 %v2942, %v3319
      %v3390 = vadd.f32 %v2943, %v3322
      %v3391 = vadd.f32 %v2944, %v3327
      %v3392 = vadd.f32 %v2945, %v3330
      %v3393 = vadd.f32 %v2946, %v3335
      %v3394 = vadd.f32 %v2947, %v3338
      %v3395 = vadd.f32 %v2948, %v3343
      %v3396 = vadd.f32 %v2949, %v3346
      %v3397 = vadd.f32 %v2950, %v3351
      %v3398 = vadd.f32 %v2951, %v3354
      %v3399 = vadd.f32 %v2952, %v3359
      %v3400 = vadd.f32 %v2953, %v3362
      %v3401 = vld [vmem:[%s244 + $0x10] sm:$0x8]
      %s3402 = scalar_lea.vmem %s248, 16
      %v3403 = vld [vmem:[%s3402] sm:$0x3]
      %v3405 = vunpack.c.l.b16 %v3401
      %v3406 = vpack.c.b16 %v2592, %v3405
      %vm3407 = vcmask 1044480
      %v3408 = vrot.slane %v3406, 3
      %v3409 = vrot.slane %v2629, 3
      %v3410 = vsel %vm3407, %v3408, %v3409
      %v3411 = vrot.slane %v2630, 3
      %v3412 = vsel %vm3407, %v3409, %v3411
      %v3413 = vrot.slane %v2631, 3
      %v3414 = vsel %vm3407, %v3411, %v3413
      %v3415 = vrot.slane %v2632, 3
      %v3416 = vsel %vm3407, %v3413, %v3415
      %v3417 = vrot.slane %v2633, 3
      %v3418 = vsel %vm3407, %v3415, %v3417
      %v3419 = vrot.slane %v2634, 3
      %v3420 = vsel %vm3407, %v3417, %v3419
      %v3421 = vrot.slane %v2635, 3
      %v3422 = vsel %vm3407, %v3419, %v3421
      %v3423 = vrot.slane %v2636, 3
      %v3424 = vsel %vm3407, %v3421, %v3423
      %v3425 = vrot.slane %v2637, 3
      %v3426 = vsel %vm3407, %v3423, %v3425
      %v3427 = vrot.slane %v2638, 3
      %v3428 = vsel %vm3407, %v3425, %v3427
      %v3429 = vrot.slane %v2639, 3
      %v3430 = vsel %vm3407, %v3427, %v3429
      %v3431 = vrot.slane %v2640, 3
      %v3432 = vsel %vm3407, %v3429, %v3431
      %v3433 = vrot.slane %v2641, 3
      %v3434 = vsel %vm3407, %v3431, %v3433
      %v3435 = vrot.slane %v2642, 3
      %v3436 = vsel %vm3407, %v3433, %v3435
      %v3437 = vrot.slane %v2643, 3
      %v3438 = vsel %vm3407, %v3435, %v3437
      %v3439 = vrot.slane %v2644, 3
      %v3440 = vsel %vm3407, %v3437, %v3439
      %v3441 = vrot.slane %v2645, 3
      %v3442 = vsel %vm3407, %v3439, %v3441
      %v3443 = vrot.slane %v2959, 3
      %v3444 = vsel %vm3407, %v3441, %v3443
      %v3446 = vsel %vm546, %v3410, 0
      %v3449 = vsel %vm546, %v3412, 0
      %v3452 = vsel %vm546, %v3414, 0
      %v3455 = vsel %vm546, %v3416, 0
      %v3458 = vsel %vm546, %v3418, 0
      %v3461 = vsel %vm546, %v3420, 0
      %v3464 = vsel %vm546, %v3422, 0
      %v3467 = vsel %vm546, %v3424, 0
      %v3470 = vsel %vm546, %v3426, 0
      %v3473 = vsel %vm546, %v3428, 0
      %v3476 = vsel %vm546, %v3430, 0
      %v3479 = vsel %vm546, %v3432, 0
      %v3482 = vsel %vm546, %v3434, 0
      %v3485 = vsel %vm546, %v3436, 0
      %v3488 = vsel %vm546, %v3438, 0
      %v3491 = vsel %vm546, %v3440, 0
      %v3494 = vsel %vm546, %v3442, 0
      %v3497 = vsel %vm546, %v3444, 0
      %v3500 = vand.u32 %v3403, %v604
      %3502 = vmatprep.subr.bf16.mxu0 0
      %3503 = vmatpush1.bf16.msra.mxu0 0
      %3504 = vmatprep.subr.bf16.mxu0 0
      %3505 = vmatpush1.bf16.msra.mxu0 0
      %3506 = vmatprep.subr.bf16.mxu0 0
      %3507 = vmatpush1.bf16.msra.mxu0 0
      %3508 = vmatprep.subr.bf16.mxu0 0
      %3509 = vmatpush1.bf16.msra.mxu0 0
      %3510 = vmatprep.subr.bf16.mxu0 0
      %3511 = vmatpush1.bf16.msra.mxu0 0
      %3512 = vmatprep.subr.bf16.mxu0 0
      %3513 = vmatpush1.bf16.msra.mxu0 0
      %3514 = vmatprep.subr.bf16.mxu0 0
      %3515 = vmatpush1.bf16.msra.mxu0 0
      %3516 = vmatprep.subr.bf16.mxu0 0
      %3517 = vmatpush1.bf16.msra.mxu0 %v3500
      %3518 = vmatprep.subr.bf16.mxu0 0
      %3519 = vmatpush2.bf16.msra.mxu0 0
      %3520 = vmatprep.subr.bf16.mxu0 0
      %3521 = vmatpush2.bf16.msra.mxu0 0
      %3522 = vmatprep.subr.bf16.mxu0 0
      %3523 = vmatpush2.bf16.msra.mxu0 0
      %3524 = vmatprep.subr.bf16.mxu0 0
      %3525 = vmatpush2.bf16.msra.mxu0 0
      %3526 = vmatprep.subr.bf16.mxu0 0
      %3527 = vmatpush2.bf16.msra.mxu0 0
      %3528 = vmatprep.subr.bf16.mxu0 0
      %3529 = vmatpush2.bf16.msra.mxu0 0
      %3530 = vmatprep.subr.bf16.mxu0 0
      %3531 = vmatpush2.bf16.msra.mxu0 0
      %3532 = vmatprep.subr.bf16.mxu0 0
      %3533 = vmatpush2.bf16.msra.mxu0 0
      %3534 = vmatprep.mubr.bf16.mxu0 0
      %3535 = vmatmul.mubr.bf16.gmra.mxu0 %v3446
      %v3536 = vpop.f32.mrf.mxu0
      %v3537 = vadd.f32 0.0, %v3536
      %v3538 = vpop.f32.mrf.mxu0
      %v3539 = vpop.f32.mrf.mxu0
      %v3540 = vadd.f32 0.0, %v3539
      %v3541 = vpop.f32.mrf.mxu0
      %3542 = vmatprep.mubr.bf16.mxu0 0
      %3543 = vmatmul.mubr.bf16.gmra.mxu0 %v3449
      %v3544 = vpop.f32.mrf.mxu0
      %v3545 = vadd.f32 0.0, %v3544
      %v3546 = vpop.f32.mrf.mxu0
      %v3547 = vpop.f32.mrf.mxu0
      %v3548 = vadd.f32 0.0, %v3547
      %v3549 = vpop.f32.mrf.mxu0
      %3550 = vmatprep.mubr.bf16.mxu0 0
      %3551 = vmatmul.mubr.bf16.gmra.mxu0 %v3452
      %v3552 = vpop.f32.mrf.mxu0
      %v3553 = vadd.f32 0.0, %v3552
      %v3554 = vpop.f32.mrf.mxu0
      %v3555 = vpop.f32.mrf.mxu0
      %v3556 = vadd.f32 0.0, %v3555
      %v3557 = vpop.f32.mrf.mxu0
      %3558 = vmatprep.mubr.bf16.mxu0 0
      %3559 = vmatmul.mubr.bf16.gmra.mxu0 %v3455
      %v3560 = vpop.f32.mrf.mxu0
      %v3561 = vadd.f32 0.0, %v3560
      %v3562 = vpop.f32.mrf.mxu0
      %v3563 = vpop.f32.mrf.mxu0
      %v3564 = vadd.f32 0.0, %v3563
      %v3565 = vpop.f32.mrf.mxu0
      %3566 = vmatprep.mubr.bf16.mxu0 0
      %3567 = vmatmul.mubr.bf16.gmra.mxu0 %v3458
      %v3568 = vpop.f32.mrf.mxu0
      %v3569 = vadd.f32 0.0, %v3568
      %v3570 = vpop.f32.mrf.mxu0
      %v3571 = vpop.f32.mrf.mxu0
      %v3572 = vadd.f32 0.0, %v3571
      %v3573 = vpop.f32.mrf.mxu0
      %3574 = vmatprep.mubr.bf16.mxu0 0
      %3575 = vmatmul.mubr.bf16.gmra.mxu0 %v3461
      %v3576 = vpop.f32.mrf.mxu0
      %v3577 = vadd.f32 0.0, %v3576
      %v3578 = vpop.f32.mrf.mxu0
      %v3579 = vpop.f32.mrf.mxu0
      %v3580 = vadd.f32 0.0, %v3579
      %v3581 = vpop.f32.mrf.mxu0
      %3582 = vmatprep.mubr.bf16.mxu0 0
      %3583 = vmatmul.mubr.bf16.gmra.mxu0 %v3464
      %v3584 = vpop.f32.mrf.mxu0
      %v3585 = vadd.f32 0.0, %v3584
      %v3586 = vpop.f32.mrf.mxu0
      %v3587 = vpop.f32.mrf.mxu0
      %v3588 = vadd.f32 0.0, %v3587
      %v3589 = vpop.f32.mrf.mxu0
      %3590 = vmatprep.mubr.bf16.mxu0 0
      %3591 = vmatmul.mubr.bf16.gmra.mxu0 %v3467
      %v3592 = vpop.f32.mrf.mxu0
      %v3593 = vadd.f32 0.0, %v3592
      %v3594 = vpop.f32.mrf.mxu0
      %v3595 = vpop.f32.mrf.mxu0
      %v3596 = vadd.f32 0.0, %v3595
      %v3597 = vpop.f32.mrf.mxu0
      %3598 = vmatprep.mubr.bf16.mxu0 0
      %3599 = vmatmul.mubr.bf16.gmra.mxu0 %v3470
      %v3600 = vpop.f32.mrf.mxu0
      %v3601 = vadd.f32 0.0, %v3600
      %v3602 = vpop.f32.mrf.mxu0
      %v3603 = vpop.f32.mrf.mxu0
      %v3604 = vadd.f32 0.0, %v3603
      %v3605 = vpop.f32.mrf.mxu0
      %3606 = vmatprep.mubr.bf16.mxu0 0
      %3607 = vmatmul.mubr.bf16.gmra.mxu0 %v3473
      %v3608 = vpop.f32.mrf.mxu0
      %v3609 = vadd.f32 0.0, %v3608
      %v3610 = vpop.f32.mrf.mxu0
      %v3611 = vpop.f32.mrf.mxu0
      %v3612 = vadd.f32 0.0, %v3611
      %v3613 = vpop.f32.mrf.mxu0
      %3614 = vmatprep.mubr.bf16.mxu0 0
      %3615 = vmatmul.mubr.bf16.gmra.mxu0 %v3476
      %v3616 = vpop.f32.mrf.mxu0
      %v3617 = vadd.f32 0.0, %v3616
      %v3618 = vpop.f32.mrf.mxu0
      %v3619 = vpop.f32.mrf.mxu0
      %v3620 = vadd.f32 0.0, %v3619
      %v3621 = vpop.f32.mrf.mxu0
      %3622 = vmatprep.mubr.bf16.mxu0 0
      %3623 = vmatmul.mubr.bf16.gmra.mxu0 %v3479
      %v3624 = vpop.f32.mrf.mxu0
      %v3625 = vadd.f32 0.0, %v3624
      %v3626 = vpop.f32.mrf.mxu0
      %v3627 = vpop.f32.mrf.mxu0
      %v3628 = vadd.f32 0.0, %v3627
      %v3629 = vpop.f32.mrf.mxu0
      %3630 = vmatprep.mubr.bf16.mxu0 0
      %3631 = vmatmul.mubr.bf16.gmra.mxu0 %v3482
      %v3632 = vpop.f32.mrf.mxu0
      %v3633 = vadd.f32 0.0, %v3632
      %v3634 = vpop.f32.mrf.mxu0
      %v3635 = vpop.f32.mrf.mxu0
      %v3636 = vadd.f32 0.0, %v3635
      %v3637 = vpop.f32.mrf.mxu0
      %3638 = vmatprep.mubr.bf16.mxu0 0
      %3639 = vmatmul.mubr.bf16.gmra.mxu0 %v3485
      %v3640 = vpop.f32.mrf.mxu0
      %v3641 = vadd.f32 0.0, %v3640
      %v3642 = vpop.f32.mrf.mxu0
      %v3643 = vpop.f32.mrf.mxu0
      %v3644 = vadd.f32 0.0, %v3643
      %v3645 = vpop.f32.mrf.mxu0
      %3646 = vmatprep.mubr.bf16.mxu0 0
      %3647 = vmatmul.mubr.bf16.gmra.mxu0 %v3488
      %v3648 = vpop.f32.mrf.mxu0
      %v3649 = vadd.f32 0.0, %v3648
      %v3650 = vpop.f32.mrf.mxu0
      %v3651 = vpop.f32.mrf.mxu0
      %v3652 = vadd.f32 0.0, %v3651
      %v3653 = vpop.f32.mrf.mxu0
      %3654 = vmatprep.mubr.bf16.mxu0 0
      %3655 = vmatmul.mubr.bf16.gmra.mxu0 %v3491
      %v3656 = vpop.f32.mrf.mxu0
      %v3657 = vadd.f32 0.0, %v3656
      %v3658 = vpop.f32.mrf.mxu0
      %v3659 = vpop.f32.mrf.mxu0
      %v3660 = vadd.f32 0.0, %v3659
      %v3661 = vpop.f32.mrf.mxu0
      %3662 = vmatprep.mubr.bf16.mxu0 0
      %3663 = vmatmul.mubr.bf16.gmra.mxu0 %v3494
      %v3664 = vpop.f32.mrf.mxu0
      %v3665 = vadd.f32 0.0, %v3664
      %v3666 = vpop.f32.mrf.mxu0
      %v3667 = vpop.f32.mrf.mxu0
      %v3668 = vadd.f32 0.0, %v3667
      %v3669 = vpop.f32.mrf.mxu0
      %3670 = vmatprep.mubr.bf16.mxu0 0
      %3671 = vmatmul.mubr.bf16.gmra.mxu0 %v3497
      %v3672 = vpop.f32.mrf.mxu0
      %v3673 = vadd.f32 0.0, %v3672
      %v3674 = vpop.f32.mrf.mxu0
      %v3675 = vpop.f32.mrf.mxu0
      %v3676 = vadd.f32 0.0, %v3675
      %v3677 = vpop.f32.mrf.mxu0
      %3678 = vdwg.mxu0
      %v3679 = vadd.f32 %v3365, %v3537
      %v3680 = vadd.f32 %v3366, %v3540
      %v3681 = vadd.f32 %v3367, %v3545
      %v3682 = vadd.f32 %v3368, %v3548
      %v3683 = vadd.f32 %v3369, %v3553
      %v3684 = vadd.f32 %v3370, %v3556
      %v3685 = vadd.f32 %v3371, %v3561
      %v3686 = vadd.f32 %v3372, %v3564
      %v3687 = vadd.f32 %v3373, %v3569
      %v3688 = vadd.f32 %v3374, %v3572
      %v3689 = vadd.f32 %v3375, %v3577
      %v3690 = vadd.f32 %v3376, %v3580
      %v3691 = vadd.f32 %v3377, %v3585
      %v3692 = vadd.f32 %v3378, %v3588
      %v3693 = vadd.f32 %v3379, %v3593
      %v3694 = vadd.f32 %v3380, %v3596
      %v3695 = vadd.f32 %v3381, %v3601
      %v3696 = vadd.f32 %v3382, %v3604
      %v3697 = vadd.f32 %v3383, %v3609
      %v3698 = vadd.f32 %v3384, %v3612
      %v3699 = vadd.f32 %v3385, %v3617
      %v3700 = vadd.f32 %v3386, %v3620
      %v3701 = vadd.f32 %v3387, %v3625
      %v3702 = vadd.f32 %v3388, %v3628
      %v3703 = vadd.f32 %v3389, %v3633
      %v3704 = vadd.f32 %v3390, %v3636
      %v3705 = vadd.f32 %v3391, %v3641
      %v3706 = vadd.f32 %v3392, %v3644
      %v3707 = vadd.f32 %v3393, %v3649
      %v3708 = vadd.f32 %v3394, %v3652
      %v3709 = vadd.f32 %v3395, %v3657
      %v3710 = vadd.f32 %v3396, %v3660
      %v3711 = vadd.f32 %v3397, %v3665
      %v3712 = vadd.f32 %v3398, %v3668
      %v3713 = vadd.f32 %v3399, %v3673
      %v3714 = vadd.f32 %v3400, %v3676
      %v3715 = vld [vmem:[%s251] sm:$0x1]
      %v3717 = vlaneseq
      %v3718 = vshrl.u32 %v3717, 7
      %v3719 = vsub.s32 0, %v3718
      %v3720 = vrot.slane %v3715, %v3719
      %v3722 = vmul.f32 %v3679, %v3720
      %v3723 = vmul.f32 %v3680, %v3720
      %v3724 = vmul.f32 %v3681, %v3720
      %v3725 = vmul.f32 %v3682, %v3720
      %v3726 = vmul.f32 %v3683, %v3720
      %v3727 = vmul.f32 %v3684, %v3720
      %v3728 = vmul.f32 %v3685, %v3720
      %v3729 = vmul.f32 %v3686, %v3720
      %v3730 = vmul.f32 %v3687, %v3720
      %v3731 = vmul.f32 %v3688, %v3720
      %v3732 = vmul.f32 %v3689, %v3720
      %v3733 = vmul.f32 %v3690, %v3720
      %v3734 = vmul.f32 %v3691, %v3720
      %v3735 = vmul.f32 %v3692, %v3720
      %v3736 = vmul.f32 %v3693, %v3720
      %v3737 = vmul.f32 %v3694, %v3720
      %v3738 = vmul.f32 %v3695, %v3720
      %v3739 = vmul.f32 %v3696, %v3720
      %v3740 = vmul.f32 %v3697, %v3720
      %v3741 = vmul.f32 %v3698, %v3720
      %v3742 = vmul.f32 %v3699, %v3720
      %v3743 = vmul.f32 %v3700, %v3720
      %v3744 = vmul.f32 %v3701, %v3720
      %v3745 = vmul.f32 %v3702, %v3720
      %v3746 = vmul.f32 %v3703, %v3720
      %v3747 = vmul.f32 %v3704, %v3720
      %v3748 = vmul.f32 %v3705, %v3720
      %v3749 = vmul.f32 %v3706, %v3720
      %v3750 = vmul.f32 %v3707, %v3720
      %v3751 = vmul.f32 %v3708, %v3720
      %v3752 = vmul.f32 %v3709, %v3720
      %v3753 = vmul.f32 %v3710, %v3720
      %v3754 = vmul.f32 %v3711, %v3720
      %v3755 = vmul.f32 %v3712, %v3720
      %v3756 = vmul.f32 %v3713, %v3720
      %v3757 = vmul.f32 %v3714, %v3720
      %v3758 = vld [vmem:[%s254] sm:$0x1]
      %v3760 = vlaneseq
      %v3761 = vshrl.u32 %v3760, 7
      %v3762 = vsub.s32 0, %v3761
      %v3763 = vrot.slane %v3758, %v3762
      %v3765 = vadd.f32 %v3722, %v3763
      %v3766 = vadd.f32 %v3723, %v3763
      %v3767 = vadd.f32 %v3724, %v3763
      %v3768 = vadd.f32 %v3725, %v3763
      %v3769 = vadd.f32 %v3726, %v3763
      %v3770 = vadd.f32 %v3727, %v3763
      %v3771 = vadd.f32 %v3728, %v3763
      %v3772 = vadd.f32 %v3729, %v3763
      %v3773 = vadd.f32 %v3730, %v3763
      %v3774 = vadd.f32 %v3731, %v3763
      %v3775 = vadd.f32 %v3732, %v3763
      %v3776 = vadd.f32 %v3733, %v3763
      %v3777 = vadd.f32 %v3734, %v3763
      %v3778 = vadd.f32 %v3735, %v3763
      %v3779 = vadd.f32 %v3736, %v3763
      %v3780 = vadd.f32 %v3737, %v3763
      %v3781 = vadd.f32 %v3738, %v3763
      %v3782 = vadd.f32 %v3739, %v3763
      %v3783 = vadd.f32 %v3740, %v3763
      %v3784 = vadd.f32 %v3741, %v3763
      %v3785 = vadd.f32 %v3742, %v3763
      %v3786 = vadd.f32 %v3743, %v3763
      %v3787 = vadd.f32 %v3744, %v3763
      %v3788 = vadd.f32 %v3745, %v3763
      %v3789 = vadd.f32 %v3746, %v3763
      %v3790 = vadd.f32 %v3747, %v3763
      %v3791 = vadd.f32 %v3748, %v3763
      %v3792 = vadd.f32 %v3749, %v3763
      %v3793 = vadd.f32 %v3750, %v3763
      %v3794 = vadd.f32 %v3751, %v3763
      %v3795 = vadd.f32 %v3752, %v3763
      %v3796 = vadd.f32 %v3753, %v3763
      %v3797 = vadd.f32 %v3754, %v3763
      %v3798 = vadd.f32 %v3755, %v3763
      %v3799 = vadd.f32 %v3756, %v3763
      %v3800 = vadd.f32 %v3757, %v3763
      %v3801 = vmax.f32 %v3765, 0.0
      %v3802 = vmax.f32 %v3766, 0.0
      %v3803 = vmax.f32 %v3767, 0.0
      %v3804 = vmax.f32 %v3768, 0.0
      %v3805 = vmax.f32 %v3769, 0.0
      %v3806 = vmax.f32 %v3770, 0.0
      %v3807 = vmax.f32 %v3771, 0.0
      %v3808 = vmax.f32 %v3772, 0.0
      %v3809 = vmax.f32 %v3773, 0.0
      %v3810 = vmax.f32 %v3774, 0.0
      %v3811 = vmax.f32 %v3775, 0.0
      %v3812 = vmax.f32 %v3776, 0.0
      %v3813 = vmax.f32 %v3777, 0.0
      %v3814 = vmax.f32 %v3778, 0.0
      %v3815 = vmax.f32 %v3779, 0.0
      %v3816 = vmax.f32 %v3780, 0.0
      %v3817 = vmax.f32 %v3781, 0.0
      %v3818 = vmax.f32 %v3782, 0.0
      %v3819 = vmax.f32 %v3783, 0.0
      %v3820 = vmax.f32 %v3784, 0.0
      %v3821 = vmax.f32 %v3785, 0.0
      %v3822 = vmax.f32 %v3786, 0.0
      %v3823 = vmax.f32 %v3787, 0.0
      %v3824 = vmax.f32 %v3788, 0.0
      %v3825 = vmax.f32 %v3789, 0.0
      %v3826 = vmax.f32 %v3790, 0.0
      %v3827 = vmax.f32 %v3791, 0.0
      %v3828 = vmax.f32 %v3792, 0.0
      %v3829 = vmax.f32 %v3793, 0.0
      %v3830 = vmax.f32 %v3794, 0.0
      %v3831 = vmax.f32 %v3795, 0.0
      %v3832 = vmax.f32 %v3796, 0.0
      %v3833 = vmax.f32 %v3797, 0.0
      %v3834 = vmax.f32 %v3798, 0.0
      %v3835 = vmax.f32 %v3799, 0.0
      %v3836 = vmax.f32 %v3800, 0.0
      %v3837 = vpack.c.bf16 %v3802, %v3801
      %v3838 = vpack.c.bf16 %v3804, %v3803
      %v3839 = vpack.c.bf16 %v3806, %v3805
      %v3840 = vpack.c.bf16 %v3808, %v3807
      %v3841 = vpack.c.bf16 %v3810, %v3809
      %v3842 = vpack.c.bf16 %v3812, %v3811
      %v3843 = vpack.c.bf16 %v3814, %v3813
      %v3844 = vpack.c.bf16 %v3816, %v3815
      %v3845 = vpack.c.bf16 %v3818, %v3817
      %v3846 = vpack.c.bf16 %v3820, %v3819
      %v3847 = vpack.c.bf16 %v3822, %v3821
      %v3848 = vpack.c.bf16 %v3824, %v3823
      %v3849 = vpack.c.bf16 %v3826, %v3825
      %v3850 = vpack.c.bf16 %v3828, %v3827
      %v3851 = vpack.c.bf16 %v3830, %v3829
      %v3852 = vpack.c.bf16 %v3832, %v3831
      %v3853 = vpack.c.bf16 %v3834, %v3833
      %v3854 = vpack.c.bf16 %v3836, %v3835
      %v3873 = vunpack.c.l.b16 %v3837
      %v3874 = vunpack.c.h.b16 %v3837
      %v3875 = vunpack.c.l.b16 %v3838
      %v3876 = vunpack.c.h.b16 %v3838
      %v3877 = vunpack.c.l.b16 %v3839
      %v3878 = vunpack.c.h.b16 %v3839
      %v3879 = vunpack.c.l.b16 %v3840
      %v3880 = vunpack.c.h.b16 %v3840
      %v3881 = vunpack.c.l.b16 %v3841
      %v3882 = vunpack.c.h.b16 %v3841
      %v3883 = vunpack.c.l.b16 %v3842
      %v3884 = vunpack.c.h.b16 %v3842
      %v3885 = vunpack.c.l.b16 %v3843
      %v3886 = vunpack.c.h.b16 %v3843
      %v3887 = vunpack.c.l.b16 %v3844
      %v3888 = vunpack.c.h.b16 %v3844
      %v3889 = vunpack.c.l.b16 %v3845
      %v3890 = vunpack.c.h.b16 %v3845
      %v3891 = vunpack.c.l.b16 %v3846
      %v3892 = vunpack.c.h.b16 %v3846
      %v3893 = vunpack.c.l.b16 %v3847
      %v3894 = vunpack.c.h.b16 %v3847
      %v3895 = vunpack.c.l.b16 %v3848
      %v3896 = vunpack.c.h.b16 %v3848
      %v3897 = vunpack.c.l.b16 %v3849
      %v3898 = vunpack.c.h.b16 %v3849
      %v3899 = vunpack.c.l.b16 %v3850
      %v3900 = vunpack.c.h.b16 %v3850
      %v3901 = vunpack.c.l.b16 %v3851
      %v3902 = vunpack.c.h.b16 %v3851
      %v3903 = vunpack.c.l.b16 %v3852
      %v3904 = vunpack.c.h.b16 %v3852
      %v3905 = vunpack.c.l.b16 %v3853
      %v3906 = vunpack.c.h.b16 %v3853
      %v3907 = vunpack.c.l.b16 %v3854
      %v3908 = vunpack.c.h.b16 %v3854
      %v3909 = vpack.c.b16 %v3873, %v3873
      %v3910 = vpack.c.b16 %v3874, %v3874
      %v3911 = vpack.c.b16 %v3875, %v3875
      %v3912 = vpack.c.b16 %v3876, %v3876
      %v3913 = vpack.c.b16 %v3877, %v3877
      %v3914 = vpack.c.b16 %v3878, %v3878
      %v3915 = vpack.c.b16 %v3879, %v3879
      %v3916 = vpack.c.b16 %v3880, %v3880
      %v3917 = vpack.c.b16 %v3881, %v3881
      %v3918 = vpack.c.b16 %v3882, %v3882
      %v3919 = vpack.c.b16 %v3883, %v3883
      %v3920 = vpack.c.b16 %v3884, %v3884
      %v3921 = vpack.c.b16 %v3885, %v3885
      %v3922 = vpack.c.b16 %v3886, %v3886
      %v3923 = vpack.c.b16 %v3887, %v3887
      %v3924 = vpack.c.b16 %v3888, %v3888
      %v3925 = vpack.c.b16 %v3889, %v3889
      %v3926 = vpack.c.b16 %v3890, %v3890
      %v3927 = vpack.c.b16 %v3891, %v3891
      %v3928 = vpack.c.b16 %v3892, %v3892
      %v3929 = vpack.c.b16 %v3893, %v3893
      %v3930 = vpack.c.b16 %v3894, %v3894
      %v3931 = vpack.c.b16 %v3895, %v3895
      %v3932 = vpack.c.b16 %v3896, %v3896
      %v3933 = vpack.c.b16 %v3897, %v3897
      %v3934 = vpack.c.b16 %v3898, %v3898
      %v3935 = vpack.c.b16 %v3899, %v3899
      %v3936 = vpack.c.b16 %v3900, %v3900
      %v3937 = vpack.c.b16 %v3901, %v3901
      %v3938 = vpack.c.b16 %v3902, %v3902
      %v3939 = vpack.c.b16 %v3903, %v3903
      %v3940 = vpack.c.b16 %v3904, %v3904
      %v3941 = vpack.c.b16 %v3905, %v3905
      %v3942 = vpack.c.b16 %v3906, %v3906
      %v3943 = vpack.c.b16 %v3907, %v3907
      %v3944 = vpack.c.b16 %v3908, %v3908
      %vm3981 = vcmask 519168
      %3982 = vst.msk [vmem:[%s262] sm:$0xf] %vm3981, %v3909
      %3983 = vst.msk [vmem:[%s262 + $0x4] sm:$0xf] %vm3981, %v3910
      %3984 = vst.msk [vmem:[%s262 + $0x8] sm:$0xf] %vm3981, %v3911
      %3985 = vst.msk [vmem:[%s262 + $0xc] sm:$0xf] %vm3981, %v3912
      %3986 = vst.msk [vmem:[%s262 + $0x10] sm:$0xf] %vm3981, %v3913
      %3987 = vst.msk [vmem:[%s262 + $0x14] sm:$0xf] %vm3981, %v3914
      %3988 = vst.msk [vmem:[%s262 + $0x18] sm:$0xf] %vm3981, %v3915
      %3989 = vst.msk [vmem:[%s262 + $0x1c] sm:$0xf] %vm3981, %v3916
      %3990 = vst.msk [vmem:[%s262 + $0x20] sm:$0xf] %vm3981, %v3917
      %3991 = vst.msk [vmem:[%s262 + $0x24] sm:$0xf] %vm3981, %v3918
      %3992 = vst.msk [vmem:[%s262 + $0x28] sm:$0xf] %vm3981, %v3919
      %3993 = vst.msk [vmem:[%s262 + $0x2c] sm:$0xf] %vm3981, %v3920
      %3994 = vst.msk [vmem:[%s262 + $0x30] sm:$0xf] %vm3981, %v3921
      %3995 = vst.msk [vmem:[%s262 + $0x34] sm:$0xf] %vm3981, %v3922
      %3996 = vst.msk [vmem:[%s262 + $0x38] sm:$0xf] %vm3981, %v3923
      %3997 = vst.msk [vmem:[%s262 + $0x3c] sm:$0xf] %vm3981, %v3924
      %3998 = vst.msk [vmem:[%s262 + $0x40] sm:$0xf] %vm3981, %v3925
      %3999 = vst.msk [vmem:[%s262 + $0x44] sm:$0xf] %vm3981, %v3926
      %4000 = vst.msk [vmem:[%s262 + $0x48] sm:$0xf] %vm3981, %v3927
      %4001 = vst.msk [vmem:[%s262 + $0x4c] sm:$0xf] %vm3981, %v3928
      %4002 = vst.msk [vmem:[%s262 + $0x50] sm:$0xf] %vm3981, %v3929
      %4003 = vst.msk [vmem:[%s262 + $0x54] sm:$0xf] %vm3981, %v3930
      %4004 = vst.msk [vmem:[%s262 + $0x58] sm:$0xf] %vm3981, %v3931
      %4005 = vst.msk [vmem:[%s262 + $0x5c] sm:$0xf] %vm3981, %v3932
      %4006 = vst.msk [vmem:[%s262 + $0x60] sm:$0xf] %vm3981, %v3933
      %4007 = vst.msk [vmem:[%s262 + $0x64] sm:$0xf] %vm3981, %v3934
      %4008 = vst.msk [vmem:[%s262 + $0x68] sm:$0xf] %vm3981, %v3935
      %4009 = vst.msk [vmem:[%s262 + $0x6c] sm:$0xf] %vm3981, %v3936
      %4010 = vst.msk [vmem:[%s262 + $0x70] sm:$0xf] %vm3981, %v3937
      %4011 = vst.msk [vmem:[%s262 + $0x74] sm:$0xf] %vm3981, %v3938
      %4012 = vst.msk [vmem:[%s262 + $0x78] sm:$0xf] %vm3981, %v3939
      %4013 = vst.msk [vmem:[%s262 + $0x7c] sm:$0xf] %vm3981, %v3940
      %4014 = vst.msk [vmem:[%s262 + $0x80] sm:$0xf] %vm3981, %v3941
      %4015 = vst.msk [vmem:[%s262 + $0x84] sm:$0xf] %vm3981, %v3942
      %4016 = vst.msk [vmem:[%s262 + $0x88] sm:$0xf] %vm3981, %v3943
      %4017 = vst.msk [vmem:[%s262 + $0x8c] sm:$0xf] %vm3981, %v3944
      %p4018 = scmp.lt.s32.totalorder %s19, 1
      %s4019 = scalar_select %p4018, %s19, 1
      %p4020 = scmp.lt.s32.totalorder %s20, 0
      %s4021 = scalar_select %p4020, %s20, 0
      %s4022 = smul.addr %s4019, 36
      %s4023 = sadd.s32 %s4021, %s4022
      %s4024 = smul.addr %s4023, 4
      %s4025 = scalar_lea.vmem %s4, %s4024
      // Predicated region
      $region37: #{tpu_custom_call.1} parent=35 // pred_check
        %p4026 = pneg %p151
      $region38: #{tpu_custom_call.1} parent=35 // pred_check_branch
        %4028 = sbr.rel (%p4026) target = $region40
      $region39: #{tpu_custom_call.1} parent=35 // pred_region
        _
      $region40: #{tpu_custom_call.1} parent=35 // pred_fallthru
        _
    $region36: #{tpu_custom_call.1} parent=5 // pred_fallthru
      _
    %p4029 = scmp.le.s32.totalorder 2, %s10
    // Predicated region
    $region41: #{tpu_custom_call.1} parent=5 // pred_check
      %p4030 = pneg %p4029
    $region42: #{tpu_custom_call.1} parent=5 // pred_check_branch
      %4032 = sbr.rel (%p4030) target = $region44
    $region43: #{tpu_custom_call.1} parent=5 // pred_region
      %s4033 = ssub.s32 %s10, 2
      // Predicated region
      $region45: #{tpu_custom_call.1} parent=43 // pred_check
        %p4034 = pneg %p157
      $region46: #{tpu_custom_call.1} parent=43 // pred_check_branch
        %4036 = sbr.rel (%p4034) target = $region48
      $region47: #{tpu_custom_call.1} parent=43 // pred_region
        %p4037 = scmp.lt.s32.totalorder %s21, 1
        %s4038 = scalar_select %p4037, %s21, 1
        %p4039 = scmp.lt.s32.totalorder %s22, 0
        %s4040 = scalar_select %p4039, %s22, 0
        %s4041 = smul.addr %s4038, 36
        %s4042 = sadd.s32 %s4040, %s4041
        %s4043 = smul.addr %s4042, 4
        %s4044 = scalar_lea.vmem %s4, %s4043
      $region48: #{tpu_custom_call.1} parent=43 // pred_fallthru
        _
    $region44: #{tpu_custom_call.1} parent=5 // pred_fallthru
      _
  $region6: #{tpu_custom_call.1} parent=0 // loop_footer
    %s14 = sadd.s32 1, %s10
  $region7: #{tpu_custom_call.1} parent=0 // loop_footer_branch
    %9 = sbr.rel target = $region3
  $region8: #{tpu_custom_call.1} parent=0 // loop_exit
    _

</llo_original>
